<compile_context>
chip_gen: v7x
topology: tpu7x:2x2x1
jax: 0.10.0
libtpu: 0.0.40
codegen_flags: <defaults>
</compile_context>

<pallas_src>
import functools

import jax
import jax.numpy as jnp
from jax.experimental import pallas as pl
from jax.experimental.pallas import tpu as pltpu


# ---------------------------------------------------------------------------
# Fused decoder kernel (one grid step == one batch tile of TB samples)
# ---------------------------------------------------------------------------
def _decoder_kernel(x3_ref, wfc_ref, w1_ref, b1c_ref, w2_ref, b2_ref,
                    o_ref, can_a, can_b, *, Wp, EB, EO, K):
    """Layouts (2-D, lanes = flat per-sample canvas with row stride Wp):

      x3_ref : (TB*8, 8L+8)  block-diag latents + identity cols (carry fc bias)
      can_a  : (TB*8, EA)    conv-1 input canvas (fc activation at offset (4,4))
      can_b  : (TB*4, EB)    conv-2 input canvas (conv-1 output at offset (2,2))
      o_ref  : (TB,   EO)    conv-2 output, canvas coords rows [0,H) x [0,W+2)
    """
    # ---- stage 1: fc1 + bias + ReLU, pre-scattered straight into canvas A --
    can_a[...] = jnp.maximum(
        jnp.dot(x3_ref[...], wfc_ref[...], preferred_element_type=jnp.float32),
        0.0)

    # ---- stage 2: ConvTranspose2d(8->4): 9 shifted block-diagonal matmuls --
    for t in range(K * K):
        off = (t // K) * Wp + (t % K)
        contrib = jnp.dot(w1_ref[t], can_a[:, off:off + EB],
                          preferred_element_type=jnp.float32)
        if t == 0:
            can_b[...] = contrib
        else:
            can_b[...] += contrib
    # bias canvas is pre-masked to the valid region -> the zero halo stays 0.
    can_b[...] = jnp.maximum(can_b[...] + b1c_ref[...], 0.0)

    # ---- stage 3: ConvTranspose2d(4->1) + bias + sigmoid --------------------
    for t in range(K * K):
        off = (t // K) * Wp + (t % K)
        contrib = jnp.dot(w2_ref[t], can_b[:, off:off + EO],
                          preferred_element_type=jnp.float32)
        if t == 0:
            o_ref[...] = contrib
        else:
            o_ref[...] += contrib
    logit = o_ref[...] + b2_ref[0]
    # sigmoid(x) = 0.5*tanh(x/2) + 0.5  (tanh on the EUP, no divide, no overflow)
    o_ref[...] = 0.5 * jnp.tanh(0.5 * logit) + 0.5


# ---------------------------------------------------------------------------
# Wrapper: trace-time weight / layout prep + single pallas_call
# ---------------------------------------------------------------------------
def _corr_weights(wt):
    """(Cin, Cout, K, K) ConvTranspose2d weight -> (K*K, Cout, Cin) corr taps."""
    Cin, Cout, Kh, Kw = wt.shape
    w = wt[:, :, ::-1, ::-1]                 # spatial flip
    w = jnp.transpose(w, (2, 3, 1, 0))       # (K, K, Cout, Cin)
    return w.reshape(Kh * Kw, Cout, Cin)


def decoder_forward(x, params, img_shape, *, tile_b=8):
    H, W = img_shape
    H1, W1 = H - 4, W - 4
    B, L = x.shape
    K = 3
    C0, C1, C2 = 8, 4, 1
    S1 = H1 * W1
    f32 = jnp.float32

    # Shared canvas geometry: per-sample padded image, row stride Wp = W + 2.
    Wp = W + 2
    EO = H * Wp                 # output extent (rows [0,H), W valid + 2 junk cols)
    EB = EO + 2 * Wp + 2        # conv-2 input canvas extent (covers all tap reads)
    EA = EB + 2 * Wp + 2        # conv-1 input canvas extent (covers all tap reads)

    TB = tile_b
    NB = -(-B // TB)            # cdiv
    B_pad = NB * TB

    # ---------------- trace-time weight / layout prep ----------------------
    # (a) fc1 weight + bias scattered into canvas-A columns: spatial (r,w) of
    #     channel c lands at column (r+4)*Wp + (w+4); every other column is a
    #     zero column, so the matmul rewrites the zero halo every step.
    p_idx = ((jnp.arange(H1)[:, None] + 4) * Wp
             + (jnp.arange(W1)[None, :] + 4)).reshape(-1)            # (S1,)
    wfc = params["fc1_w"].astype(f32).reshape(L, C0, S1).transpose(1, 0, 2)
    wfc_scat = jnp.zeros((C0, L, EA), f32).at[:, :, p_idx].set(wfc)
    bfc = params["fc1_b"].astype(f32).reshape(C0, S1)
    bfc_scat = jnp.zeros((C0, EA), f32).at[:, p_idx].set(bfc)
    wfc_full = jnp.concatenate([wfc_scat.reshape(C0 * L, EA), bfc_scat], 0)

    # (b) conv taps -> per-tap block-diagonal weights over the batch tile
    #     (samples on sublanes: row b*Cout+co, col b*Cin+ci).
    t1 = _corr_weights(params["ct1_w"]).astype(f32)                  # (9, 4, 8)
    t2 = _corr_weights(params["ct2_w"]).astype(f32)                  # (9, 1, 4)
    eye_tb = jnp.eye(TB, dtype=f32)
    w1bd = (eye_tb[None, :, None, :, None]
            * t1[:, None, :, None, :]).reshape(K * K, TB * C1, TB * C0)
    w2bd = (eye_tb[None, :, None, :, None]
            * t2[:, None, :, None, :]).reshape(K * K, TB * C2, TB * C1)

    # (c) conv-1 bias as a canvas mask: bias in the valid region
    #     (rows [2,H), cols [2,W)), zero on the halo.
    lane = jnp.arange(EB)
    row, col = lane // Wp, lane % Wp
    valid = (row >= 2) & (row < H) & (col >= 2) & (col < W)
    b1c = jnp.where(valid[None, :], params["ct1_b"].astype(f32)[:, None], 0.0)
    b1c = jnp.tile(b1c, (TB, 1))                                     # (TB*4, EB)

    b2 = params["ct2_b"].astype(f32).reshape(1)                      # SMEM scalar

    # (d) latents expanded block-diagonally so the fc matmul directly produces
    #     the (sample*channel, canvas) layout: row b*8+c of x3 holds x[b] in
    #     column block c, plus identity columns that select channel c's bias.
    xp = jnp.zeros((B_pad, L), f32).at[:B].set(x.astype(f32))
    eye_c = jnp.eye(C0, dtype=f32)
    xblk = (xp[:, None, None, :] * eye_c[None, :, :, None]).reshape(B_pad, C0, C0 * L)
    x3 = jnp.concatenate(
        [xblk, jnp.broadcast_to(eye_c[None], (B_pad, C0, C0))], axis=-1)
    x3 = x3.reshape(B_pad * C0, C0 * L + C0)                         # (B_pad*8, 8L+8)

    kernel = functools.partial(_decoder_kernel, Wp=Wp, EB=EB, EO=EO, K=K)
    out = pl.pallas_call(
        kernel,
        out_shape=jax.ShapeDtypeStruct((B_pad, EO), f32),
        grid_spec=pltpu.PrefetchScalarGridSpec(
            num_scalar_prefetch=0,
            grid=(NB,),
            in_specs=[
                pl.BlockSpec((TB * C0, C0 * L + C0), lambda b: (b, 0)),     # x3 tile
                pl.BlockSpec((C0 * L + C0, EA), lambda b: (0, 0)),          # fc weight
                pl.BlockSpec((K * K, TB * C1, TB * C0), lambda b: (0, 0, 0)),  # conv1 taps
                pl.BlockSpec((TB * C1, EB), lambda b: (0, 0)),              # conv1 bias canvas
                pl.BlockSpec((K * K, TB * C2, TB * C1), lambda b: (0, 0, 0)),  # conv2 taps
                pl.BlockSpec(memory_space=pltpu.MemorySpace.SMEM),          # conv2 bias
            ],
            out_specs=pl.BlockSpec((TB, EO), lambda b: (b, 0)),
            scratch_shapes=[
                pltpu.VMEM((TB * C0, EA), f32),     # canvas A (conv-1 input)
                pltpu.VMEM((TB * C1, EB), f32),     # canvas B (conv-2 input)
            ],
        ),
        compiler_params=pltpu.CompilerParams(
            dimension_semantics=("parallel",)),     # batch tiles -> 2 TCs on v7x
    )(x3, wfc_full, w1bd, b1c, w2bd, b2)

    # Drop the 2 junk columns per row (one cheap strided copy), free NCHW reshape.
    return out.reshape(B_pad, H, Wp)[:B, :, :W].reshape(B, 1, H, W)


# ---------------------------------------------------------------------------
# Pure-JAX reference (correctness check only)
# ---------------------------------------------------------------------------
def decoder_reference(x, params, img_shape):
    H, W = img_shape
    H1, W1 = H - 4, W - 4
    B = x.shape[0]
    h = jnp.maximum(x @ params["fc1_w"] + params["fc1_b"], 0.0)
    h = h.reshape(B, 8, H1, W1)

    def convt(h, wt, b):
        Cin, Cout, Kk, _ = wt.shape
        w_flip = jnp.transpose(wt[:, :, ::-1, ::-1], (1, 0, 2, 3))  # OIHW
        out = jax.lax.conv_general_dilated(
            h, w_flip, window_strides=(1, 1),
            padding=[(Kk - 1, Kk - 1), (Kk - 1, Kk - 1)],
            dimension_numbers=("NCHW", "OIHW", "NCHW"))
        return out + b.reshape(1, Cout, 1, 1)

    h = jnp.maximum(convt(h, params["ct1_w"], params["ct1_b"]), 0.0)
    h = convt(h, params["ct2_w"], params["ct2_b"])
    return jax.nn.sigmoid(h)


if __name__ == "__main__":
    key = jax.random.PRNGKey(0)
    latent_dim = 16
    img_shape = (12, 12)          # small analogue of MNIST's (28, 28)
    B = 16                        # 2 grid steps of TB=8 -> keeps both v7x TCs busy
    H1, W1 = img_shape[0] - 4, img_shape[1] - 4
    out_features = 8 * H1 * W1    # = 8 * (H-4) * (W-4)

    ks = jax.random.split(key, 7)
    params = {
        # fc1 weight stored as (in, out) so the reference computes x @ W
        "fc1_w": jax.random.normal(ks[0], (latent_dim, out_features), jnp.float32) * 0.05,
        "fc1_b": jax.random.normal(ks[1], (out_features,), jnp.float32) * 0.05,
        # ConvTranspose2d weights in PyTorch layout (Cin, Cout, K, K)
        "ct1_w": jax.random.normal(ks[2], (8, 4, 3, 3), jnp.float32) * 0.1,
        "ct1_b": jax.random.normal(ks[3], (4,), jnp.float32) * 0.1,
        "ct2_w": jax.random.normal(ks[4], (4, 1, 3, 3), jnp.float32) * 0.1,
        "ct2_b": jax.random.normal(ks[5], (1,), jnp.float32) * 0.1,
    }
    x = jax.random.normal(ks[6], (B, latent_dim), jnp.float32)

    out = jax.block_until_ready(decoder_forward(x, params, img_shape))
    assert out.shape == (B, 1, img_shape[0], img_shape[1]), out.shape

    ref = decoder_reference(x, params, img_shape)
    max_err = float(jnp.max(jnp.abs(out - ref)))
    # Tolerance covers MXU-vs-XLA f32 matmul precision differences while still
    # catching any structural (tap / offset / halo) bug (those give >= 1e-2).
    assert jnp.allclose(out, ref, atol=2e-3, rtol=2e-3), f"max_err={max_err}"

    print("KERNEL_OK")
</pallas_src>

<mosaic_0001>
module attributes {stable_mosaic.version = 11 : i64} {
  func.func @_decoder_kernel(%arg0: i32, %arg1: memref<64x136xf32, #tpu.memory_space<vmem>>, %arg2: memref<136x228xf32, #tpu.memory_space<vmem>>, %arg3: memref<9x32x64xf32, #tpu.memory_space<vmem>>, %arg4: memref<32x198xf32, #tpu.memory_space<vmem>>, %arg5: memref<9x8x32xf32, #tpu.memory_space<vmem>>, %arg6: memref<1xf32, #tpu.memory_space<smem>>, %arg7: memref<8x168xf32, #tpu.memory_space<vmem>>, %arg8: memref<64x228xf32, #tpu.memory_space<vmem>>, %arg9: memref<32x198xf32, #tpu.memory_space<vmem>>) attributes {dimension_semantics = [#tpu.dimension_semantics<parallel>], iteration_bounds = array<i64: 2>, scalar_prefetch = 0 : i64, scratch_operands = 2 : i64, tpu.core_type = #tpu.core_type<tc>, window_params = [{transform_indices = @transform_0, window_bounds = array<i64: 64, 136>}, {pipeline_mode = #tpu.pipeline_mode<synchronous>, transform_indices = @transform_1, window_bounds = array<i64: 136, 228>}, {pipeline_mode = #tpu.pipeline_mode<synchronous>, transform_indices = @transform_2, window_bounds = array<i64: 9, 32, 64>}, {pipeline_mode = #tpu.pipeline_mode<synchronous>, transform_indices = @transform_3, window_bounds = array<i64: 32, 198>}, {pipeline_mode = #tpu.pipeline_mode<synchronous>, transform_indices = @transform_4, window_bounds = array<i64: 9, 8, 32>}, {transform_indices = @transform_5, window_bounds = array<i64: 1>}, {transform_indices = @transform_6, window_bounds = array<i64: 8, 168>}]} {
    %c0 = arith.constant 0 : index
    %c0_0 = arith.constant 0 : index
    %0 = vector.load %arg1[%c0, %c0_0] : memref<64x136xf32, #tpu.memory_space<vmem>>, vector<64x136xf32>
    %c0_1 = arith.constant 0 : index
    %c0_2 = arith.constant 0 : index
    %1 = vector.load %arg2[%c0_1, %c0_2] : memref<136x228xf32, #tpu.memory_space<vmem>>, vector<136x228xf32>
    %cst = arith.constant dense<0.000000e+00> : vector<64x228xf32>
    %2 = tpu.matmul %0, %1, %cst {dimension_numbers = #tpu.dot_dimension_numbers<[1], [0], [0], [1], [0, 0, 1, 1], [], []>} : vector<64x136xf32>, vector<136x228xf32>, vector<64x228xf32> -> vector<64x228xf32>
    %cst_3 = arith.constant 0.000000e+00 : f32
    %3 = vector.broadcast %cst_3 : f32 to vector<64x228xf32>
    %4 = arith.maximumf %2, %3 : vector<64x228xf32>
    %c0_4 = arith.constant 0 : index
    %c0_5 = arith.constant 0 : index
    %5 = vector.load %arg8[%c0_4, %c0_5] : memref<64x228xf32, #tpu.memory_space<vmem>>, vector<64x228xf32>
    tpu.vector_store %arg8[%c0_4, %c0_5], %4 {strides = array<i32>} : memref<64x228xf32, #tpu.memory_space<vmem>>, vector<64x228xf32>,
    %c0_6 = arith.constant 0 : index
    %c0_7 = arith.constant 0 : index
    %c0_8 = arith.constant 0 : index
    %6 = vector.load %arg3[%c0_6, %c0_7, %c0_8] : memref<9x32x64xf32, #tpu.memory_space<vmem>>, vector<1x32x64xf32>
    %7 = vector.shape_cast %6 : vector<1x32x64xf32> to vector<32x64xf32>
    %c0_9 = arith.constant 0 : index
    %c0_10 = arith.constant 0 : index
    %8 = vector.load %arg8[%c0_9, %c0_10] : memref<64x228xf32, #tpu.memory_space<vmem>>, vector<64x198xf32>
    %cst_11 = arith.constant dense<0.000000e+00> : vector<32x198xf32>
    %9 = tpu.matmul %7, %8, %cst_11 {dimension_numbers = #tpu.dot_dimension_numbers<[1], [0], [0], [1], [0, 0, 1, 1], [], []>} : vector<32x64xf32>, vector<64x198xf32>, vector<32x198xf32> -> vector<32x198xf32>
    %c0_12 = arith.constant 0 : index
    %c0_13 = arith.constant 0 : index
    %10 = vector.load %arg9[%c0_12, %c0_13] : memref<32x198xf32, #tpu.memory_space<vmem>>, vector<32x198xf32>
    tpu.vector_store %arg9[%c0_12, %c0_13], %9 {strides = array<i32>} : memref<32x198xf32, #tpu.memory_space<vmem>>, vector<32x198xf32>,
    %c1 = arith.constant 1 : index
    %c0_14 = arith.constant 0 : index
    %c0_15 = arith.constant 0 : index
    %11 = vector.load %arg3[%c1, %c0_14, %c0_15] : memref<9x32x64xf32, #tpu.memory_space<vmem>>, vector<1x32x64xf32>
    %12 = vector.shape_cast %11 : vector<1x32x64xf32> to vector<32x64xf32>
    %c0_16 = arith.constant 0 : index
    %c1_17 = arith.constant 1 : index
    %13 = vector.load %arg8[%c0_16, %c1_17] : memref<64x228xf32, #tpu.memory_space<vmem>>, vector<64x198xf32>
    %cst_18 = arith.constant dense<0.000000e+00> : vector<32x198xf32>
    %14 = tpu.matmul %12, %13, %cst_18 {dimension_numbers = #tpu.dot_dimension_numbers<[1], [0], [0], [1], [0, 0, 1, 1], [], []>} : vector<32x64xf32>, vector<64x198xf32>, vector<32x198xf32> -> vector<32x198xf32>
    %c0_19 = arith.constant 0 : index
    %c0_20 = arith.constant 0 : index
    %15 = vector.load %arg9[%c0_19, %c0_20] : memref<32x198xf32, #tpu.memory_space<vmem>>, vector<32x198xf32>
    %16 = arith.addf %15, %14 : vector<32x198xf32>
    %c0_21 = arith.constant 0 : index
    %c0_22 = arith.constant 0 : index
    %17 = vector.load %arg9[%c0_21, %c0_22] : memref<32x198xf32, #tpu.memory_space<vmem>>, vector<32x198xf32>
    tpu.vector_store %arg9[%c0_21, %c0_22], %16 {strides = array<i32>} : memref<32x198xf32, #tpu.memory_space<vmem>>, vector<32x198xf32>,
    %c2 = arith.constant 2 : index
    %c0_23 = arith.constant 0 : index
    %c0_24 = arith.constant 0 : index
    %18 = vector.load %arg3[%c2, %c0_23, %c0_24] : memref<9x32x64xf32, #tpu.memory_space<vmem>>, vector<1x32x64xf32>
    %19 = vector.shape_cast %18 : vector<1x32x64xf32> to vector<32x64xf32>
    %c0_25 = arith.constant 0 : index
    %c2_26 = arith.constant 2 : index
    %20 = vector.load %arg8[%c0_25, %c2_26] : memref<64x228xf32, #tpu.memory_space<vmem>>, vector<64x198xf32>
    %cst_27 = arith.constant dense<0.000000e+00> : vector<32x198xf32>
    %21 = tpu.matmul %19, %20, %cst_27 {dimension_numbers = #tpu.dot_dimension_numbers<[1], [0], [0], [1], [0, 0, 1, 1], [], []>} : vector<32x64xf32>, vector<64x198xf32>, vector<32x198xf32> -> vector<32x198xf32>
    %c0_28 = arith.constant 0 : index
    %c0_29 = arith.constant 0 : index
    %22 = vector.load %arg9[%c0_28, %c0_29] : memref<32x198xf32, #tpu.memory_space<vmem>>, vector<32x198xf32>
    %23 = arith.addf %22, %21 : vector<32x198xf32>
    %c0_30 = arith.constant 0 : index
    %c0_31 = arith.constant 0 : index
    %24 = vector.load %arg9[%c0_30, %c0_31] : memref<32x198xf32, #tpu.memory_space<vmem>>, vector<32x198xf32>
    tpu.vector_store %arg9[%c0_30, %c0_31], %23 {strides = array<i32>} : memref<32x198xf32, #tpu.memory_space<vmem>>, vector<32x198xf32>,
    %c3 = arith.constant 3 : index
    %c0_32 = arith.constant 0 : index
    %c0_33 = arith.constant 0 : index
    %25 = vector.load %arg3[%c3, %c0_32, %c0_33] : memref<9x32x64xf32, #tpu.memory_space<vmem>>, vector<1x32x64xf32>
    %26 = vector.shape_cast %25 : vector<1x32x64xf32> to vector<32x64xf32>
    %c0_34 = arith.constant 0 : index
    %c14 = arith.constant 14 : index
    %27 = vector.load %arg8[%c0_34, %c14] : memref<64x228xf32, #tpu.memory_space<vmem>>, vector<64x198xf32>
    %cst_35 = arith.constant dense<0.000000e+00> : vector<32x198xf32>
    %28 = tpu.matmul %26, %27, %cst_35 {dimension_numbers = #tpu.dot_dimension_numbers<[1], [0], [0], [1], [0, 0, 1, 1], [], []>} : vector<32x64xf32>, vector<64x198xf32>, vector<32x198xf32> -> vector<32x198xf32>
    %c0_36 = arith.constant 0 : index
    %c0_37 = arith.constant 0 : index
    %29 = vector.load %arg9[%c0_36, %c0_37] : memref<32x198xf32, #tpu.memory_space<vmem>>, vector<32x198xf32>
    %30 = arith.addf %29, %28 : vector<32x198xf32>
    %c0_38 = arith.constant 0 : index
    %c0_39 = arith.constant 0 : index
    %31 = vector.load %arg9[%c0_38, %c0_39] : memref<32x198xf32, #tpu.memory_space<vmem>>, vector<32x198xf32>
    tpu.vector_store %arg9[%c0_38, %c0_39], %30 {strides = array<i32>} : memref<32x198xf32, #tpu.memory_space<vmem>>, vector<32x198xf32>,
    %c4 = arith.constant 4 : index
    %c0_40 = arith.constant 0 : index
    %c0_41 = arith.constant 0 : index
    %32 = vector.load %arg3[%c4, %c0_40, %c0_41] : memref<9x32x64xf32, #tpu.memory_space<vmem>>, vector<1x32x64xf32>
    %33 = vector.shape_cast %32 : vector<1x32x64xf32> to vector<32x64xf32>
    %c0_42 = arith.constant 0 : index
    %c15 = arith.constant 15 : index
    %34 = vector.load %arg8[%c0_42, %c15] : memref<64x228xf32, #tpu.memory_space<vmem>>, vector<64x198xf32>
    %cst_43 = arith.constant dense<0.000000e+00> : vector<32x198xf32>
    %35 = tpu.matmul %33, %34, %cst_43 {dimension_numbers = #tpu.dot_dimension_numbers<[1], [0], [0], [1], [0, 0, 1, 1], [], []>} : vector<32x64xf32>, vector<64x198xf32>, vector<32x198xf32> -> vector<32x198xf32>
    %c0_44 = arith.constant 0 : index
    %c0_45 = arith.constant 0 : index
    %36 = vector.load %arg9[%c0_44, %c0_45] : memref<32x198xf32, #tpu.memory_space<vmem>>, vector<32x198xf32>
    %37 = arith.addf %36, %35 : vector<32x198xf32>
    %c0_46 = arith.constant 0 : index
    %c0_47 = arith.constant 0 : index
    %38 = vector.load %arg9[%c0_46, %c0_47] : memref<32x198xf32, #tpu.memory_space<vmem>>, vector<32x198xf32>
    tpu.vector_store %arg9[%c0_46, %c0_47], %37 {strides = array<i32>} : memref<32x198xf32, #tpu.memory_space<vmem>>, vector<32x198xf32>,
    %c5 = arith.constant 5 : index
    %c0_48 = arith.constant 0 : index
    %c0_49 = arith.constant 0 : index
    %39 = vector.load %arg3[%c5, %c0_48, %c0_49] : memref<9x32x64xf32, #tpu.memory_space<vmem>>, vector<1x32x64xf32>
    %40 = vector.shape_cast %39 : vector<1x32x64xf32> to vector<32x64xf32>
    %c0_50 = arith.constant 0 : index
    %c16 = arith.constant 16 : index
    %41 = vector.load %arg8[%c0_50, %c16] : memref<64x228xf32, #tpu.memory_space<vmem>>, vector<64x198xf32>
    %cst_51 = arith.constant dense<0.000000e+00> : vector<32x198xf32>
    %42 = tpu.matmul %40, %41, %cst_51 {dimension_numbers = #tpu.dot_dimension_numbers<[1], [0], [0], [1], [0, 0, 1, 1], [], []>} : vector<32x64xf32>, vector<64x198xf32>, vector<32x198xf32> -> vector<32x198xf32>
    %c0_52 = arith.constant 0 : index
    %c0_53 = arith.constant 0 : index
    %43 = vector.load %arg9[%c0_52, %c0_53] : memref<32x198xf32, #tpu.memory_space<vmem>>, vector<32x198xf32>
    %44 = arith.addf %43, %42 : vector<32x198xf32>
    %c0_54 = arith.constant 0 : index
    %c0_55 = arith.constant 0 : index
    %45 = vector.load %arg9[%c0_54, %c0_55] : memref<32x198xf32, #tpu.memory_space<vmem>>, vector<32x198xf32>
    tpu.vector_store %arg9[%c0_54, %c0_55], %44 {strides = array<i32>} : memref<32x198xf32, #tpu.memory_space<vmem>>, vector<32x198xf32>,
    %c6 = arith.constant 6 : index
    %c0_56 = arith.constant 0 : index
    %c0_57 = arith.constant 0 : index
    %46 = vector.load %arg3[%c6, %c0_56, %c0_57] : memref<9x32x64xf32, #tpu.memory_space<vmem>>, vector<1x32x64xf32>
    %47 = vector.shape_cast %46 : vector<1x32x64xf32> to vector<32x64xf32>
    %c0_58 = arith.constant 0 : index
    %c28 = arith.constant 28 : index
    %48 = vector.load %arg8[%c0_58, %c28] : memref<64x228xf32, #tpu.memory_space<vmem>>, vector<64x198xf32>
    %cst_59 = arith.constant dense<0.000000e+00> : vector<32x198xf32>
    %49 = tpu.matmul %47, %48, %cst_59 {dimension_numbers = #tpu.dot_dimension_numbers<[1], [0], [0], [1], [0, 0, 1, 1], [], []>} : vector<32x64xf32>, vector<64x198xf32>, vector<32x198xf32> -> vector<32x198xf32>
    %c0_60 = arith.constant 0 : index
    %c0_61 = arith.constant 0 : index
    %50 = vector.load %arg9[%c0_60, %c0_61] : memref<32x198xf32, #tpu.memory_space<vmem>>, vector<32x198xf32>
    %51 = arith.addf %50, %49 : vector<32x198xf32>
    %c0_62 = arith.constant 0 : index
    %c0_63 = arith.constant 0 : index
    %52 = vector.load %arg9[%c0_62, %c0_63] : memref<32x198xf32, #tpu.memory_space<vmem>>, vector<32x198xf32>
    tpu.vector_store %arg9[%c0_62, %c0_63], %51 {strides = array<i32>} : memref<32x198xf32, #tpu.memory_space<vmem>>, vector<32x198xf32>,
    %c7 = arith.constant 7 : index
    %c0_64 = arith.constant 0 : index
    %c0_65 = arith.constant 0 : index
    %53 = vector.load %arg3[%c7, %c0_64, %c0_65] : memref<9x32x64xf32, #tpu.memory_space<vmem>>, vector<1x32x64xf32>
    %54 = vector.shape_cast %53 : vector<1x32x64xf32> to vector<32x64xf32>
    %c0_66 = arith.constant 0 : index
    %c29 = arith.constant 29 : index
    %55 = vector.load %arg8[%c0_66, %c29] : memref<64x228xf32, #tpu.memory_space<vmem>>, vector<64x198xf32>
    %cst_67 = arith.constant dense<0.000000e+00> : vector<32x198xf32>
    %56 = tpu.matmul %54, %55, %cst_67 {dimension_numbers = #tpu.dot_dimension_numbers<[1], [0], [0], [1], [0, 0, 1, 1], [], []>} : vector<32x64xf32>, vector<64x198xf32>, vector<32x198xf32> -> vector<32x198xf32>
    %c0_68 = arith.constant 0 : index
    %c0_69 = arith.constant 0 : index
    %57 = vector.load %arg9[%c0_68, %c0_69] : memref<32x198xf32, #tpu.memory_space<vmem>>, vector<32x198xf32>
    %58 = arith.addf %57, %56 : vector<32x198xf32>
    %c0_70 = arith.constant 0 : index
    %c0_71 = arith.constant 0 : index
    %59 = vector.load %arg9[%c0_70, %c0_71] : memref<32x198xf32, #tpu.memory_space<vmem>>, vector<32x198xf32>
    tpu.vector_store %arg9[%c0_70, %c0_71], %58 {strides = array<i32>} : memref<32x198xf32, #tpu.memory_space<vmem>>, vector<32x198xf32>,
    %c8 = arith.constant 8 : index
    %c0_72 = arith.constant 0 : index
    %c0_73 = arith.constant 0 : index
    %60 = vector.load %arg3[%c8, %c0_72, %c0_73] : memref<9x32x64xf32, #tpu.memory_space<vmem>>, vector<1x32x64xf32>
    %61 = vector.shape_cast %60 : vector<1x32x64xf32> to vector<32x64xf32>
    %c0_74 = arith.constant 0 : index
    %c30 = arith.constant 30 : index
    %62 = vector.load %arg8[%c0_74, %c30] : memref<64x228xf32, #tpu.memory_space<vmem>>, vector<64x198xf32>
    %cst_75 = arith.constant dense<0.000000e+00> : vector<32x198xf32>
    %63 = tpu.matmul %61, %62, %cst_75 {dimension_numbers = #tpu.dot_dimension_numbers<[1], [0], [0], [1], [0, 0, 1, 1], [], []>} : vector<32x64xf32>, vector<64x198xf32>, vector<32x198xf32> -> vector<32x198xf32>
    %c0_76 = arith.constant 0 : index
    %c0_77 = arith.constant 0 : index
    %64 = vector.load %arg9[%c0_76, %c0_77] : memref<32x198xf32, #tpu.memory_space<vmem>>, vector<32x198xf32>
    %65 = arith.addf %64, %63 : vector<32x198xf32>
    %c0_78 = arith.constant 0 : index
    %c0_79 = arith.constant 0 : index
    %66 = vector.load %arg9[%c0_78, %c0_79] : memref<32x198xf32, #tpu.memory_space<vmem>>, vector<32x198xf32>
    tpu.vector_store %arg9[%c0_78, %c0_79], %65 {strides = array<i32>} : memref<32x198xf32, #tpu.memory_space<vmem>>, vector<32x198xf32>,
    %c0_80 = arith.constant 0 : index
    %c0_81 = arith.constant 0 : index
    %67 = vector.load %arg9[%c0_80, %c0_81] : memref<32x198xf32, #tpu.memory_space<vmem>>, vector<32x198xf32>
    %c0_82 = arith.constant 0 : index
    %c0_83 = arith.constant 0 : index
    %68 = vector.load %arg4[%c0_82, %c0_83] : memref<32x198xf32, #tpu.memory_space<vmem>>, vector<32x198xf32>
    %69 = arith.addf %67, %68 : vector<32x198xf32>
    %cst_84 = arith.constant 0.000000e+00 : f32
    %70 = vector.broadcast %cst_84 : f32 to vector<32x198xf32>
    %71 = arith.maximumf %69, %70 : vector<32x198xf32>
    %c0_85 = arith.constant 0 : index
    %c0_86 = arith.constant 0 : index
    %72 = vector.load %arg9[%c0_85, %c0_86] : memref<32x198xf32, #tpu.memory_space<vmem>>, vector<32x198xf32>
    tpu.vector_store %arg9[%c0_85, %c0_86], %71 {strides = array<i32>} : memref<32x198xf32, #tpu.memory_space<vmem>>, vector<32x198xf32>,
    %c0_87 = arith.constant 0 : index
    %c0_88 = arith.constant 0 : index
    %c0_89 = arith.constant 0 : index
    %73 = vector.load %arg5[%c0_87, %c0_88, %c0_89] : memref<9x8x32xf32, #tpu.memory_space<vmem>>, vector<1x8x32xf32>
    %74 = vector.shape_cast %73 : vector<1x8x32xf32> to vector<8x32xf32>
    %c0_90 = arith.constant 0 : index
    %c0_91 = arith.constant 0 : index
    %75 = vector.load %arg9[%c0_90, %c0_91] : memref<32x198xf32, #tpu.memory_space<vmem>>, vector<32x168xf32>
    %cst_92 = arith.constant dense<0.000000e+00> : vector<8x168xf32>
    %76 = tpu.matmul %74, %75, %cst_92 {dimension_numbers = #tpu.dot_dimension_numbers<[1], [0], [0], [1], [0, 0, 1, 1], [], []>} : vector<8x32xf32>, vector<32x168xf32>, vector<8x168xf32> -> vector<8x168xf32>
    %c0_93 = arith.constant 0 : index
    %c0_94 = arith.constant 0 : index
    %77 = vector.load %arg7[%c0_93, %c0_94] : memref<8x168xf32, #tpu.memory_space<vmem>>, vector<8x168xf32>
    tpu.vector_store %arg7[%c0_93, %c0_94], %76 {strides = array<i32>} : memref<8x168xf32, #tpu.memory_space<vmem>>, vector<8x168xf32>,
    %c1_95 = arith.constant 1 : index
    %c0_96 = arith.constant 0 : index
    %c0_97 = arith.constant 0 : index
    %78 = vector.load %arg5[%c1_95, %c0_96, %c0_97] : memref<9x8x32xf32, #tpu.memory_space<vmem>>, vector<1x8x32xf32>
    %79 = vector.shape_cast %78 : vector<1x8x32xf32> to vector<8x32xf32>
    %c0_98 = arith.constant 0 : index
    %c1_99 = arith.constant 1 : index
    %80 = vector.load %arg9[%c0_98, %c1_99] : memref<32x198xf32, #tpu.memory_space<vmem>>, vector<32x168xf32>
    %cst_100 = arith.constant dense<0.000000e+00> : vector<8x168xf32>
    %81 = tpu.matmul %79, %80, %cst_100 {dimension_numbers = #tpu.dot_dimension_numbers<[1], [0], [0], [1], [0, 0, 1, 1], [], []>} : vector<8x32xf32>, vector<32x168xf32>, vector<8x168xf32> -> vector<8x168xf32>
    %c0_101 = arith.constant 0 : index
    %c0_102 = arith.constant 0 : index
    %82 = vector.load %arg7[%c0_101, %c0_102] : memref<8x168xf32, #tpu.memory_space<vmem>>, vector<8x168xf32>
    %83 = arith.addf %82, %81 : vector<8x168xf32>
    %c0_103 = arith.constant 0 : index
    %c0_104 = arith.constant 0 : index
    %84 = vector.load %arg7[%c0_103, %c0_104] : memref<8x168xf32, #tpu.memory_space<vmem>>, vector<8x168xf32>
    tpu.vector_store %arg7[%c0_103, %c0_104], %83 {strides = array<i32>} : memref<8x168xf32, #tpu.memory_space<vmem>>, vector<8x168xf32>,
    %c2_105 = arith.constant 2 : index
    %c0_106 = arith.constant 0 : index
    %c0_107 = arith.constant 0 : index
    %85 = vector.load %arg5[%c2_105, %c0_106, %c0_107] : memref<9x8x32xf32, #tpu.memory_space<vmem>>, vector<1x8x32xf32>
    %86 = vector.shape_cast %85 : vector<1x8x32xf32> to vector<8x32xf32>
    %c0_108 = arith.constant 0 : index
    %c2_109 = arith.constant 2 : index
    %87 = vector.load %arg9[%c0_108, %c2_109] : memref<32x198xf32, #tpu.memory_space<vmem>>, vector<32x168xf32>
    %cst_110 = arith.constant dense<0.000000e+00> : vector<8x168xf32>
    %88 = tpu.matmul %86, %87, %cst_110 {dimension_numbers = #tpu.dot_dimension_numbers<[1], [0], [0], [1], [0, 0, 1, 1], [], []>} : vector<8x32xf32>, vector<32x168xf32>, vector<8x168xf32> -> vector<8x168xf32>
    %c0_111 = arith.constant 0 : index
    %c0_112 = arith.constant 0 : index
    %89 = vector.load %arg7[%c0_111, %c0_112] : memref<8x168xf32, #tpu.memory_space<vmem>>, vector<8x168xf32>
    %90 = arith.addf %89, %88 : vector<8x168xf32>
    %c0_113 = arith.constant 0 : index
    %c0_114 = arith.constant 0 : index
    %91 = vector.load %arg7[%c0_113, %c0_114] : memref<8x168xf32, #tpu.memory_space<vmem>>, vector<8x168xf32>
    tpu.vector_store %arg7[%c0_113, %c0_114], %90 {strides = array<i32>} : memref<8x168xf32, #tpu.memory_space<vmem>>, vector<8x168xf32>,
    %c3_115 = arith.constant 3 : index
    %c0_116 = arith.constant 0 : index
    %c0_117 = arith.constant 0 : index
    %92 = vector.load %arg5[%c3_115, %c0_116, %c0_117] : memref<9x8x32xf32, #tpu.memory_space<vmem>>, vector<1x8x32xf32>
    %93 = vector.shape_cast %92 : vector<1x8x32xf32> to vector<8x32xf32>
    %c0_118 = arith.constant 0 : index
    %c14_119 = arith.constant 14 : index
    %94 = vector.load %arg9[%c0_118, %c14_119] : memref<32x198xf32, #tpu.memory_space<vmem>>, vector<32x168xf32>
    %cst_120 = arith.constant dense<0.000000e+00> : vector<8x168xf32>
    %95 = tpu.matmul %93, %94, %cst_120 {dimension_numbers = #tpu.dot_dimension_numbers<[1], [0], [0], [1], [0, 0, 1, 1], [], []>} : vector<8x32xf32>, vector<32x168xf32>, vector<8x168xf32> -> vector<8x168xf32>
    %c0_121 = arith.constant 0 : index
    %c0_122 = arith.constant 0 : index
    %96 = vector.load %arg7[%c0_121, %c0_122] : memref<8x168xf32, #tpu.memory_space<vmem>>, vector<8x168xf32>
    %97 = arith.addf %96, %95 : vector<8x168xf32>
    %c0_123 = arith.constant 0 : index
    %c0_124 = arith.constant 0 : index
    %98 = vector.load %arg7[%c0_123, %c0_124] : memref<8x168xf32, #tpu.memory_space<vmem>>, vector<8x168xf32>
    tpu.vector_store %arg7[%c0_123, %c0_124], %97 {strides = array<i32>} : memref<8x168xf32, #tpu.memory_space<vmem>>, vector<8x168xf32>,
    %c4_125 = arith.constant 4 : index
    %c0_126 = arith.constant 0 : index
    %c0_127 = arith.constant 0 : index
    %99 = vector.load %arg5[%c4_125, %c0_126, %c0_127] : memref<9x8x32xf32, #tpu.memory_space<vmem>>, vector<1x8x32xf32>
    %100 = vector.shape_cast %99 : vector<1x8x32xf32> to vector<8x32xf32>
    %c0_128 = arith.constant 0 : index
    %c15_129 = arith.constant 15 : index
    %101 = vector.load %arg9[%c0_128, %c15_129] : memref<32x198xf32, #tpu.memory_space<vmem>>, vector<32x168xf32>
    %cst_130 = arith.constant dense<0.000000e+00> : vector<8x168xf32>
    %102 = tpu.matmul %100, %101, %cst_130 {dimension_numbers = #tpu.dot_dimension_numbers<[1], [0], [0], [1], [0, 0, 1, 1], [], []>} : vector<8x32xf32>, vector<32x168xf32>, vector<8x168xf32> -> vector<8x168xf32>
    %c0_131 = arith.constant 0 : index
    %c0_132 = arith.constant 0 : index
    %103 = vector.load %arg7[%c0_131, %c0_132] : memref<8x168xf32, #tpu.memory_space<vmem>>, vector<8x168xf32>
    %104 = arith.addf %103, %102 : vector<8x168xf32>
    %c0_133 = arith.constant 0 : index
    %c0_134 = arith.constant 0 : index
    %105 = vector.load %arg7[%c0_133, %c0_134] : memref<8x168xf32, #tpu.memory_space<vmem>>, vector<8x168xf32>
    tpu.vector_store %arg7[%c0_133, %c0_134], %104 {strides = array<i32>} : memref<8x168xf32, #tpu.memory_space<vmem>>, vector<8x168xf32>,
    %c5_135 = arith.constant 5 : index
    %c0_136 = arith.constant 0 : index
    %c0_137 = arith.constant 0 : index
    %106 = vector.load %arg5[%c5_135, %c0_136, %c0_137] : memref<9x8x32xf32, #tpu.memory_space<vmem>>, vector<1x8x32xf32>
    %107 = vector.shape_cast %106 : vector<1x8x32xf32> to vector<8x32xf32>
    %c0_138 = arith.constant 0 : index
    %c16_139 = arith.constant 16 : index
    %108 = vector.load %arg9[%c0_138, %c16_139] : memref<32x198xf32, #tpu.memory_space<vmem>>, vector<32x168xf32>
    %cst_140 = arith.constant dense<0.000000e+00> : vector<8x168xf32>
    %109 = tpu.matmul %107, %108, %cst_140 {dimension_numbers = #tpu.dot_dimension_numbers<[1], [0], [0], [1], [0, 0, 1, 1], [], []>} : vector<8x32xf32>, vector<32x168xf32>, vector<8x168xf32> -> vector<8x168xf32>
    %c0_141 = arith.constant 0 : index
    %c0_142 = arith.constant 0 : index
    %110 = vector.load %arg7[%c0_141, %c0_142] : memref<8x168xf32, #tpu.memory_space<vmem>>, vector<8x168xf32>
    %111 = arith.addf %110, %109 : vector<8x168xf32>
    %c0_143 = arith.constant 0 : index
    %c0_144 = arith.constant 0 : index
    %112 = vector.load %arg7[%c0_143, %c0_144] : memref<8x168xf32, #tpu.memory_space<vmem>>, vector<8x168xf32>
    tpu.vector_store %arg7[%c0_143, %c0_144], %111 {strides = array<i32>} : memref<8x168xf32, #tpu.memory_space<vmem>>, vector<8x168xf32>,
    %c6_145 = arith.constant 6 : index
    %c0_146 = arith.constant 0 : index
    %c0_147 = arith.constant 0 : index
    %113 = vector.load %arg5[%c6_145, %c0_146, %c0_147] : memref<9x8x32xf32, #tpu.memory_space<vmem>>, vector<1x8x32xf32>
    %114 = vector.shape_cast %113 : vector<1x8x32xf32> to vector<8x32xf32>
    %c0_148 = arith.constant 0 : index
    %c28_149 = arith.constant 28 : index
    %115 = vector.load %arg9[%c0_148, %c28_149] : memref<32x198xf32, #tpu.memory_space<vmem>>, vector<32x168xf32>
    %cst_150 = arith.constant dense<0.000000e+00> : vector<8x168xf32>
    %116 = tpu.matmul %114, %115, %cst_150 {dimension_numbers = #tpu.dot_dimension_numbers<[1], [0], [0], [1], [0, 0, 1, 1], [], []>} : vector<8x32xf32>, vector<32x168xf32>, vector<8x168xf32> -> vector<8x168xf32>
    %c0_151 = arith.constant 0 : index
    %c0_152 = arith.constant 0 : index
    %117 = vector.load %arg7[%c0_151, %c0_152] : memref<8x168xf32, #tpu.memory_space<vmem>>, vector<8x168xf32>
    %118 = arith.addf %117, %116 : vector<8x168xf32>
    %c0_153 = arith.constant 0 : index
    %c0_154 = arith.constant 0 : index
    %119 = vector.load %arg7[%c0_153, %c0_154] : memref<8x168xf32, #tpu.memory_space<vmem>>, vector<8x168xf32>
    tpu.vector_store %arg7[%c0_153, %c0_154], %118 {strides = array<i32>} : memref<8x168xf32, #tpu.memory_space<vmem>>, vector<8x168xf32>,
    %c7_155 = arith.constant 7 : index
    %c0_156 = arith.constant 0 : index
    %c0_157 = arith.constant 0 : index
    %120 = vector.load %arg5[%c7_155, %c0_156, %c0_157] : memref<9x8x32xf32, #tpu.memory_space<vmem>>, vector<1x8x32xf32>
    %121 = vector.shape_cast %120 : vector<1x8x32xf32> to vector<8x32xf32>
    %c0_158 = arith.constant 0 : index
    %c29_159 = arith.constant 29 : index
    %122 = vector.load %arg9[%c0_158, %c29_159] : memref<32x198xf32, #tpu.memory_space<vmem>>, vector<32x168xf32>
    %cst_160 = arith.constant dense<0.000000e+00> : vector<8x168xf32>
    %123 = tpu.matmul %121, %122, %cst_160 {dimension_numbers = #tpu.dot_dimension_numbers<[1], [0], [0], [1], [0, 0, 1, 1], [], []>} : vector<8x32xf32>, vector<32x168xf32>, vector<8x168xf32> -> vector<8x168xf32>
    %c0_161 = arith.constant 0 : index
    %c0_162 = arith.constant 0 : index
    %124 = vector.load %arg7[%c0_161, %c0_162] : memref<8x168xf32, #tpu.memory_space<vmem>>, vector<8x168xf32>
    %125 = arith.addf %124, %123 : vector<8x168xf32>
    %c0_163 = arith.constant 0 : index
    %c0_164 = arith.constant 0 : index
    %126 = vector.load %arg7[%c0_163, %c0_164] : memref<8x168xf32, #tpu.memory_space<vmem>>, vector<8x168xf32>
    tpu.vector_store %arg7[%c0_163, %c0_164], %125 {strides = array<i32>} : memref<8x168xf32, #tpu.memory_space<vmem>>, vector<8x168xf32>,
    %c8_165 = arith.constant 8 : index
    %c0_166 = arith.constant 0 : index
    %c0_167 = arith.constant 0 : index
    %127 = vector.load %arg5[%c8_165, %c0_166, %c0_167] : memref<9x8x32xf32, #tpu.memory_space<vmem>>, vector<1x8x32xf32>
    %128 = vector.shape_cast %127 : vector<1x8x32xf32> to vector<8x32xf32>
    %c0_168 = arith.constant 0 : index
    %c30_169 = arith.constant 30 : index
    %129 = vector.load %arg9[%c0_168, %c30_169] : memref<32x198xf32, #tpu.memory_space<vmem>>, vector<32x168xf32>
    %cst_170 = arith.constant dense<0.000000e+00> : vector<8x168xf32>
    %130 = tpu.matmul %128, %129, %cst_170 {dimension_numbers = #tpu.dot_dimension_numbers<[1], [0], [0], [1], [0, 0, 1, 1], [], []>} : vector<8x32xf32>, vector<32x168xf32>, vector<8x168xf32> -> vector<8x168xf32>
    %c0_171 = arith.constant 0 : index
    %c0_172 = arith.constant 0 : index
    %131 = vector.load %arg7[%c0_171, %c0_172] : memref<8x168xf32, #tpu.memory_space<vmem>>, vector<8x168xf32>
    %132 = arith.addf %131, %130 : vector<8x168xf32>
    %c0_173 = arith.constant 0 : index
    %c0_174 = arith.constant 0 : index
    %133 = vector.load %arg7[%c0_173, %c0_174] : memref<8x168xf32, #tpu.memory_space<vmem>>, vector<8x168xf32>
    tpu.vector_store %arg7[%c0_173, %c0_174], %132 {strides = array<i32>} : memref<8x168xf32, #tpu.memory_space<vmem>>, vector<8x168xf32>,
    %c0_175 = arith.constant 0 : index
    %c0_176 = arith.constant 0 : index
    %134 = vector.load %arg7[%c0_175, %c0_176] : memref<8x168xf32, #tpu.memory_space<vmem>>, vector<8x168xf32>
    %c0_177 = arith.constant 0 : index
    %135 = memref.load %arg6[%c0_177] : memref<1xf32, #tpu.memory_space<smem>>
    %136 = vector.broadcast %135 : f32 to vector<8x168xf32>
    %137 = arith.addf %134, %136 : vector<8x168xf32>
    %cst_178 = arith.constant 5.000000e-01 : f32
    %138 = vector.broadcast %cst_178 : f32 to vector<8x168xf32>
    %139 = arith.mulf %138, %137 : vector<8x168xf32>
    %140 = math.tanh %139 : vector<8x168xf32>
    %cst_179 = arith.constant 5.000000e-01 : f32
    %141 = vector.broadcast %cst_179 : f32 to vector<8x168xf32>
    %142 = arith.mulf %141, %140 : vector<8x168xf32>
    %cst_180 = arith.constant 5.000000e-01 : f32
    %143 = vector.broadcast %cst_180 : f32 to vector<8x168xf32>
    %144 = arith.addf %142, %143 : vector<8x168xf32>
    %c0_181 = arith.constant 0 : index
    %c0_182 = arith.constant 0 : index
    %145 = vector.load %arg7[%c0_181, %c0_182] : memref<8x168xf32, #tpu.memory_space<vmem>>, vector<8x168xf32>
    tpu.vector_store %arg7[%c0_181, %c0_182], %144 {strides = array<i32>} : memref<8x168xf32, #tpu.memory_space<vmem>>, vector<8x168xf32>,
    return
  }
  func.func @transform_0(%arg0: i32) -> (i32, i32) {
    %c0_i32 = arith.constant 0 : i32
    %c0_i32_0 = arith.constant 0 : i32
    return %arg0, %c0_i32 : i32, i32
  }
  func.func @transform_1(%arg0: i32) -> (i32, i32) {
    %c0_i32 = arith.constant 0 : i32
    %c0_i32_0 = arith.constant 0 : i32
    %c0_i32_1 = arith.constant 0 : i32
    return %c0_i32, %c0_i32_0 : i32, i32
  }
  func.func @transform_2(%arg0: i32) -> (i32, i32, i32) {
    %c0_i32 = arith.constant 0 : i32
    %c0_i32_0 = arith.constant 0 : i32
    %c0_i32_1 = arith.constant 0 : i32
    %c0_i32_2 = arith.constant 0 : i32
    return %c0_i32, %c0_i32_0, %c0_i32_1 : i32, i32, i32
  }
  func.func @transform_3(%arg0: i32) -> (i32, i32) {
    %c0_i32 = arith.constant 0 : i32
    %c0_i32_0 = arith.constant 0 : i32
    %c0_i32_1 = arith.constant 0 : i32
    return %c0_i32, %c0_i32_0 : i32, i32
  }
  func.func @transform_4(%arg0: i32) -> (i32, i32, i32) {
    %c0_i32 = arith.constant 0 : i32
    %c0_i32_0 = arith.constant 0 : i32
    %c0_i32_1 = arith.constant 0 : i32
    %c0_i32_2 = arith.constant 0 : i32
    return %c0_i32, %c0_i32_0, %c0_i32_1 : i32, i32, i32
  }
  func.func @transform_5(%arg0: i32) -> i32 {
    %c0_i32 = arith.constant 0 : i32
    %c0_i32_0 = arith.constant 0 : i32
    return %c0_i32 : i32
  }
  func.func @transform_6(%arg0: i32) -> (i32, i32) {
    %c0_i32 = arith.constant 0 : i32
    %c0_i32_0 = arith.constant 0 : i32
    return %arg0, %c0_i32 : i32, i32
  }
}

</mosaic_0001>

<llo_original>
// kernel: tpu_custom_call.1
$region0: #{tpu_custom_call.1}
  #allocation0 [shape = 'u32[]', space=smem, size = 0x4, offset = 0x4, fixed_abs, tag = 'smem constant byte address 0x4 - core index']
  #allocation1 [shape = 'u32[144,128]{1,0:T(1,128)}', space=vmem, size = 0x12000, scoped, tag = 'internal scratch']
  #allocation2 [shape = 'f32[64,228]{1,0:T(8,128)}', space=vmem, size = 0x10000, scoped, tag = 'scratch operand']
  #allocation3 [shape = 'f32[32,198]{1,0:T(8,128)}', space=vmem, size = 0x8000, scoped, tag = 'scratch operand']
  #allocation4 [shape = 'f32[1]{0:T(128)S(6)}', space=smem, size = 0x200, scoped, tag = 'scoped memory for tpu_custom_call.1']
  %s0 = inlined_call_operand.vmem [shape: f32[128,136], index: 0, kind: input, shape index: {}]
  %s1 = inlined_call_operand.hbm [shape: f32[136,228], index: 1, kind: input, shape index: {}]
  %s2 = inlined_call_operand.vmem [shape: f32[9,32,64], index: 2, kind: input, shape index: {}]
  %s3 = inlined_call_operand.hbm [shape: f32[32,198], index: 3, kind: input, shape index: {}]
  %s4 = inlined_call_operand.vmem [shape: f32[9,8,32], index: 4, kind: input, shape index: {}]
  %s5 = inlined_call_operand.<no memory space> [shape: f32[1], index: 5, kind: input, shape index: {}]
  %s6 = inlined_call_operand.hbm [shape: f32[16,168], index: 6, kind: output, shape index: {}]
  %s7 = sld [smem:[#allocation0]]
  $region65: #{tpu_custom_call.1} parent=0
    _
  %s9 = ssub.s32 1, %s7
  %s10 = scalar_select 0, %s9, %s7
  %11 = sst [smem:[#allocation4]] %s5
  $region1: #{tpu_custom_call.1} parent=0
    #allocation5 [shape = 'u8[139264]{0}', space=vmem, size = 0x22000, scoped, tag = 'input window, operand 1, single buffered']
    #allocation6 [shape = 's32[2]{0}', space=sflag, size = 0x8, scoped, tag = 'scoped memory for tpu_custom_call.1']
    #allocation7 [shape = 's32[2]{0}', space=sflag, size = 0x8, scoped, tag = 'scoped memory for tpu_custom_call.1']
    #allocation8 [shape = 'u8[32768]{0}', space=vmem, size = 0x8000, scoped, tag = 'input window, operand 3, single buffered']
    #allocation9 [shape = 's32[1]{0}', space=sflag, size = 0x4, scoped, tag = 'scoped memory for tpu_custom_call.1']
    #allocation10 [shape = 'u8[16384]{0}', space=vmem, size = 0x4000, scoped, tag = 'output window, operand 0']
    %12 = vsyncpa [#allocation6], 0
    %13 = vsyncpa [#allocation9], 0
    %14 = vsyncpa [#allocation7], 0
    %s15 = scalar_lea.sflag [#allocation7], 1
    %16 = vsyncpa %s15, 0
    loop: start=0, step=1, limit=4
    $region2: #{tpu_custom_call.1} parent=1 // loop_pre_header
      _
    $region3: #{tpu_custom_call.1} parent=1 // loop_header
      %s18 = sphi 0, %s22
      %p19 = scmp.ge.s32.totalorder %s18, 4
      %s28 = sphi 0, %s30
      %s31 = sphi 0, %s28
      %s32 = sphi 0, %s31
      %s48 = sphi 0, %s32
      %s52 = sphi 0, %s52
      %s54 = sphi 0, %s52
      %s55 = sphi 0, %s54
      %s69 = sphi 0, %s55
      %s73 = sphi 0, %s73
      %s75 = sphi 0, %s73
      %s76 = sphi 0, %s75
      %s90 = sphi 0, %s76
      %s94 = sphi 0, %s94
      %s96 = sphi 0, %s94
      %s97 = sphi 0, %s96
      %s111 = sphi 0, %s97
      %s115 = sphi 0, %s115
      %s117 = sphi 0, %s115
      %s118 = sphi 0, %s117
      %s132 = sphi 0, %s118
      %s136 = sphi 0, %s136
      %s138 = sphi 0, %s136
      %s139 = sphi 0, %s138
      %s153 = sphi 0, %s139
      %s159 = sphi 0, %s161
      %s162 = sphi 0, %s159
      %s163 = sphi 0, %s162
      %s179 = sphi 0, %s163
    $region4: #{tpu_custom_call.1} parent=1 // loop_header_branch
      %21 = sbr.rel (%p19) target = $region8
    $region5: #{tpu_custom_call.1} parent=1 // loop_body
      %s23 = ssub.s32 %s18, 1
      %s24 = ssub.s32 %s18, 2
      %s25 = sadd.s32 %s18, 1
      %s26 = ssub.s32 %s18, %s25
      %p27 = scmp.eq.s32.totalorder %s26, 0
      %s29 = sadd.s32 %s28, 1
      %s30 = scalar_select %p27, %s28, %s29
      %p33 = pneg %p27
      %p34 = scmp.eq.s32.totalorder %s18, 1
      %p35 = por %p33, %p34
      %p36 = scmp.ne.s32.totalorder %s28, %s31
      %p37 = scmp.eq.s32.totalorder %s18, 0
      %p38 = por %p36, %p37
      %p39 = scmp.ne.s32.totalorder %s28, %s31
      %p40 = scmp.eq.s32.totalorder %s23, 1
      %p41 = por %p39, %p40
      %p42 = scmp.ne.s32.totalorder %s31, %s32
      %p43 = scmp.eq.s32.totalorder %s23, 0
      %p44 = por %p42, %p43
      %p45 = scmp.ne.s32.totalorder %s31, %s32
      %p46 = scmp.eq.s32.totalorder %s24, 1
      %p47 = por %p45, %p46
      %p49 = scmp.ne.s32.totalorder %s32, %s48
      %p50 = scmp.eq.s32.totalorder %s24, 0
      %p51 = por %p49, %p50
      %s53 = sadd.s32 %s52, 1
      %p56 = scmp.eq.s32.totalorder %s18, 1
      %p57 = scmp.ne.s32.totalorder %s52, %s54
      %p58 = scmp.eq.s32.totalorder %s18, 0
      %p59 = por %p57, %p58
      %p60 = scmp.ne.s32.totalorder %s52, %s54
      %p61 = scmp.eq.s32.totalorder %s23, 1
      %p62 = por %p60, %p61
      %p63 = scmp.ne.s32.totalorder %s54, %s55
      %p64 = scmp.eq.s32.totalorder %s23, 0
      %p65 = por %p63, %p64
      %p66 = scmp.ne.s32.totalorder %s54, %s55
      %p67 = scmp.eq.s32.totalorder %s24, 1
      %p68 = por %p66, %p67
      %p70 = scmp.ne.s32.totalorder %s55, %s69
      %p71 = scmp.eq.s32.totalorder %s24, 0
      %p72 = por %p70, %p71
      %s74 = sadd.s32 %s73, 1
      %p77 = scmp.eq.s32.totalorder %s18, 1
      %p78 = scmp.ne.s32.totalorder %s73, %s75
      %p79 = scmp.eq.s32.totalorder %s18, 0
      %p80 = por %p78, %p79
      %p81 = scmp.ne.s32.totalorder %s73, %s75
      %p82 = scmp.eq.s32.totalorder %s23, 1
      %p83 = por %p81, %p82
      %p84 = scmp.ne.s32.totalorder %s75, %s76
      %p85 = scmp.eq.s32.totalorder %s23, 0
      %p86 = por %p84, %p85
      %p87 = scmp.ne.s32.totalorder %s75, %s76
      %p88 = scmp.eq.s32.totalorder %s24, 1
      %p89 = por %p87, %p88
      %p91 = scmp.ne.s32.totalorder %s76, %s90
      %p92 = scmp.eq.s32.totalorder %s24, 0
      %p93 = por %p91, %p92
      %s95 = sadd.s32 %s94, 1
      %p98 = scmp.eq.s32.totalorder %s18, 1
      %p99 = scmp.ne.s32.totalorder %s94, %s96
      %p100 = scmp.eq.s32.totalorder %s18, 0
      %p101 = por %p99, %p100
      %p102 = scmp.ne.s32.totalorder %s94, %s96
      %p103 = scmp.eq.s32.totalorder %s23, 1
      %p104 = por %p102, %p103
      %p105 = scmp.ne.s32.totalorder %s96, %s97
      %p106 = scmp.eq.s32.totalorder %s23, 0
      %p107 = por %p105, %p106
      %p108 = scmp.ne.s32.totalorder %s96, %s97
      %p109 = scmp.eq.s32.totalorder %s24, 1
      %p110 = por %p108, %p109
      %p112 = scmp.ne.s32.totalorder %s97, %s111
      %p113 = scmp.eq.s32.totalorder %s24, 0
      %p114 = por %p112, %p113
      %s116 = sadd.s32 %s115, 1
      %p119 = scmp.eq.s32.totalorder %s18, 1
      %p120 = scmp.ne.s32.totalorder %s115, %s117
      %p121 = scmp.eq.s32.totalorder %s18, 0
      %p122 = por %p120, %p121
      %p123 = scmp.ne.s32.totalorder %s115, %s117
      %p124 = scmp.eq.s32.totalorder %s23, 1
      %p125 = por %p123, %p124
      %p126 = scmp.ne.s32.totalorder %s117, %s118
      %p127 = scmp.eq.s32.totalorder %s23, 0
      %p128 = por %p126, %p127
      %p129 = scmp.ne.s32.totalorder %s117, %s118
      %p130 = scmp.eq.s32.totalorder %s24, 1
      %p131 = por %p129, %p130
      %p133 = scmp.ne.s32.totalorder %s118, %s132
      %p134 = scmp.eq.s32.totalorder %s24, 0
      %p135 = por %p133, %p134
      %s137 = sadd.s32 %s136, 1
      %p140 = scmp.eq.s32.totalorder %s18, 1
      %p141 = scmp.ne.s32.totalorder %s136, %s138
      %p142 = scmp.eq.s32.totalorder %s18, 0
      %p143 = por %p141, %p142
      %p144 = scmp.ne.s32.totalorder %s136, %s138
      %p145 = scmp.eq.s32.totalorder %s23, 1
      %p146 = por %p144, %p145
      %p147 = scmp.ne.s32.totalorder %s138, %s139
      %p148 = scmp.eq.s32.totalorder %s23, 0
      %p149 = por %p147, %p148
      %p150 = scmp.ne.s32.totalorder %s138, %s139
      %p151 = scmp.eq.s32.totalorder %s24, 1
      %p152 = por %p150, %p151
      %p154 = scmp.ne.s32.totalorder %s139, %s153
      %p155 = scmp.eq.s32.totalorder %s24, 0
      %p156 = por %p154, %p155
      %s157 = ssub.s32 %s18, %s25
      %p158 = scmp.eq.s32.totalorder %s157, 0
      %s160 = sadd.s32 %s159, 1
      %s161 = scalar_select %p158, %s159, %s160
      %p164 = pneg %p158
      %p165 = scmp.eq.s32.totalorder %s18, 1
      %p166 = por %p164, %p165
      %p167 = scmp.ne.s32.totalorder %s159, %s162
      %p168 = scmp.eq.s32.totalorder %s18, 0
      %p169 = por %p167, %p168
      %p170 = scmp.ne.s32.totalorder %s159, %s162
      %p171 = scmp.eq.s32.totalorder %s23, 1
      %p172 = por %p170, %p171
      %p173 = scmp.ne.s32.totalorder %s162, %s163
      %p174 = scmp.eq.s32.totalorder %s23, 0
      %p175 = por %p173, %p174
      %p176 = scmp.ne.s32.totalorder %s162, %s163
      %p177 = scmp.eq.s32.totalorder %s24, 1
      %p178 = por %p176, %p177
      %p180 = scmp.ne.s32.totalorder %s163, %s179
      %p181 = scmp.eq.s32.totalorder %s24, 0
      %p182 = por %p180, %p181
      %p183 = scmp.le.s32.totalorder 1, %s18
      %p184 = scmp.lt.s32.totalorder %s18, 3
      %p185 = pnand %p183, %p184
      %p186 = pneg %p185
      // Predicated region
      $region9: #{tpu_custom_call.1} parent=5 // pred_check
        _
      $region10: #{tpu_custom_call.1} parent=5 // pred_check_branch
        %188 = sbr.rel (%p185) target = $region12
      $region11: #{tpu_custom_call.1} parent=5 // pred_region
        %s189 = ssub.s32 %s18, 1
        // Predicated region
        $region13: #{tpu_custom_call.1} parent=11 // pred_check
          %p190 = pneg %p65
        $region14: #{tpu_custom_call.1} parent=11 // pred_check_branch
          %192 = sbr.rel (%p190) target = $region16
        $region15: #{tpu_custom_call.1} parent=11 // pred_region
          %s194 = ssub.s32 4352, 4352
          %195 = vsyncadd [#allocation6], %s194
          %s196 = sshll.u32 [#allocation5], 4
          %s197 = int_to_ptr.vmem [resolvable:$true] %s196
          %202 = dma.hbm_to_vmem [thread:$0]  %s1, 4352, %s197, [#allocation6], 256, 256, 16
        $region16: #{tpu_custom_call.1} parent=11 // pred_fallthru
          _
        // Predicated region
        $region17: #{tpu_custom_call.1} parent=11 // pred_check
          %p203 = pneg %p86
        $region18: #{tpu_custom_call.1} parent=11 // pred_check_branch
          %205 = sbr.rel (%p203) target = $region20
        $region19: #{tpu_custom_call.1} parent=11 // pred_region
          _
        $region20: #{tpu_custom_call.1} parent=11 // pred_fallthru
          _
        // Predicated region
        $region21: #{tpu_custom_call.1} parent=11 // pred_check
          %p206 = pneg %p107
        $region22: #{tpu_custom_call.1} parent=11 // pred_check_branch
          %208 = sbr.rel (%p206) target = $region24
        $region23: #{tpu_custom_call.1} parent=11 // pred_region
          %s210 = ssub.s32 1024, 1024
          %211 = vsyncadd [#allocation9], %s210
          %s212 = sshll.u32 [#allocation8], 4
          %s213 = int_to_ptr.vmem [resolvable:$true] %s212
          %218 = dma.hbm_to_vmem [thread:$0]  %s3, 1024, %s213, [#allocation9], 256, 256, 16
        $region24: #{tpu_custom_call.1} parent=11 // pred_fallthru
          _
        // Predicated region
        $region25: #{tpu_custom_call.1} parent=11 // pred_check
          %p219 = pneg %p128
        $region26: #{tpu_custom_call.1} parent=11 // pred_check_branch
          %221 = sbr.rel (%p219) target = $region28
        $region27: #{tpu_custom_call.1} parent=11 // pred_region
          _
        $region28: #{tpu_custom_call.1} parent=11 // pred_fallthru
          _
        // Predicated region
        $region29: #{tpu_custom_call.1} parent=11 // pred_check
          %p222 = pneg %p149
        $region30: #{tpu_custom_call.1} parent=11 // pred_check_branch
          %224 = sbr.rel (%p222) target = $region32
        $region31: #{tpu_custom_call.1} parent=11 // pred_region
          _
        $region32: #{tpu_custom_call.1} parent=11 // pred_fallthru
          _
      $region12: #{tpu_custom_call.1} parent=5 // pred_fallthru
        _
      %p225 = scmp.lt.s32.totalorder %s18, 2
      // Predicated region
      $region33: #{tpu_custom_call.1} parent=5 // pred_check
        %p226 = pneg %p225
      $region34: #{tpu_custom_call.1} parent=5 // pred_check_branch
        %228 = sbr.rel (%p226) target = $region36
      $region35: #{tpu_custom_call.1} parent=5 // pred_region
        // Predicated region
        $region37: #{tpu_custom_call.1} parent=35 // pred_check
          %p229 = pneg %p38
        $region38: #{tpu_custom_call.1} parent=35 // pred_check_branch
          %231 = sbr.rel (%p229) target = $region40
        $region39: #{tpu_custom_call.1} parent=35 // pred_region
          %s232 = smul.u32 8, %s18
          %p233 = scmp.lt.s32.totalorder %s232, 15
          %s234 = scalar_select %p233, %s232, 15
          %s235 = smul.addr %s234, 2
          %s236 = smul.addr %s235, 8
          %s237 = scalar_lea.vmem %s0, %s236
          %s238 = smul.u32 8, %s18
        $region40: #{tpu_custom_call.1} parent=35 // pred_fallthru
          _
      $region36: #{tpu_custom_call.1} parent=5 // pred_fallthru
        _
      %p239 = scmp.le.s32.totalorder 1, %s18
      %p240 = scmp.lt.s32.totalorder %s18, 3
      %p241 = pnand %p239, %p240
      %p242 = pneg %p241
      // Predicated region
      $region41: #{tpu_custom_call.1} parent=5 // pred_check
        _
      $region42: #{tpu_custom_call.1} parent=5 // pred_check_branch
        %244 = sbr.rel (%p241) target = $region44
      $region43: #{tpu_custom_call.1} parent=5 // pred_region
        %s245 = ssub.s32 %s18, 1
        // Predicated region
        $region45: #{tpu_custom_call.1} parent=43 // pred_check
          %p246 = pneg %p65
        $region46: #{tpu_custom_call.1} parent=43 // pred_check_branch
          %248 = sbr.rel (%p246) target = $region48
        $region47: #{tpu_custom_call.1} parent=43 // pred_region
          %249 = dma.done [#allocation6], 4352
        $region48: #{tpu_custom_call.1} parent=43 // pred_fallthru
          _
        // Predicated region
        $region49: #{tpu_custom_call.1} parent=43 // pred_check
          %p250 = pneg %p107
        $region50: #{tpu_custom_call.1} parent=43 // pred_check_branch
          %252 = sbr.rel (%p250) target = $region52
        $region51: #{tpu_custom_call.1} parent=43 // pred_region
          %253 = dma.done [#allocation9], 1024
        $region52: #{tpu_custom_call.1} parent=43 // pred_fallthru
          _
        %s254 = smul.u32 8, %s23
        %p255 = scmp.lt.s32.totalorder %s254, 15
        %s256 = scalar_select %p255, %s254, 15
        %s257 = smul.addr %s256, 2
        %s258 = smul.addr %s257, 8
        %s259 = scalar_lea.vmem %s0, %s258
        %p260 = pneg %p44
        %p261 = pneg %p41
        %p262 = pneg %p65
        %p263 = pneg %p62
        %p264 = pneg %p86
        %p265 = pneg %p83
        %p266 = pneg %p107
        %p267 = pneg %p104
        %p268 = pneg %p128
        %p269 = pneg %p125
        %p270 = pneg %p149
        %p271 = pneg %p146
        %p272 = pneg %p175
        %p273 = pneg %p172
        %s274 = sand.u32 %s162, 1
        %s275 = scalar_lea.sflag [#allocation7], %s274
        %s276 = sand.u32 %s162, 1
        %s277 = smul.addr %s276, 16
        %s278 = scalar_lea.vmem [#allocation10], %s277
        %s279 = smul.u32 8, %s23
        %p280 = scmp.lt.s32.totalorder %s279, 15
        %s281 = scalar_select %p280, %s279, 15
        %s282 = smul.addr %s281, 2
        %s283 = smul.addr %s282, 8
        %s284 = scalar_lea.vmem %s0, %s283
        %s285 = smul.u32 8, %s23
        %v286 = vld [vmem:[%s284] sm:$0xff]
        %v287 = vld [vmem:[%s284 + $0x8] sm:$0xff]
        %v288 = vld [vmem:[%s284 + $0x10] sm:$0xff]
        %v289 = vld [vmem:[%s284 + $0x18] sm:$0xff]
        %v290 = vld [vmem:[%s284 + $0x20] sm:$0xff]
        %v291 = vld [vmem:[%s284 + $0x28] sm:$0xff]
        %v292 = vld [vmem:[%s284 + $0x30] sm:$0xff]
        %v293 = vld [vmem:[%s284 + $0x38] sm:$0xff]
        %v294 = vld [vmem:[%s284 + $0x40] sm:$0xff]
        %v295 = vld [vmem:[%s284 + $0x48] sm:$0xff]
        %v296 = vld [vmem:[%s284 + $0x50] sm:$0xff]
        %v297 = vld [vmem:[%s284 + $0x58] sm:$0xff]
        %v298 = vld [vmem:[%s284 + $0x60] sm:$0xff]
        %v299 = vld [vmem:[%s284 + $0x68] sm:$0xff]
        %v300 = vld [vmem:[%s284 + $0x70] sm:$0xff]
        %v301 = vld [vmem:[%s284 + $0x78] sm:$0xff]
        %v302 = vld [vmem:[#allocation5] sm:$0xff]
        %v303 = vld [vmem:[#allocation5 + $0x8] sm:$0xff]
        %v304 = vld [vmem:[#allocation5 + $0x10] sm:$0xff]
        %v305 = vld [vmem:[#allocation5 + $0x18] sm:$0xff]
        %v306 = vld [vmem:[#allocation5 + $0x20] sm:$0xff]
        %v307 = vld [vmem:[#allocation5 + $0x28] sm:$0xff]
        %v308 = vld [vmem:[#allocation5 + $0x30] sm:$0xff]
        %v309 = vld [vmem:[#allocation5 + $0x38] sm:$0xff]
        %v310 = vld [vmem:[#allocation5 + $0x40] sm:$0xff]
        %v311 = vld [vmem:[#allocation5 + $0x48] sm:$0xff]
        %v312 = vld [vmem:[#allocation5 + $0x50] sm:$0xff]
        %v313 = vld [vmem:[#allocation5 + $0x58] sm:$0xff]
        %v314 = vld [vmem:[#allocation5 + $0x60] sm:$0xff]
        %v315 = vld [vmem:[#allocation5 + $0x68] sm:$0xff]
        %v316 = vld [vmem:[#allocation5 + $0x70] sm:$0xff]
        %v317 = vld [vmem:[#allocation5 + $0x78] sm:$0xff]
        %v318 = vld [vmem:[#allocation5 + $0x80] sm:$0xff]
        %v319 = vld [vmem:[#allocation5 + $0x88] sm:$0xff]
        %v320 = vld [vmem:[#allocation5 + $0x90] sm:$0xff]
        %v321 = vld [vmem:[#allocation5 + $0x98] sm:$0xff]
        %v322 = vld [vmem:[#allocation5 + $0xa0] sm:$0xff]
        %v323 = vld [vmem:[#allocation5 + $0xa8] sm:$0xff]
        %v324 = vld [vmem:[#allocation5 + $0xb0] sm:$0xff]
        %v325 = vld [vmem:[#allocation5 + $0xb8] sm:$0xff]
        %v326 = vld [vmem:[#allocation5 + $0xc0] sm:$0xff]
        %v327 = vld [vmem:[#allocation5 + $0xc8] sm:$0xff]
        %v328 = vld [vmem:[#allocation5 + $0xd0] sm:$0xff]
        %v329 = vld [vmem:[#allocation5 + $0xd8] sm:$0xff]
        %v330 = vld [vmem:[#allocation5 + $0xe0] sm:$0xff]
        %v331 = vld [vmem:[#allocation5 + $0xe8] sm:$0xff]
        %v332 = vld [vmem:[#allocation5 + $0xf0] sm:$0xff]
        %v333 = vld [vmem:[#allocation5 + $0xf8] sm:$0xff]
        %v334 = vld [vmem:[#allocation5 + $0x100] sm:$0xff]
        %v335 = vld [vmem:[#allocation5 + $0x108] sm:$0xff]
        %vm336 = vcmask 64512
        %v338 = vsel %vm336, %v287, 0
        %v341 = vsel %vm336, %v289, 0
        %v344 = vsel %vm336, %v291, 0
        %v347 = vsel %vm336, %v293, 0
        %v350 = vsel %vm336, %v295, 0
        %v353 = vsel %vm336, %v297, 0
        %v356 = vsel %vm336, %v299, 0
        %v359 = vsel %vm336, %v301, 0
        %361 = vmatprep.subr.mxu0 %v303
        %362 = vmatpush1.msra.mxu0 %v302
        %363 = vmatprep.subr.mxu0 %v305
        %364 = vmatpush1.msra.mxu0 %v304
        %365 = vmatprep.subr.mxu0 %v307
        %366 = vmatpush1.msra.mxu0 %v306
        %367 = vmatprep.subr.mxu0 %v309
        %368 = vmatpush1.msra.mxu0 %v308
        %369 = vmatprep.subr.mxu0 %v311
        %370 = vmatpush1.msra.mxu0 %v310
        %371 = vmatprep.subr.mxu0 %v313
        %372 = vmatpush1.msra.mxu0 %v312
        %373 = vmatprep.subr.mxu0 %v315
        %374 = vmatpush1.msra.mxu0 %v314
        %375 = vmatprep.subr.mxu0 %v317
        %376 = vmatpush1.msra.mxu0 %v316
        %377 = vmatprep.subr.mxu0 %v319
        %378 = vmatpush1.msra.mxu0 %v318
        %379 = vmatprep.subr.mxu0 %v321
        %380 = vmatpush1.msra.mxu0 %v320
        %381 = vmatprep.subr.mxu0 %v323
        %382 = vmatpush1.msra.mxu0 %v322
        %383 = vmatprep.subr.mxu0 %v325
        %384 = vmatpush1.msra.mxu0 %v324
        %385 = vmatprep.subr.mxu0 %v327
        %386 = vmatpush1.msra.mxu0 %v326
        %387 = vmatprep.subr.mxu0 %v329
        %388 = vmatpush1.msra.mxu0 %v328
        %389 = vmatprep.subr.mxu0 %v331
        %390 = vmatpush1.msra.mxu0 %v330
        %391 = vmatprep.subr.mxu0 %v333
        %392 = vmatpush1.msra.mxu0 %v332
        %393 = vmatprep.subr.mxu0 %v335
        %394 = vmatpush1.msra.mxu0 %v334
        %395 = vmatprep.subr.mxu0 0.0
        %396 = vmatpush1.msra.mxu0 0.0
        %397 = vmatprep.subr.mxu0 0.0
        %398 = vmatpush1.msra.mxu0 0.0
        %399 = vmatprep.subr.mxu0 0.0
        %400 = vmatpush1.msra.mxu0 0.0
        %401 = vmatprep.subr.mxu0 0.0
        %402 = vmatpush1.msra.mxu0 0.0
        %403 = vmatprep.subr.mxu0 0.0
        %404 = vmatpush1.msra.mxu0 0.0
        %405 = vmatprep.subr.mxu0 0.0
        %406 = vmatpush1.msra.mxu0 0.0
        %407 = vmatprep.subr.mxu0 0.0
        %408 = vmatpush1.msra.mxu0 0.0
        %409 = vmatprep.subr.mxu0 0.0
        %410 = vmatpush1.msra.mxu0 0.0
        %411 = vmatprep.subr.mxu0 0.0
        %412 = vmatpush1.msra.mxu0 0.0
        %413 = vmatprep.subr.mxu0 0.0
        %414 = vmatpush1.msra.mxu0 0.0
        %415 = vmatprep.subr.mxu0 0.0
        %416 = vmatpush1.msra.mxu0 0.0
        %417 = vmatprep.subr.mxu0 0.0
        %418 = vmatpush1.msra.mxu0 0.0
        %419 = vmatprep.subr.mxu0 0.0
        %420 = vmatpush1.msra.mxu0 0.0
        %421 = vmatprep.subr.mxu0 0.0
        %422 = vmatpush1.msra.mxu0 0.0
        %423 = vmatprep.subr.mxu0 0.0
        %424 = vmatpush1.msra.mxu0 0.0
        %425 = vmatprep.mubr.f32.mxu0 %v338
        %426 = vmatmul.mubr.f32.gmra.mrb[0].mxu0 %v286
        %v427 = vpop.f32.mrb[0].mxu0
        %v428 = vadd.f32 0.0, %v427
        %v429 = vpop.f32.mrb[0].mxu0
        %v430 = vadd.f32 0.0, %v429
        %431 = vmatprep.mubr.f32.mxu0 %v341
        %432 = vmatmul.mubr.f32.gmra.mrb[0].mxu0 %v288
        %v433 = vpop.f32.mrb[0].mxu0
        %v434 = vadd.f32 0.0, %v433
        %v435 = vpop.f32.mrb[0].mxu0
        %v436 = vadd.f32 0.0, %v435
        %437 = vmatprep.mubr.f32.mxu0 %v344
        %438 = vmatmul.mubr.f32.gmra.mrb[0].mxu0 %v290
        %v439 = vpop.f32.mrb[0].mxu0
        %v440 = vadd.f32 0.0, %v439
        %v441 = vpop.f32.mrb[0].mxu0
        %v442 = vadd.f32 0.0, %v441
        %443 = vmatprep.mubr.f32.mxu0 %v347
        %444 = vmatmul.mubr.f32.gmra.mrb[0].mxu0 %v292
        %v445 = vpop.f32.mrb[0].mxu0
        %v446 = vadd.f32 0.0, %v445
        %v447 = vpop.f32.mrb[0].mxu0
        %v448 = vadd.f32 0.0, %v447
        %449 = vmatprep.mubr.f32.mxu0 %v350
        %450 = vmatmul.mubr.f32.gmra.mrb[0].mxu0 %v294
        %v451 = vpop.f32.mrb[0].mxu0
        %v452 = vadd.f32 0.0, %v451
        %v453 = vpop.f32.mrb[0].mxu0
        %v454 = vadd.f32 0.0, %v453
        %455 = vmatprep.mubr.f32.mxu0 %v353
        %456 = vmatmul.mubr.f32.gmra.mrb[0].mxu0 %v296
        %v457 = vpop.f32.mrb[0].mxu0
        %v458 = vadd.f32 0.0, %v457
        %v459 = vpop.f32.mrb[0].mxu0
        %v460 = vadd.f32 0.0, %v459
        %461 = vmatprep.mubr.f32.mxu0 %v356
        %462 = vmatmul.mubr.f32.gmra.mrb[0].mxu0 %v298
        %v463 = vpop.f32.mrb[0].mxu0
        %v464 = vadd.f32 0.0, %v463
        %v465 = vpop.f32.mrb[0].mxu0
        %v466 = vadd.f32 0.0, %v465
        %467 = vmatprep.mubr.f32.mxu0 %v359
        %468 = vmatmul.mubr.f32.gmra.mrb[0].mxu0 %v300
        %v469 = vpop.f32.mrb[0].mxu0
        %v470 = vadd.f32 0.0, %v469
        %v471 = vpop.f32.mrb[0].mxu0
        %v472 = vadd.f32 0.0, %v471
        %473 = vdwg.mxu0
        %v474 = vmax.f32 %v428, 0.0
        %v475 = vmax.f32 %v430, 0.0
        %v476 = vmax.f32 %v434, 0.0
        %v477 = vmax.f32 %v436, 0.0
        %v478 = vmax.f32 %v440, 0.0
        %v479 = vmax.f32 %v442, 0.0
        %v480 = vmax.f32 %v446, 0.0
        %v481 = vmax.f32 %v448, 0.0
        %v482 = vmax.f32 %v452, 0.0
        %v483 = vmax.f32 %v454, 0.0
        %v484 = vmax.f32 %v458, 0.0
        %v485 = vmax.f32 %v460, 0.0
        %v486 = vmax.f32 %v464, 0.0
        %v487 = vmax.f32 %v466, 0.0
        %v488 = vmax.f32 %v470, 0.0
        %v489 = vmax.f32 %v472, 0.0
        %490 = vst [vmem:[#allocation2] sm:$0xff] %v474
        %vm491 = vcmask 818176
        %492 = vst.msk [vmem:[#allocation2 + $0x8] sm:$0xff] %vm491, %v475
        %493 = vst [vmem:[#allocation2 + $0x10] sm:$0xff] %v476
        %494 = vst.msk [vmem:[#allocation2 + $0x18] sm:$0xff] %vm491, %v477
        %495 = vst [vmem:[#allocation2 + $0x20] sm:$0xff] %v478
        %496 = vst.msk [vmem:[#allocation2 + $0x28] sm:$0xff] %vm491, %v479
        %497 = vst [vmem:[#allocation2 + $0x30] sm:$0xff] %v480
        %498 = vst.msk [vmem:[#allocation2 + $0x38] sm:$0xff] %vm491, %v481
        %499 = vst [vmem:[#allocation2 + $0x40] sm:$0xff] %v482
        %500 = vst.msk [vmem:[#allocation2 + $0x48] sm:$0xff] %vm491, %v483
        %501 = vst [vmem:[#allocation2 + $0x50] sm:$0xff] %v484
        %502 = vst.msk [vmem:[#allocation2 + $0x58] sm:$0xff] %vm491, %v485
        %503 = vst [vmem:[#allocation2 + $0x60] sm:$0xff] %v486
        %504 = vst.msk [vmem:[#allocation2 + $0x68] sm:$0xff] %vm491, %v487
        %505 = vst [vmem:[#allocation2 + $0x70] sm:$0xff] %v488
        %506 = vst.msk [vmem:[#allocation2 + $0x78] sm:$0xff] %vm491, %v489
        %v507 = vld [vmem:[%s2] sm:$0xff]
        %v508 = vld [vmem:[%s2 + $0x8] sm:$0xff]
        %v509 = vld [vmem:[%s2 + $0x10] sm:$0xff]
        %v510 = vld [vmem:[%s2 + $0x18] sm:$0xff]
        %v511 = vld [vmem:[#allocation2] sm:$0xff]
        %v512 = vld [vmem:[#allocation2 + $0x8] sm:$0xff]
        %v513 = vld [vmem:[#allocation2 + $0x10] sm:$0xff]
        %v514 = vld [vmem:[#allocation2 + $0x18] sm:$0xff]
        %v515 = vld [vmem:[#allocation2 + $0x20] sm:$0xff]
        %v516 = vld [vmem:[#allocation2 + $0x28] sm:$0xff]
        %v517 = vld [vmem:[#allocation2 + $0x30] sm:$0xff]
        %v518 = vld [vmem:[#allocation2 + $0x38] sm:$0xff]
        %v519 = vld [vmem:[#allocation2 + $0x40] sm:$0xff]
        %v520 = vld [vmem:[#allocation2 + $0x48] sm:$0xff]
        %v521 = vld [vmem:[#allocation2 + $0x50] sm:$0xff]
        %v522 = vld [vmem:[#allocation2 + $0x58] sm:$0xff]
        %v523 = vld [vmem:[#allocation2 + $0x60] sm:$0xff]
        %v524 = vld [vmem:[#allocation2 + $0x68] sm:$0xff]
        %v525 = vld [vmem:[#allocation2 + $0x70] sm:$0xff]
        %v526 = vld [vmem:[#allocation2 + $0x78] sm:$0xff]
        %vm527 = vcmask 523264
        %v529 = vsel %vm527, %v507, 0
        %v532 = vsel %vm527, %v508, 0
        %v535 = vsel %vm527, %v509, 0
        %v538 = vsel %vm527, %v510, 0
        %540 = vmatprep.subr.mxu0 %v512
        %541 = vmatpush1.msra.mxu0 %v511
        %542 = vmatprep.subr.mxu0 %v514
        %543 = vmatpush1.msra.mxu0 %v513
        %544 = vmatprep.subr.mxu0 %v516
        %545 = vmatpush1.msra.mxu0 %v515
        %546 = vmatprep.subr.mxu0 %v518
        %547 = vmatpush1.msra.mxu0 %v517
        %548 = vmatprep.subr.mxu0 %v520
        %549 = vmatpush1.msra.mxu0 %v519
        %550 = vmatprep.subr.mxu0 %v522
        %551 = vmatpush1.msra.mxu0 %v521
        %552 = vmatprep.subr.mxu0 %v524
        %553 = vmatpush1.msra.mxu0 %v523
        %554 = vmatprep.subr.mxu0 %v526
        %555 = vmatpush1.msra.mxu0 %v525
        %556 = vmatprep.subr.mxu0 0.0
        %557 = vmatpush1.msra.mxu0 0.0
        %558 = vmatprep.subr.mxu0 0.0
        %559 = vmatpush1.msra.mxu0 0.0
        %560 = vmatprep.subr.mxu0 0.0
        %561 = vmatpush1.msra.mxu0 0.0
        %562 = vmatprep.subr.mxu0 0.0
        %563 = vmatpush1.msra.mxu0 0.0
        %564 = vmatprep.subr.mxu0 0.0
        %565 = vmatpush1.msra.mxu0 0.0
        %566 = vmatprep.subr.mxu0 0.0
        %567 = vmatpush1.msra.mxu0 0.0
        %568 = vmatprep.subr.mxu0 0.0
        %569 = vmatpush1.msra.mxu0 0.0
        %570 = vmatprep.subr.mxu0 0.0
        %571 = vmatpush1.msra.mxu0 0.0
        %572 = vmatprep.subr.mxu0 0.0
        %573 = vmatpush1.msra.mxu0 0.0
        %574 = vmatprep.subr.mxu0 0.0
        %575 = vmatpush1.msra.mxu0 0.0
        %576 = vmatprep.subr.mxu0 0.0
        %577 = vmatpush1.msra.mxu0 0.0
        %578 = vmatprep.subr.mxu0 0.0
        %579 = vmatpush1.msra.mxu0 0.0
        %580 = vmatprep.subr.mxu0 0.0
        %581 = vmatpush1.msra.mxu0 0.0
        %582 = vmatprep.subr.mxu0 0.0
        %583 = vmatpush1.msra.mxu0 0.0
        %584 = vmatprep.subr.mxu0 0.0
        %585 = vmatpush1.msra.mxu0 0.0
        %586 = vmatprep.subr.mxu0 0.0
        %587 = vmatpush1.msra.mxu0 0.0
        %588 = vmatprep.subr.mxu0 0.0
        %589 = vmatpush1.msra.mxu0 0.0
        %590 = vmatprep.subr.mxu0 0.0
        %591 = vmatpush1.msra.mxu0 0.0
        %592 = vmatprep.subr.mxu0 0.0
        %593 = vmatpush1.msra.mxu0 0.0
        %594 = vmatprep.subr.mxu0 0.0
        %595 = vmatpush1.msra.mxu0 0.0
        %596 = vmatprep.subr.mxu0 0.0
        %597 = vmatpush1.msra.mxu0 0.0
        %598 = vmatprep.subr.mxu0 0.0
        %599 = vmatpush1.msra.mxu0 0.0
        %600 = vmatprep.subr.mxu0 0.0
        %601 = vmatpush1.msra.mxu0 0.0
        %602 = vmatprep.subr.mxu0 0.0
        %603 = vmatpush1.msra.mxu0 0.0
        %604 = vmatprep.mubr.f32.mxu0 0.0
        %605 = vmatmul.mubr.f32.gmra.mrb[0].mxu0 %v529
        %v606 = vpop.f32.mrb[0].mxu0
        %v607 = vadd.f32 0.0, %v606
        %v608 = vpop.f32.mrb[0].mxu0
        %v609 = vadd.f32 0.0, %v608
        %610 = vmatprep.mubr.f32.mxu0 0.0
        %611 = vmatmul.mubr.f32.gmra.mrb[0].mxu0 %v532
        %v612 = vpop.f32.mrb[0].mxu0
        %v613 = vadd.f32 0.0, %v612
        %v614 = vpop.f32.mrb[0].mxu0
        %v615 = vadd.f32 0.0, %v614
        %616 = vmatprep.mubr.f32.mxu0 0.0
        %617 = vmatmul.mubr.f32.gmra.mrb[0].mxu0 %v535
        %v618 = vpop.f32.mrb[0].mxu0
        %v619 = vadd.f32 0.0, %v618
        %v620 = vpop.f32.mrb[0].mxu0
        %v621 = vadd.f32 0.0, %v620
        %622 = vmatprep.mubr.f32.mxu0 0.0
        %623 = vmatmul.mubr.f32.gmra.mrb[0].mxu0 %v538
        %v624 = vpop.f32.mrb[0].mxu0
        %v625 = vadd.f32 0.0, %v624
        %v626 = vpop.f32.mrb[0].mxu0
        %v627 = vadd.f32 0.0, %v626
        %628 = vdwg.mxu0
        %629 = vst [vmem:[#allocation3] sm:$0xff] %v607
        %vm630 = vcmask 572416
        %631 = vst.msk [vmem:[#allocation3 + $0x8] sm:$0xff] %vm630, %v609
        %632 = vst [vmem:[#allocation3 + $0x10] sm:$0xff] %v613
        %633 = vst.msk [vmem:[#allocation3 + $0x18] sm:$0xff] %vm630, %v615
        %634 = vst [vmem:[#allocation3 + $0x20] sm:$0xff] %v619
        %635 = vst.msk [vmem:[#allocation3 + $0x28] sm:$0xff] %vm630, %v621
        %636 = vst [vmem:[#allocation3 + $0x30] sm:$0xff] %v625
        %637 = vst.msk [vmem:[#allocation3 + $0x38] sm:$0xff] %vm630, %v627
        %s638 = scalar_lea.vmem %s2, 32
        %v639 = vld [vmem:[%s638] sm:$0xff]
        %v640 = vld [vmem:[%s638 + $0x8] sm:$0xff]
        %v641 = vld [vmem:[%s638 + $0x10] sm:$0xff]
        %v642 = vld [vmem:[%s638 + $0x18] sm:$0xff]
        %v643 = vld [vmem:[#allocation2] sm:$0xff]
        %v644 = vld [vmem:[#allocation2 + $0x8] sm:$0xff]
        %v645 = vld [vmem:[#allocation2 + $0x10] sm:$0xff]
        %v646 = vld [vmem:[#allocation2 + $0x18] sm:$0xff]
        %v647 = vld [vmem:[#allocation2 + $0x20] sm:$0xff]
        %v648 = vld [vmem:[#allocation2 + $0x28] sm:$0xff]
        %v649 = vld [vmem:[#allocation2 + $0x30] sm:$0xff]
        %v650 = vld [vmem:[#allocation2 + $0x38] sm:$0xff]
        %v651 = vld [vmem:[#allocation2 + $0x40] sm:$0xff]
        %v652 = vld [vmem:[#allocation2 + $0x48] sm:$0xff]
        %v653 = vld [vmem:[#allocation2 + $0x50] sm:$0xff]
        %v654 = vld [vmem:[#allocation2 + $0x58] sm:$0xff]
        %v655 = vld [vmem:[#allocation2 + $0x60] sm:$0xff]
        %v656 = vld [vmem:[#allocation2 + $0x68] sm:$0xff]
        %v657 = vld [vmem:[#allocation2 + $0x70] sm:$0xff]
        %v658 = vld [vmem:[#allocation2 + $0x78] sm:$0xff]
        %675 = vrot.lane.b32.xlu0 %v643, 127
        %v676 = vpop.permute.xlu0 %675
        %677 = vrot.lane.b32.xlu0 %v644, 127
        %v678 = vpop.permute.xlu0 %677
        %679 = vrot.lane.b32.xlu0 %v645, 127
        %v680 = vpop.permute.xlu0 %679
        %681 = vrot.lane.b32.xlu0 %v646, 127
        %v682 = vpop.permute.xlu0 %681
        %683 = vrot.lane.b32.xlu0 %v647, 127
        %v684 = vpop.permute.xlu0 %683
        %685 = vrot.lane.b32.xlu0 %v648, 127
        %v686 = vpop.permute.xlu0 %685
        %687 = vrot.lane.b32.xlu0 %v649, 127
        %v688 = vpop.permute.xlu0 %687
        %689 = vrot.lane.b32.xlu0 %v650, 127
        %v690 = vpop.permute.xlu0 %689
        %691 = vrot.lane.b32.xlu0 %v651, 127
        %v692 = vpop.permute.xlu0 %691
        %693 = vrot.lane.b32.xlu0 %v652, 127
        %v694 = vpop.permute.xlu0 %693
        %695 = vrot.lane.b32.xlu0 %v653, 127
        %v696 = vpop.permute.xlu0 %695
        %697 = vrot.lane.b32.xlu0 %v654, 127
        %v698 = vpop.permute.xlu0 %697
        %699 = vrot.lane.b32.xlu0 %v655, 127
        %v700 = vpop.permute.xlu0 %699
        %701 = vrot.lane.b32.xlu0 %v656, 127
        %v702 = vpop.permute.xlu0 %701
        %703 = vrot.lane.b32.xlu0 %v657, 127
        %v704 = vpop.permute.xlu0 %703
        %705 = vrot.lane.b32.xlu0 %v658, 127
        %v706 = vpop.permute.xlu0 %705
        %vm707 = vcmask 1039360
        %v708 = vsel %vm707, %v676, %v678
        %v709 = vsel %vm707, %v680, %v682
        %v710 = vsel %vm707, %v684, %v686
        %v711 = vsel %vm707, %v688, %v690
        %v712 = vsel %vm707, %v692, %v694
        %v713 = vsel %vm707, %v696, %v698
        %v714 = vsel %vm707, %v700, %v702
        %v715 = vsel %vm707, %v704, %v706
        %v733 = vsel %vm527, %v639, 0
        %v736 = vsel %vm527, %v640, 0
        %v739 = vsel %vm527, %v641, 0
        %v742 = vsel %vm527, %v642, 0
        %744 = vmatprep.subr.mxu0 %v678
        %745 = vmatpush1.msra.mxu0 %v708
        %746 = vmatprep.subr.mxu0 %v682
        %747 = vmatpush1.msra.mxu0 %v709
        %748 = vmatprep.subr.mxu0 %v686
        %749 = vmatpush1.msra.mxu0 %v710
        %750 = vmatprep.subr.mxu0 %v690
        %751 = vmatpush1.msra.mxu0 %v711
        %752 = vmatprep.subr.mxu0 %v694
        %753 = vmatpush1.msra.mxu0 %v712
        %754 = vmatprep.subr.mxu0 %v698
        %755 = vmatpush1.msra.mxu0 %v713
        %756 = vmatprep.subr.mxu0 %v702
        %757 = vmatpush1.msra.mxu0 %v714
        %758 = vmatprep.subr.mxu0 %v706
        %759 = vmatpush1.msra.mxu0 %v715
        %760 = vmatprep.subr.mxu0 0.0
        %761 = vmatpush1.msra.mxu0 0.0
        %762 = vmatprep.subr.mxu0 0.0
        %763 = vmatpush1.msra.mxu0 0.0
        %764 = vmatprep.subr.mxu0 0.0
        %765 = vmatpush1.msra.mxu0 0.0
        %766 = vmatprep.subr.mxu0 0.0
        %767 = vmatpush1.msra.mxu0 0.0
        %768 = vmatprep.subr.mxu0 0.0
        %769 = vmatpush1.msra.mxu0 0.0
        %770 = vmatprep.subr.mxu0 0.0
        %771 = vmatpush1.msra.mxu0 0.0
        %772 = vmatprep.subr.mxu0 0.0
        %773 = vmatpush1.msra.mxu0 0.0
        %774 = vmatprep.subr.mxu0 0.0
        %775 = vmatpush1.msra.mxu0 0.0
        %776 = vmatprep.subr.mxu0 0.0
        %777 = vmatpush1.msra.mxu0 0.0
        %778 = vmatprep.subr.mxu0 0.0
        %779 = vmatpush1.msra.mxu0 0.0
        %780 = vmatprep.subr.mxu0 0.0
        %781 = vmatpush1.msra.mxu0 0.0
        %782 = vmatprep.subr.mxu0 0.0
        %783 = vmatpush1.msra.mxu0 0.0
        %784 = vmatprep.subr.mxu0 0.0
        %785 = vmatpush1.msra.mxu0 0.0
        %786 = vmatprep.subr.mxu0 0.0
        %787 = vmatpush1.msra.mxu0 0.0
        %788 = vmatprep.subr.mxu0 0.0
        %789 = vmatpush1.msra.mxu0 0.0
        %790 = vmatprep.subr.mxu0 0.0
        %791 = vmatpush1.msra.mxu0 0.0
        %792 = vmatprep.subr.mxu0 0.0
        %793 = vmatpush1.msra.mxu0 0.0
        %794 = vmatprep.subr.mxu0 0.0
        %795 = vmatpush1.msra.mxu0 0.0
        %796 = vmatprep.subr.mxu0 0.0
        %797 = vmatpush1.msra.mxu0 0.0
        %798 = vmatprep.subr.mxu0 0.0
        %799 = vmatpush1.msra.mxu0 0.0
        %800 = vmatprep.subr.mxu0 0.0
        %801 = vmatpush1.msra.mxu0 0.0
        %802 = vmatprep.subr.mxu0 0.0
        %803 = vmatpush1.msra.mxu0 0.0
        %804 = vmatprep.subr.mxu0 0.0
        %805 = vmatpush1.msra.mxu0 0.0
        %806 = vmatprep.subr.mxu0 0.0
        %807 = vmatpush1.msra.mxu0 0.0
        %808 = vmatprep.mubr.f32.mxu0 0.0
        %809 = vmatmul.mubr.f32.gmra.mrb[0].mxu0 %v733
        %v810 = vpop.f32.mrb[0].mxu0
        %v811 = vadd.f32 0.0, %v810
        %v812 = vpop.f32.mrb[0].mxu0
        %v813 = vadd.f32 0.0, %v812
        %814 = vmatprep.mubr.f32.mxu0 0.0
        %815 = vmatmul.mubr.f32.gmra.mrb[0].mxu0 %v736
        %v816 = vpop.f32.mrb[0].mxu0
        %v817 = vadd.f32 0.0, %v816
        %v818 = vpop.f32.mrb[0].mxu0
        %v819 = vadd.f32 0.0, %v818
        %820 = vmatprep.mubr.f32.mxu0 0.0
        %821 = vmatmul.mubr.f32.gmra.mrb[0].mxu0 %v739
        %v822 = vpop.f32.mrb[0].mxu0
        %v823 = vadd.f32 0.0, %v822
        %v824 = vpop.f32.mrb[0].mxu0
        %v825 = vadd.f32 0.0, %v824
        %826 = vmatprep.mubr.f32.mxu0 0.0
        %827 = vmatmul.mubr.f32.gmra.mrb[0].mxu0 %v742
        %v828 = vpop.f32.mrb[0].mxu0
        %v829 = vadd.f32 0.0, %v828
        %v830 = vpop.f32.mrb[0].mxu0
        %v831 = vadd.f32 0.0, %v830
        %832 = vdwg.mxu0
        %v833 = vld [vmem:[#allocation3] sm:$0xff]
        %v834 = vld [vmem:[#allocation3 + $0x8] sm:$0xff]
        %v835 = vld [vmem:[#allocation3 + $0x10] sm:$0xff]
        %v836 = vld [vmem:[#allocation3 + $0x18] sm:$0xff]
        %v837 = vld [vmem:[#allocation3 + $0x20] sm:$0xff]
        %v838 = vld [vmem:[#allocation3 + $0x28] sm:$0xff]
        %v839 = vld [vmem:[#allocation3 + $0x30] sm:$0xff]
        %v840 = vld [vmem:[#allocation3 + $0x38] sm:$0xff]
        %v841 = vadd.f32 %v833, %v811
        %v842 = vadd.f32 %v834, %v813
        %v843 = vadd.f32 %v835, %v817
        %v844 = vadd.f32 %v836, %v819
        %v845 = vadd.f32 %v837, %v823
        %v846 = vadd.f32 %v838, %v825
        %v847 = vadd.f32 %v839, %v829
        %v848 = vadd.f32 %v840, %v831
        %849 = vst [vmem:[#allocation3] sm:$0xff] %v841
        %850 = vst.msk [vmem:[#allocation3 + $0x8] sm:$0xff] %vm630, %v842
        %851 = vst [vmem:[#allocation3 + $0x10] sm:$0xff] %v843
        %852 = vst.msk [vmem:[#allocation3 + $0x18] sm:$0xff] %vm630, %v844
        %853 = vst [vmem:[#allocation3 + $0x20] sm:$0xff] %v845
        %854 = vst.msk [vmem:[#allocation3 + $0x28] sm:$0xff] %vm630, %v846
        %855 = vst [vmem:[#allocation3 + $0x30] sm:$0xff] %v847
        %856 = vst.msk [vmem:[#allocation3 + $0x38] sm:$0xff] %vm630, %v848
        %s857 = scalar_lea.vmem %s2, 64
        %v858 = vld [vmem:[%s857] sm:$0xff]
        %v859 = vld [vmem:[%s857 + $0x8] sm:$0xff]
        %v860 = vld [vmem:[%s857 + $0x10] sm:$0xff]
        %v861 = vld [vmem:[%s857 + $0x18] sm:$0xff]
        %v862 = vld [vmem:[#allocation2] sm:$0xff]
        %v863 = vld [vmem:[#allocation2 + $0x8] sm:$0xff]
        %v864 = vld [vmem:[#allocation2 + $0x10] sm:$0xff]
        %v865 = vld [vmem:[#allocation2 + $0x18] sm:$0xff]
        %v866 = vld [vmem:[#allocation2 + $0x20] sm:$0xff]
        %v867 = vld [vmem:[#allocation2 + $0x28] sm:$0xff]
        %v868 = vld [vmem:[#allocation2 + $0x30] sm:$0xff]
        %v869 = vld [vmem:[#allocation2 + $0x38] sm:$0xff]
        %v870 = vld [vmem:[#allocation2 + $0x40] sm:$0xff]
        %v871 = vld [vmem:[#allocation2 + $0x48] sm:$0xff]
        %v872 = vld [vmem:[#allocation2 + $0x50] sm:$0xff]
        %v873 = vld [vmem:[#allocation2 + $0x58] sm:$0xff]
        %v874 = vld [vmem:[#allocation2 + $0x60] sm:$0xff]
        %v875 = vld [vmem:[#allocation2 + $0x68] sm:$0xff]
        %v876 = vld [vmem:[#allocation2 + $0x70] sm:$0xff]
        %v877 = vld [vmem:[#allocation2 + $0x78] sm:$0xff]
        %894 = vrot.lane.b32.xlu0 %v862, 126
        %v895 = vpop.permute.xlu0 %894
        %896 = vrot.lane.b32.xlu0 %v863, 126
        %v897 = vpop.permute.xlu0 %896
        %898 = vrot.lane.b32.xlu0 %v864, 126
        %v899 = vpop.permute.xlu0 %898
        %900 = vrot.lane.b32.xlu0 %v865, 126
        %v901 = vpop.permute.xlu0 %900
        %902 = vrot.lane.b32.xlu0 %v866, 126
        %v903 = vpop.permute.xlu0 %902
        %904 = vrot.lane.b32.xlu0 %v867, 126
        %v905 = vpop.permute.xlu0 %904
        %906 = vrot.lane.b32.xlu0 %v868, 126
        %v907 = vpop.permute.xlu0 %906
        %908 = vrot.lane.b32.xlu0 %v869, 126
        %v909 = vpop.permute.xlu0 %908
        %910 = vrot.lane.b32.xlu0 %v870, 126
        %v911 = vpop.permute.xlu0 %910
        %912 = vrot.lane.b32.xlu0 %v871, 126
        %v913 = vpop.permute.xlu0 %912
        %914 = vrot.lane.b32.xlu0 %v872, 126
        %v915 = vpop.permute.xlu0 %914
        %916 = vrot.lane.b32.xlu0 %v873, 126
        %v917 = vpop.permute.xlu0 %916
        %918 = vrot.lane.b32.xlu0 %v874, 126
        %v919 = vpop.permute.xlu0 %918
        %920 = vrot.lane.b32.xlu0 %v875, 126
        %v921 = vpop.permute.xlu0 %920
        %922 = vrot.lane.b32.xlu0 %v876, 126
        %v923 = vpop.permute.xlu0 %922
        %924 = vrot.lane.b32.xlu0 %v877, 126
        %v925 = vpop.permute.xlu0 %924
        %vm926 = vcmask 1031168
        %v927 = vsel %vm926, %v895, %v897
        %v928 = vsel %vm926, %v899, %v901
        %v929 = vsel %vm926, %v903, %v905
        %v930 = vsel %vm926, %v907, %v909
        %v931 = vsel %vm926, %v911, %v913
        %v932 = vsel %vm926, %v915, %v917
        %v933 = vsel %vm926, %v919, %v921
        %v934 = vsel %vm926, %v923, %v925
        %v952 = vsel %vm527, %v858, 0
        %v955 = vsel %vm527, %v859, 0
        %v958 = vsel %vm527, %v860, 0
        %v961 = vsel %vm527, %v861, 0
        %963 = vmatprep.subr.mxu0 %v897
        %964 = vmatpush1.msra.mxu0 %v927
        %965 = vmatprep.subr.mxu0 %v901
        %966 = vmatpush1.msra.mxu0 %v928
        %967 = vmatprep.subr.mxu0 %v905
        %968 = vmatpush1.msra.mxu0 %v929
        %969 = vmatprep.subr.mxu0 %v909
        %970 = vmatpush1.msra.mxu0 %v930
        %971 = vmatprep.subr.mxu0 %v913
        %972 = vmatpush1.msra.mxu0 %v931
        %973 = vmatprep.subr.mxu0 %v917
        %974 = vmatpush1.msra.mxu0 %v932
        %975 = vmatprep.subr.mxu0 %v921
        %976 = vmatpush1.msra.mxu0 %v933
        %977 = vmatprep.subr.mxu0 %v925
        %978 = vmatpush1.msra.mxu0 %v934
        %979 = vmatprep.subr.mxu0 0.0
        %980 = vmatpush1.msra.mxu0 0.0
        %981 = vmatprep.subr.mxu0 0.0
        %982 = vmatpush1.msra.mxu0 0.0
        %983 = vmatprep.subr.mxu0 0.0
        %984 = vmatpush1.msra.mxu0 0.0
        %985 = vmatprep.subr.mxu0 0.0
        %986 = vmatpush1.msra.mxu0 0.0
        %987 = vmatprep.subr.mxu0 0.0
        %988 = vmatpush1.msra.mxu0 0.0
        %989 = vmatprep.subr.mxu0 0.0
        %990 = vmatpush1.msra.mxu0 0.0
        %991 = vmatprep.subr.mxu0 0.0
        %992 = vmatpush1.msra.mxu0 0.0
        %993 = vmatprep.subr.mxu0 0.0
        %994 = vmatpush1.msra.mxu0 0.0
        %995 = vmatprep.subr.mxu0 0.0
        %996 = vmatpush1.msra.mxu0 0.0
        %997 = vmatprep.subr.mxu0 0.0
        %998 = vmatpush1.msra.mxu0 0.0
        %999 = vmatprep.subr.mxu0 0.0
        %1000 = vmatpush1.msra.mxu0 0.0
        %1001 = vmatprep.subr.mxu0 0.0
        %1002 = vmatpush1.msra.mxu0 0.0
        %1003 = vmatprep.subr.mxu0 0.0
        %1004 = vmatpush1.msra.mxu0 0.0
        %1005 = vmatprep.subr.mxu0 0.0
        %1006 = vmatpush1.msra.mxu0 0.0
        %1007 = vmatprep.subr.mxu0 0.0
        %1008 = vmatpush1.msra.mxu0 0.0
        %1009 = vmatprep.subr.mxu0 0.0
        %1010 = vmatpush1.msra.mxu0 0.0
        %1011 = vmatprep.subr.mxu0 0.0
        %1012 = vmatpush1.msra.mxu0 0.0
        %1013 = vmatprep.subr.mxu0 0.0
        %1014 = vmatpush1.msra.mxu0 0.0
        %1015 = vmatprep.subr.mxu0 0.0
        %1016 = vmatpush1.msra.mxu0 0.0
        %1017 = vmatprep.subr.mxu0 0.0
        %1018 = vmatpush1.msra.mxu0 0.0
        %1019 = vmatprep.subr.mxu0 0.0
        %1020 = vmatpush1.msra.mxu0 0.0
        %1021 = vmatprep.subr.mxu0 0.0
        %1022 = vmatpush1.msra.mxu0 0.0
        %1023 = vmatprep.subr.mxu0 0.0
        %1024 = vmatpush1.msra.mxu0 0.0
        %1025 = vmatprep.subr.mxu0 0.0
        %1026 = vmatpush1.msra.mxu0 0.0
        %1027 = vmatprep.mubr.f32.mxu0 0.0
        %1028 = vmatmul.mubr.f32.gmra.mrb[0].mxu0 %v952
        %v1029 = vpop.f32.mrb[0].mxu0
        %v1030 = vadd.f32 0.0, %v1029
        %v1031 = vpop.f32.mrb[0].mxu0
        %v1032 = vadd.f32 0.0, %v1031
        %1033 = vmatprep.mubr.f32.mxu0 0.0
        %1034 = vmatmul.mubr.f32.gmra.mrb[0].mxu0 %v955
        %v1035 = vpop.f32.mrb[0].mxu0
        %v1036 = vadd.f32 0.0, %v1035
        %v1037 = vpop.f32.mrb[0].mxu0
        %v1038 = vadd.f32 0.0, %v1037
        %1039 = vmatprep.mubr.f32.mxu0 0.0
        %1040 = vmatmul.mubr.f32.gmra.mrb[0].mxu0 %v958
        %v1041 = vpop.f32.mrb[0].mxu0
        %v1042 = vadd.f32 0.0, %v1041
        %v1043 = vpop.f32.mrb[0].mxu0
        %v1044 = vadd.f32 0.0, %v1043
        %1045 = vmatprep.mubr.f32.mxu0 0.0
        %1046 = vmatmul.mubr.f32.gmra.mrb[0].mxu0 %v961
        %v1047 = vpop.f32.mrb[0].mxu0
        %v1048 = vadd.f32 0.0, %v1047
        %v1049 = vpop.f32.mrb[0].mxu0
        %v1050 = vadd.f32 0.0, %v1049
        %1051 = vdwg.mxu0
        %v1052 = vld [vmem:[#allocation3] sm:$0xff]
        %v1053 = vld [vmem:[#allocation3 + $0x8] sm:$0xff]
        %v1054 = vld [vmem:[#allocation3 + $0x10] sm:$0xff]
        %v1055 = vld [vmem:[#allocation3 + $0x18] sm:$0xff]
        %v1056 = vld [vmem:[#allocation3 + $0x20] sm:$0xff]
        %v1057 = vld [vmem:[#allocation3 + $0x28] sm:$0xff]
        %v1058 = vld [vmem:[#allocation3 + $0x30] sm:$0xff]
        %v1059 = vld [vmem:[#allocation3 + $0x38] sm:$0xff]
        %v1060 = vadd.f32 %v1052, %v1030
        %v1061 = vadd.f32 %v1053, %v1032
        %v1062 = vadd.f32 %v1054, %v1036
        %v1063 = vadd.f32 %v1055, %v1038
        %v1064 = vadd.f32 %v1056, %v1042
        %v1065 = vadd.f32 %v1057, %v1044
        %v1066 = vadd.f32 %v1058, %v1048
        %v1067 = vadd.f32 %v1059, %v1050
        %1068 = vst [vmem:[#allocation3] sm:$0xff] %v1060
        %1069 = vst.msk [vmem:[#allocation3 + $0x8] sm:$0xff] %vm630, %v1061
        %1070 = vst [vmem:[#allocation3 + $0x10] sm:$0xff] %v1062
        %1071 = vst.msk [vmem:[#allocation3 + $0x18] sm:$0xff] %vm630, %v1063
        %1072 = vst [vmem:[#allocation3 + $0x20] sm:$0xff] %v1064
        %1073 = vst.msk [vmem:[#allocation3 + $0x28] sm:$0xff] %vm630, %v1065
        %1074 = vst [vmem:[#allocation3 + $0x30] sm:$0xff] %v1066
        %1075 = vst.msk [vmem:[#allocation3 + $0x38] sm:$0xff] %vm630, %v1067
        %s1076 = scalar_lea.vmem %s2, 96
        %v1077 = vld [vmem:[%s1076] sm:$0xff]
        %v1078 = vld [vmem:[%s1076 + $0x8] sm:$0xff]
        %v1079 = vld [vmem:[%s1076 + $0x10] sm:$0xff]
        %v1080 = vld [vmem:[%s1076 + $0x18] sm:$0xff]
        %v1081 = vld [vmem:[#allocation2] sm:$0xff]
        %v1082 = vld [vmem:[#allocation2 + $0x8] sm:$0xff]
        %v1083 = vld [vmem:[#allocation2 + $0x10] sm:$0xff]
        %v1084 = vld [vmem:[#allocation2 + $0x18] sm:$0xff]
        %v1085 = vld [vmem:[#allocation2 + $0x20] sm:$0xff]
        %v1086 = vld [vmem:[#allocation2 + $0x28] sm:$0xff]
        %v1087 = vld [vmem:[#allocation2 + $0x30] sm:$0xff]
        %v1088 = vld [vmem:[#allocation2 + $0x38] sm:$0xff]
        %v1089 = vld [vmem:[#allocation2 + $0x40] sm:$0xff]
        %v1090 = vld [vmem:[#allocation2 + $0x48] sm:$0xff]
        %v1091 = vld [vmem:[#allocation2 + $0x50] sm:$0xff]
        %v1092 = vld [vmem:[#allocation2 + $0x58] sm:$0xff]
        %v1093 = vld [vmem:[#allocation2 + $0x60] sm:$0xff]
        %v1094 = vld [vmem:[#allocation2 + $0x68] sm:$0xff]
        %v1095 = vld [vmem:[#allocation2 + $0x70] sm:$0xff]
        %v1096 = vld [vmem:[#allocation2 + $0x78] sm:$0xff]
        %1113 = vrot.lane.b32.xlu0 %v1081, 114
        %v1114 = vpop.permute.xlu0 %1113
        %1115 = vrot.lane.b32.xlu0 %v1082, 114
        %v1116 = vpop.permute.xlu0 %1115
        %1117 = vrot.lane.b32.xlu0 %v1083, 114
        %v1118 = vpop.permute.xlu0 %1117
        %1119 = vrot.lane.b32.xlu0 %v1084, 114
        %v1120 = vpop.permute.xlu0 %1119
        %1121 = vrot.lane.b32.xlu0 %v1085, 114
        %v1122 = vpop.permute.xlu0 %1121
        %1123 = vrot.lane.b32.xlu0 %v1086, 114
        %v1124 = vpop.permute.xlu0 %1123
        %1125 = vrot.lane.b32.xlu0 %v1087, 114
        %v1126 = vpop.permute.xlu0 %1125
        %1127 = vrot.lane.b32.xlu0 %v1088, 114
        %v1128 = vpop.permute.xlu0 %1127
        %1129 = vrot.lane.b32.xlu0 %v1089, 114
        %v1130 = vpop.permute.xlu0 %1129
        %1131 = vrot.lane.b32.xlu0 %v1090, 114
        %v1132 = vpop.permute.xlu0 %1131
        %1133 = vrot.lane.b32.xlu0 %v1091, 114
        %v1134 = vpop.permute.xlu0 %1133
        %1135 = vrot.lane.b32.xlu0 %v1092, 114
        %v1136 = vpop.permute.xlu0 %1135
        %1137 = vrot.lane.b32.xlu0 %v1093, 114
        %v1138 = vpop.permute.xlu0 %1137
        %1139 = vrot.lane.b32.xlu0 %v1094, 114
        %v1140 = vpop.permute.xlu0 %1139
        %1141 = vrot.lane.b32.xlu0 %v1095, 114
        %v1142 = vpop.permute.xlu0 %1141
        %1143 = vrot.lane.b32.xlu0 %v1096, 114
        %v1144 = vpop.permute.xlu0 %1143
        %vm1145 = vcmask 932864
        %v1146 = vsel %vm1145, %v1114, %v1116
        %v1147 = vsel %vm1145, %v1118, %v1120
        %v1148 = vsel %vm1145, %v1122, %v1124
        %v1149 = vsel %vm1145, %v1126, %v1128
        %v1150 = vsel %vm1145, %v1130, %v1132
        %v1151 = vsel %vm1145, %v1134, %v1136
        %v1152 = vsel %vm1145, %v1138, %v1140
        %v1153 = vsel %vm1145, %v1142, %v1144
        %v1171 = vsel %vm527, %v1077, 0
        %v1174 = vsel %vm527, %v1078, 0
        %v1177 = vsel %vm527, %v1079, 0
        %v1180 = vsel %vm527, %v1080, 0
        %1182 = vmatprep.subr.mxu0 %v1116
        %1183 = vmatpush1.msra.mxu0 %v1146
        %1184 = vmatprep.subr.mxu0 %v1120
        %1185 = vmatpush1.msra.mxu0 %v1147
        %1186 = vmatprep.subr.mxu0 %v1124
        %1187 = vmatpush1.msra.mxu0 %v1148
        %1188 = vmatprep.subr.mxu0 %v1128
        %1189 = vmatpush1.msra.mxu0 %v1149
        %1190 = vmatprep.subr.mxu0 %v1132
        %1191 = vmatpush1.msra.mxu0 %v1150
        %1192 = vmatprep.subr.mxu0 %v1136
        %1193 = vmatpush1.msra.mxu0 %v1151
        %1194 = vmatprep.subr.mxu0 %v1140
        %1195 = vmatpush1.msra.mxu0 %v1152
        %1196 = vmatprep.subr.mxu0 %v1144
        %1197 = vmatpush1.msra.mxu0 %v1153
        %1198 = vmatprep.subr.mxu0 0.0
        %1199 = vmatpush1.msra.mxu0 0.0
        %1200 = vmatprep.subr.mxu0 0.0
        %1201 = vmatpush1.msra.mxu0 0.0
        %1202 = vmatprep.subr.mxu0 0.0
        %1203 = vmatpush1.msra.mxu0 0.0
        %1204 = vmatprep.subr.mxu0 0.0
        %1205 = vmatpush1.msra.mxu0 0.0
        %1206 = vmatprep.subr.mxu0 0.0
        %1207 = vmatpush1.msra.mxu0 0.0
        %1208 = vmatprep.subr.mxu0 0.0
        %1209 = vmatpush1.msra.mxu0 0.0
        %1210 = vmatprep.subr.mxu0 0.0
        %1211 = vmatpush1.msra.mxu0 0.0
        %1212 = vmatprep.subr.mxu0 0.0
        %1213 = vmatpush1.msra.mxu0 0.0
        %1214 = vmatprep.subr.mxu0 0.0
        %1215 = vmatpush1.msra.mxu0 0.0
        %1216 = vmatprep.subr.mxu0 0.0
        %1217 = vmatpush1.msra.mxu0 0.0
        %1218 = vmatprep.subr.mxu0 0.0
        %1219 = vmatpush1.msra.mxu0 0.0
        %1220 = vmatprep.subr.mxu0 0.0
        %1221 = vmatpush1.msra.mxu0 0.0
        %1222 = vmatprep.subr.mxu0 0.0
        %1223 = vmatpush1.msra.mxu0 0.0
        %1224 = vmatprep.subr.mxu0 0.0
        %1225 = vmatpush1.msra.mxu0 0.0
        %1226 = vmatprep.subr.mxu0 0.0
        %1227 = vmatpush1.msra.mxu0 0.0
        %1228 = vmatprep.subr.mxu0 0.0
        %1229 = vmatpush1.msra.mxu0 0.0
        %1230 = vmatprep.subr.mxu0 0.0
        %1231 = vmatpush1.msra.mxu0 0.0
        %1232 = vmatprep.subr.mxu0 0.0
        %1233 = vmatpush1.msra.mxu0 0.0
        %1234 = vmatprep.subr.mxu0 0.0
        %1235 = vmatpush1.msra.mxu0 0.0
        %1236 = vmatprep.subr.mxu0 0.0
        %1237 = vmatpush1.msra.mxu0 0.0
        %1238 = vmatprep.subr.mxu0 0.0
        %1239 = vmatpush1.msra.mxu0 0.0
        %1240 = vmatprep.subr.mxu0 0.0
        %1241 = vmatpush1.msra.mxu0 0.0
        %1242 = vmatprep.subr.mxu0 0.0
        %1243 = vmatpush1.msra.mxu0 0.0
        %1244 = vmatprep.subr.mxu0 0.0
        %1245 = vmatpush1.msra.mxu0 0.0
        %1246 = vmatprep.mubr.f32.mxu0 0.0
        %1247 = vmatmul.mubr.f32.gmra.mrb[0].mxu0 %v1171
        %v1248 = vpop.f32.mrb[0].mxu0
        %v1249 = vadd.f32 0.0, %v1248
        %v1250 = vpop.f32.mrb[0].mxu0
        %v1251 = vadd.f32 0.0, %v1250
        %1252 = vmatprep.mubr.f32.mxu0 0.0
        %1253 = vmatmul.mubr.f32.gmra.mrb[0].mxu0 %v1174
        %v1254 = vpop.f32.mrb[0].mxu0
        %v1255 = vadd.f32 0.0, %v1254
        %v1256 = vpop.f32.mrb[0].mxu0
        %v1257 = vadd.f32 0.0, %v1256
        %1258 = vmatprep.mubr.f32.mxu0 0.0
        %1259 = vmatmul.mubr.f32.gmra.mrb[0].mxu0 %v1177
        %v1260 = vpop.f32.mrb[0].mxu0
        %v1261 = vadd.f32 0.0, %v1260
        %v1262 = vpop.f32.mrb[0].mxu0
        %v1263 = vadd.f32 0.0, %v1262
        %1264 = vmatprep.mubr.f32.mxu0 0.0
        %1265 = vmatmul.mubr.f32.gmra.mrb[0].mxu0 %v1180
        %v1266 = vpop.f32.mrb[0].mxu0
        %v1267 = vadd.f32 0.0, %v1266
        %v1268 = vpop.f32.mrb[0].mxu0
        %v1269 = vadd.f32 0.0, %v1268
        %1270 = vdwg.mxu0
        %v1271 = vld [vmem:[#allocation3] sm:$0xff]
        %v1272 = vld [vmem:[#allocation3 + $0x8] sm:$0xff]
        %v1273 = vld [vmem:[#allocation3 + $0x10] sm:$0xff]
        %v1274 = vld [vmem:[#allocation3 + $0x18] sm:$0xff]
        %v1275 = vld [vmem:[#allocation3 + $0x20] sm:$0xff]
        %v1276 = vld [vmem:[#allocation3 + $0x28] sm:$0xff]
        %v1277 = vld [vmem:[#allocation3 + $0x30] sm:$0xff]
        %v1278 = vld [vmem:[#allocation3 + $0x38] sm:$0xff]
        %v1279 = vadd.f32 %v1271, %v1249
        %v1280 = vadd.f32 %v1272, %v1251
        %v1281 = vadd.f32 %v1273, %v1255
        %v1282 = vadd.f32 %v1274, %v1257
        %v1283 = vadd.f32 %v1275, %v1261
        %v1284 = vadd.f32 %v1276, %v1263
        %v1285 = vadd.f32 %v1277, %v1267
        %v1286 = vadd.f32 %v1278, %v1269
        %1287 = vst [vmem:[#allocation3] sm:$0xff] %v1279
        %1288 = vst.msk [vmem:[#allocation3 + $0x8] sm:$0xff] %vm630, %v1280
        %1289 = vst [vmem:[#allocation3 + $0x10] sm:$0xff] %v1281
        %1290 = vst.msk [vmem:[#allocation3 + $0x18] sm:$0xff] %vm630, %v1282
        %1291 = vst [vmem:[#allocation3 + $0x20] sm:$0xff] %v1283
        %1292 = vst.msk [vmem:[#allocation3 + $0x28] sm:$0xff] %vm630, %v1284
        %1293 = vst [vmem:[#allocation3 + $0x30] sm:$0xff] %v1285
        %1294 = vst.msk [vmem:[#allocation3 + $0x38] sm:$0xff] %vm630, %v1286
        %s1295 = scalar_lea.vmem %s2, 128
        %v1296 = vld [vmem:[%s1295] sm:$0xff]
        %v1297 = vld [vmem:[%s1295 + $0x8] sm:$0xff]
        %v1298 = vld [vmem:[%s1295 + $0x10] sm:$0xff]
        %v1299 = vld [vmem:[%s1295 + $0x18] sm:$0xff]
        %v1300 = vld [vmem:[#allocation2] sm:$0xff]
        %v1301 = vld [vmem:[#allocation2 + $0x8] sm:$0xff]
        %v1302 = vld [vmem:[#allocation2 + $0x10] sm:$0xff]
        %v1303 = vld [vmem:[#allocation2 + $0x18] sm:$0xff]
        %v1304 = vld [vmem:[#allocation2 + $0x20] sm:$0xff]
        %v1305 = vld [vmem:[#allocation2 + $0x28] sm:$0xff]
        %v1306 = vld [vmem:[#allocation2 + $0x30] sm:$0xff]
        %v1307 = vld [vmem:[#allocation2 + $0x38] sm:$0xff]
        %v1308 = vld [vmem:[#allocation2 + $0x40] sm:$0xff]
        %v1309 = vld [vmem:[#allocation2 + $0x48] sm:$0xff]
        %v1310 = vld [vmem:[#allocation2 + $0x50] sm:$0xff]
        %v1311 = vld [vmem:[#allocation2 + $0x58] sm:$0xff]
        %v1312 = vld [vmem:[#allocation2 + $0x60] sm:$0xff]
        %v1313 = vld [vmem:[#allocation2 + $0x68] sm:$0xff]
        %v1314 = vld [vmem:[#allocation2 + $0x70] sm:$0xff]
        %v1315 = vld [vmem:[#allocation2 + $0x78] sm:$0xff]
        %1332 = vrot.lane.b32.xlu0 %v1300, 113
        %v1333 = vpop.permute.xlu0 %1332
        %1334 = vrot.lane.b32.xlu0 %v1301, 113
        %v1335 = vpop.permute.xlu0 %1334
        %1336 = vrot.lane.b32.xlu0 %v1302, 113
        %v1337 = vpop.permute.xlu0 %1336
        %1338 = vrot.lane.b32.xlu0 %v1303, 113
        %v1339 = vpop.permute.xlu0 %1338
        %1340 = vrot.lane.b32.xlu0 %v1304, 113
        %v1341 = vpop.permute.xlu0 %1340
        %1342 = vrot.lane.b32.xlu0 %v1305, 113
        %v1343 = vpop.permute.xlu0 %1342
        %1344 = vrot.lane.b32.xlu0 %v1306, 113
        %v1345 = vpop.permute.xlu0 %1344
        %1346 = vrot.lane.b32.xlu0 %v1307, 113
        %v1347 = vpop.permute.xlu0 %1346
        %1348 = vrot.lane.b32.xlu0 %v1308, 113
        %v1349 = vpop.permute.xlu0 %1348
        %1350 = vrot.lane.b32.xlu0 %v1309, 113
        %v1351 = vpop.permute.xlu0 %1350
        %1352 = vrot.lane.b32.xlu0 %v1310, 113
        %v1353 = vpop.permute.xlu0 %1352
        %1354 = vrot.lane.b32.xlu0 %v1311, 113
        %v1355 = vpop.permute.xlu0 %1354
        %1356 = vrot.lane.b32.xlu0 %v1312, 113
        %v1357 = vpop.permute.xlu0 %1356
        %1358 = vrot.lane.b32.xlu0 %v1313, 113
        %v1359 = vpop.permute.xlu0 %1358
        %1360 = vrot.lane.b32.xlu0 %v1314, 113
        %v1361 = vpop.permute.xlu0 %1360
        %1362 = vrot.lane.b32.xlu0 %v1315, 113
        %v1363 = vpop.permute.xlu0 %1362
        %vm1364 = vcmask 924672
        %v1365 = vsel %vm1364, %v1333, %v1335
        %v1366 = vsel %vm1364, %v1337, %v1339
        %v1367 = vsel %vm1364, %v1341, %v1343
        %v1368 = vsel %vm1364, %v1345, %v1347
        %v1369 = vsel %vm1364, %v1349, %v1351
        %v1370 = vsel %vm1364, %v1353, %v1355
        %v1371 = vsel %vm1364, %v1357, %v1359
        %v1372 = vsel %vm1364, %v1361, %v1363
        %v1390 = vsel %vm527, %v1296, 0
        %v1393 = vsel %vm527, %v1297, 0
        %v1396 = vsel %vm527, %v1298, 0
        %v1399 = vsel %vm527, %v1299, 0
        %1401 = vmatprep.subr.mxu0 %v1335
        %1402 = vmatpush1.msra.mxu0 %v1365
        %1403 = vmatprep.subr.mxu0 %v1339
        %1404 = vmatpush1.msra.mxu0 %v1366
        %1405 = vmatprep.subr.mxu0 %v1343
        %1406 = vmatpush1.msra.mxu0 %v1367
        %1407 = vmatprep.subr.mxu0 %v1347
        %1408 = vmatpush1.msra.mxu0 %v1368
        %1409 = vmatprep.subr.mxu0 %v1351
        %1410 = vmatpush1.msra.mxu0 %v1369
        %1411 = vmatprep.subr.mxu0 %v1355
        %1412 = vmatpush1.msra.mxu0 %v1370
        %1413 = vmatprep.subr.mxu0 %v1359
        %1414 = vmatpush1.msra.mxu0 %v1371
        %1415 = vmatprep.subr.mxu0 %v1363
        %1416 = vmatpush1.msra.mxu0 %v1372
        %1417 = vmatprep.subr.mxu0 0.0
        %1418 = vmatpush1.msra.mxu0 0.0
        %1419 = vmatprep.subr.mxu0 0.0
        %1420 = vmatpush1.msra.mxu0 0.0
        %1421 = vmatprep.subr.mxu0 0.0
        %1422 = vmatpush1.msra.mxu0 0.0
        %1423 = vmatprep.subr.mxu0 0.0
        %1424 = vmatpush1.msra.mxu0 0.0
        %1425 = vmatprep.subr.mxu0 0.0
        %1426 = vmatpush1.msra.mxu0 0.0
        %1427 = vmatprep.subr.mxu0 0.0
        %1428 = vmatpush1.msra.mxu0 0.0
        %1429 = vmatprep.subr.mxu0 0.0
        %1430 = vmatpush1.msra.mxu0 0.0
        %1431 = vmatprep.subr.mxu0 0.0
        %1432 = vmatpush1.msra.mxu0 0.0
        %1433 = vmatprep.subr.mxu0 0.0
        %1434 = vmatpush1.msra.mxu0 0.0
        %1435 = vmatprep.subr.mxu0 0.0
        %1436 = vmatpush1.msra.mxu0 0.0
        %1437 = vmatprep.subr.mxu0 0.0
        %1438 = vmatpush1.msra.mxu0 0.0
        %1439 = vmatprep.subr.mxu0 0.0
        %1440 = vmatpush1.msra.mxu0 0.0
        %1441 = vmatprep.subr.mxu0 0.0
        %1442 = vmatpush1.msra.mxu0 0.0
        %1443 = vmatprep.subr.mxu0 0.0
        %1444 = vmatpush1.msra.mxu0 0.0
        %1445 = vmatprep.subr.mxu0 0.0
        %1446 = vmatpush1.msra.mxu0 0.0
        %1447 = vmatprep.subr.mxu0 0.0
        %1448 = vmatpush1.msra.mxu0 0.0
        %1449 = vmatprep.subr.mxu0 0.0
        %1450 = vmatpush1.msra.mxu0 0.0
        %1451 = vmatprep.subr.mxu0 0.0
        %1452 = vmatpush1.msra.mxu0 0.0
        %1453 = vmatprep.subr.mxu0 0.0
        %1454 = vmatpush1.msra.mxu0 0.0
        %1455 = vmatprep.subr.mxu0 0.0
        %1456 = vmatpush1.msra.mxu0 0.0
        %1457 = vmatprep.subr.mxu0 0.0
        %1458 = vmatpush1.msra.mxu0 0.0
        %1459 = vmatprep.subr.mxu0 0.0
        %1460 = vmatpush1.msra.mxu0 0.0
        %1461 = vmatprep.subr.mxu0 0.0
        %1462 = vmatpush1.msra.mxu0 0.0
        %1463 = vmatprep.subr.mxu0 0.0
        %1464 = vmatpush1.msra.mxu0 0.0
        %1465 = vmatprep.mubr.f32.mxu0 0.0
        %1466 = vmatmul.mubr.f32.gmra.mrb[0].mxu0 %v1390
        %v1467 = vpop.f32.mrb[0].mxu0
        %v1468 = vadd.f32 0.0, %v1467
        %v1469 = vpop.f32.mrb[0].mxu0
        %v1470 = vadd.f32 0.0, %v1469
        %1471 = vmatprep.mubr.f32.mxu0 0.0
        %1472 = vmatmul.mubr.f32.gmra.mrb[0].mxu0 %v1393
        %v1473 = vpop.f32.mrb[0].mxu0
        %v1474 = vadd.f32 0.0, %v1473
        %v1475 = vpop.f32.mrb[0].mxu0
        %v1476 = vadd.f32 0.0, %v1475
        %1477 = vmatprep.mubr.f32.mxu0 0.0
        %1478 = vmatmul.mubr.f32.gmra.mrb[0].mxu0 %v1396
        %v1479 = vpop.f32.mrb[0].mxu0
        %v1480 = vadd.f32 0.0, %v1479
        %v1481 = vpop.f32.mrb[0].mxu0
        %v1482 = vadd.f32 0.0, %v1481
        %1483 = vmatprep.mubr.f32.mxu0 0.0
        %1484 = vmatmul.mubr.f32.gmra.mrb[0].mxu0 %v1399
        %v1485 = vpop.f32.mrb[0].mxu0
        %v1486 = vadd.f32 0.0, %v1485
        %v1487 = vpop.f32.mrb[0].mxu0
        %v1488 = vadd.f32 0.0, %v1487
        %1489 = vdwg.mxu0
        %v1490 = vld [vmem:[#allocation3] sm:$0xff]
        %v1491 = vld [vmem:[#allocation3 + $0x8] sm:$0xff]
        %v1492 = vld [vmem:[#allocation3 + $0x10] sm:$0xff]
        %v1493 = vld [vmem:[#allocation3 + $0x18] sm:$0xff]
        %v1494 = vld [vmem:[#allocation3 + $0x20] sm:$0xff]
        %v1495 = vld [vmem:[#allocation3 + $0x28] sm:$0xff]
        %v1496 = vld [vmem:[#allocation3 + $0x30] sm:$0xff]
        %v1497 = vld [vmem:[#allocation3 + $0x38] sm:$0xff]
        %v1498 = vadd.f32 %v1490, %v1468
        %v1499 = vadd.f32 %v1491, %v1470
        %v1500 = vadd.f32 %v1492, %v1474
        %v1501 = vadd.f32 %v1493, %v1476
        %v1502 = vadd.f32 %v1494, %v1480
        %v1503 = vadd.f32 %v1495, %v1482
        %v1504 = vadd.f32 %v1496, %v1486
        %v1505 = vadd.f32 %v1497, %v1488
        %1506 = vst [vmem:[#allocation3] sm:$0xff] %v1498
        %1507 = vst.msk [vmem:[#allocation3 + $0x8] sm:$0xff] %vm630, %v1499
        %1508 = vst [vmem:[#allocation3 + $0x10] sm:$0xff] %v1500
        %1509 = vst.msk [vmem:[#allocation3 + $0x18] sm:$0xff] %vm630, %v1501
        %1510 = vst [vmem:[#allocation3 + $0x20] sm:$0xff] %v1502
        %1511 = vst.msk [vmem:[#allocation3 + $0x28] sm:$0xff] %vm630, %v1503
        %1512 = vst [vmem:[#allocation3 + $0x30] sm:$0xff] %v1504
        %1513 = vst.msk [vmem:[#allocation3 + $0x38] sm:$0xff] %vm630, %v1505
        %s1514 = scalar_lea.vmem %s2, 160
        %v1515 = vld [vmem:[%s1514] sm:$0xff]
        %v1516 = vld [vmem:[%s1514 + $0x8] sm:$0xff]
        %v1517 = vld [vmem:[%s1514 + $0x10] sm:$0xff]
        %v1518 = vld [vmem:[%s1514 + $0x18] sm:$0xff]
        %v1519 = vld [vmem:[#allocation2] sm:$0xff]
        %v1520 = vld [vmem:[#allocation2 + $0x8] sm:$0xff]
        %v1521 = vld [vmem:[#allocation2 + $0x10] sm:$0xff]
        %v1522 = vld [vmem:[#allocation2 + $0x18] sm:$0xff]
        %v1523 = vld [vmem:[#allocation2 + $0x20] sm:$0xff]
        %v1524 = vld [vmem:[#allocation2 + $0x28] sm:$0xff]
        %v1525 = vld [vmem:[#allocation2 + $0x30] sm:$0xff]
        %v1526 = vld [vmem:[#allocation2 + $0x38] sm:$0xff]
        %v1527 = vld [vmem:[#allocation2 + $0x40] sm:$0xff]
        %v1528 = vld [vmem:[#allocation2 + $0x48] sm:$0xff]
        %v1529 = vld [vmem:[#allocation2 + $0x50] sm:$0xff]
        %v1530 = vld [vmem:[#allocation2 + $0x58] sm:$0xff]
        %v1531 = vld [vmem:[#allocation2 + $0x60] sm:$0xff]
        %v1532 = vld [vmem:[#allocation2 + $0x68] sm:$0xff]
        %v1533 = vld [vmem:[#allocation2 + $0x70] sm:$0xff]
        %v1534 = vld [vmem:[#allocation2 + $0x78] sm:$0xff]
        %1551 = vrot.lane.b32.xlu0 %v1519, 112
        %v1552 = vpop.permute.xlu0 %1551
        %1553 = vrot.lane.b32.xlu0 %v1520, 112
        %v1554 = vpop.permute.xlu0 %1553
        %1555 = vrot.lane.b32.xlu0 %v1521, 112
        %v1556 = vpop.permute.xlu0 %1555
        %1557 = vrot.lane.b32.xlu0 %v1522, 112
        %v1558 = vpop.permute.xlu0 %1557
        %1559 = vrot.lane.b32.xlu0 %v1523, 112
        %v1560 = vpop.permute.xlu0 %1559
        %1561 = vrot.lane.b32.xlu0 %v1524, 112
        %v1562 = vpop.permute.xlu0 %1561
        %1563 = vrot.lane.b32.xlu0 %v1525, 112
        %v1564 = vpop.permute.xlu0 %1563
        %1565 = vrot.lane.b32.xlu0 %v1526, 112
        %v1566 = vpop.permute.xlu0 %1565
        %1567 = vrot.lane.b32.xlu0 %v1527, 112
        %v1568 = vpop.permute.xlu0 %1567
        %1569 = vrot.lane.b32.xlu0 %v1528, 112
        %v1570 = vpop.permute.xlu0 %1569
        %1571 = vrot.lane.b32.xlu0 %v1529, 112
        %v1572 = vpop.permute.xlu0 %1571
        %1573 = vrot.lane.b32.xlu0 %v1530, 112
        %v1574 = vpop.permute.xlu0 %1573
        %1575 = vrot.lane.b32.xlu0 %v1531, 112
        %v1576 = vpop.permute.xlu0 %1575
        %1577 = vrot.lane.b32.xlu0 %v1532, 112
        %v1578 = vpop.permute.xlu0 %1577
        %1579 = vrot.lane.b32.xlu0 %v1533, 112
        %v1580 = vpop.permute.xlu0 %1579
        %1581 = vrot.lane.b32.xlu0 %v1534, 112
        %v1582 = vpop.permute.xlu0 %1581
        %vm1583 = vcmask 916480
        %v1584 = vsel %vm1583, %v1552, %v1554
        %v1585 = vsel %vm1583, %v1556, %v1558
        %v1586 = vsel %vm1583, %v1560, %v1562
        %v1587 = vsel %vm1583, %v1564, %v1566
        %v1588 = vsel %vm1583, %v1568, %v1570
        %v1589 = vsel %vm1583, %v1572, %v1574
        %v1590 = vsel %vm1583, %v1576, %v1578
        %v1591 = vsel %vm1583, %v1580, %v1582
        %v1609 = vsel %vm527, %v1515, 0
        %v1612 = vsel %vm527, %v1516, 0
        %v1615 = vsel %vm527, %v1517, 0
        %v1618 = vsel %vm527, %v1518, 0
        %1620 = vmatprep.subr.mxu0 %v1554
        %1621 = vmatpush1.msra.mxu0 %v1584
        %1622 = vmatprep.subr.mxu0 %v1558
        %1623 = vmatpush1.msra.mxu0 %v1585
        %1624 = vmatprep.subr.mxu0 %v1562
        %1625 = vmatpush1.msra.mxu0 %v1586
        %1626 = vmatprep.subr.mxu0 %v1566
        %1627 = vmatpush1.msra.mxu0 %v1587
        %1628 = vmatprep.subr.mxu0 %v1570
        %1629 = vmatpush1.msra.mxu0 %v1588
        %1630 = vmatprep.subr.mxu0 %v1574
        %1631 = vmatpush1.msra.mxu0 %v1589
        %1632 = vmatprep.subr.mxu0 %v1578
        %1633 = vmatpush1.msra.mxu0 %v1590
        %1634 = vmatprep.subr.mxu0 %v1582
        %1635 = vmatpush1.msra.mxu0 %v1591
        %1636 = vmatprep.subr.mxu0 0.0
        %1637 = vmatpush1.msra.mxu0 0.0
        %1638 = vmatprep.subr.mxu0 0.0
        %1639 = vmatpush1.msra.mxu0 0.0
        %1640 = vmatprep.subr.mxu0 0.0
        %1641 = vmatpush1.msra.mxu0 0.0
        %1642 = vmatprep.subr.mxu0 0.0
        %1643 = vmatpush1.msra.mxu0 0.0
        %1644 = vmatprep.subr.mxu0 0.0
        %1645 = vmatpush1.msra.mxu0 0.0
        %1646 = vmatprep.subr.mxu0 0.0
        %1647 = vmatpush1.msra.mxu0 0.0
        %1648 = vmatprep.subr.mxu0 0.0
        %1649 = vmatpush1.msra.mxu0 0.0
        %1650 = vmatprep.subr.mxu0 0.0
        %1651 = vmatpush1.msra.mxu0 0.0
        %1652 = vmatprep.subr.mxu0 0.0
        %1653 = vmatpush1.msra.mxu0 0.0
        %1654 = vmatprep.subr.mxu0 0.0
        %1655 = vmatpush1.msra.mxu0 0.0
        %1656 = vmatprep.subr.mxu0 0.0
        %1657 = vmatpush1.msra.mxu0 0.0
        %1658 = vmatprep.subr.mxu0 0.0
        %1659 = vmatpush1.msra.mxu0 0.0
        %1660 = vmatprep.subr.mxu0 0.0
        %1661 = vmatpush1.msra.mxu0 0.0
        %1662 = vmatprep.subr.mxu0 0.0
        %1663 = vmatpush1.msra.mxu0 0.0
        %1664 = vmatprep.subr.mxu0 0.0
        %1665 = vmatpush1.msra.mxu0 0.0
        %1666 = vmatprep.subr.mxu0 0.0
        %1667 = vmatpush1.msra.mxu0 0.0
        %1668 = vmatprep.subr.mxu0 0.0
        %1669 = vmatpush1.msra.mxu0 0.0
        %1670 = vmatprep.subr.mxu0 0.0
        %1671 = vmatpush1.msra.mxu0 0.0
        %1672 = vmatprep.subr.mxu0 0.0
        %1673 = vmatpush1.msra.mxu0 0.0
        %1674 = vmatprep.subr.mxu0 0.0
        %1675 = vmatpush1.msra.mxu0 0.0
        %1676 = vmatprep.subr.mxu0 0.0
        %1677 = vmatpush1.msra.mxu0 0.0
        %1678 = vmatprep.subr.mxu0 0.0
        %1679 = vmatpush1.msra.mxu0 0.0
        %1680 = vmatprep.subr.mxu0 0.0
        %1681 = vmatpush1.msra.mxu0 0.0
        %1682 = vmatprep.subr.mxu0 0.0
        %1683 = vmatpush1.msra.mxu0 0.0
        %1684 = vmatprep.mubr.f32.mxu0 0.0
        %1685 = vmatmul.mubr.f32.gmra.mrb[0].mxu0 %v1609
        %v1686 = vpop.f32.mrb[0].mxu0
        %v1687 = vadd.f32 0.0, %v1686
        %v1688 = vpop.f32.mrb[0].mxu0
        %v1689 = vadd.f32 0.0, %v1688
        %1690 = vmatprep.mubr.f32.mxu0 0.0
        %1691 = vmatmul.mubr.f32.gmra.mrb[0].mxu0 %v1612
        %v1692 = vpop.f32.mrb[0].mxu0
        %v1693 = vadd.f32 0.0, %v1692
        %v1694 = vpop.f32.mrb[0].mxu0
        %v1695 = vadd.f32 0.0, %v1694
        %1696 = vmatprep.mubr.f32.mxu0 0.0
        %1697 = vmatmul.mubr.f32.gmra.mrb[0].mxu0 %v1615
        %v1698 = vpop.f32.mrb[0].mxu0
        %v1699 = vadd.f32 0.0, %v1698
        %v1700 = vpop.f32.mrb[0].mxu0
        %v1701 = vadd.f32 0.0, %v1700
        %1702 = vmatprep.mubr.f32.mxu0 0.0
        %1703 = vmatmul.mubr.f32.gmra.mrb[0].mxu0 %v1618
        %v1704 = vpop.f32.mrb[0].mxu0
        %v1705 = vadd.f32 0.0, %v1704
        %v1706 = vpop.f32.mrb[0].mxu0
        %v1707 = vadd.f32 0.0, %v1706
        %1708 = vdwg.mxu0
        %v1709 = vld [vmem:[#allocation3] sm:$0xff]
        %v1710 = vld [vmem:[#allocation3 + $0x8] sm:$0xff]
        %v1711 = vld [vmem:[#allocation3 + $0x10] sm:$0xff]
        %v1712 = vld [vmem:[#allocation3 + $0x18] sm:$0xff]
        %v1713 = vld [vmem:[#allocation3 + $0x20] sm:$0xff]
        %v1714 = vld [vmem:[#allocation3 + $0x28] sm:$0xff]
        %v1715 = vld [vmem:[#allocation3 + $0x30] sm:$0xff]
        %v1716 = vld [vmem:[#allocation3 + $0x38] sm:$0xff]
        %v1717 = vadd.f32 %v1709, %v1687
        %v1718 = vadd.f32 %v1710, %v1689
        %v1719 = vadd.f32 %v1711, %v1693
        %v1720 = vadd.f32 %v1712, %v1695
        %v1721 = vadd.f32 %v1713, %v1699
        %v1722 = vadd.f32 %v1714, %v1701
        %v1723 = vadd.f32 %v1715, %v1705
        %v1724 = vadd.f32 %v1716, %v1707
        %1725 = vst [vmem:[#allocation3] sm:$0xff] %v1717
        %1726 = vst.msk [vmem:[#allocation3 + $0x8] sm:$0xff] %vm630, %v1718
        %1727 = vst [vmem:[#allocation3 + $0x10] sm:$0xff] %v1719
        %1728 = vst.msk [vmem:[#allocation3 + $0x18] sm:$0xff] %vm630, %v1720
        %1729 = vst [vmem:[#allocation3 + $0x20] sm:$0xff] %v1721
        %1730 = vst.msk [vmem:[#allocation3 + $0x28] sm:$0xff] %vm630, %v1722
        %1731 = vst [vmem:[#allocation3 + $0x30] sm:$0xff] %v1723
        %1732 = vst.msk [vmem:[#allocation3 + $0x38] sm:$0xff] %vm630, %v1724
        %s1733 = scalar_lea.vmem %s2, 192
        %v1734 = vld [vmem:[%s1733] sm:$0xff]
        %v1735 = vld [vmem:[%s1733 + $0x8] sm:$0xff]
        %v1736 = vld [vmem:[%s1733 + $0x10] sm:$0xff]
        %v1737 = vld [vmem:[%s1733 + $0x18] sm:$0xff]
        %v1738 = vld [vmem:[#allocation2] sm:$0xff]
        %v1739 = vld [vmem:[#allocation2 + $0x8] sm:$0xff]
        %v1740 = vld [vmem:[#allocation2 + $0x10] sm:$0xff]
        %v1741 = vld [vmem:[#allocation2 + $0x18] sm:$0xff]
        %v1742 = vld [vmem:[#allocation2 + $0x20] sm:$0xff]
        %v1743 = vld [vmem:[#allocation2 + $0x28] sm:$0xff]
        %v1744 = vld [vmem:[#allocation2 + $0x30] sm:$0xff]
        %v1745 = vld [vmem:[#allocation2 + $0x38] sm:$0xff]
        %v1746 = vld [vmem:[#allocation2 + $0x40] sm:$0xff]
        %v1747 = vld [vmem:[#allocation2 + $0x48] sm:$0xff]
        %v1748 = vld [vmem:[#allocation2 + $0x50] sm:$0xff]
        %v1749 = vld [vmem:[#allocation2 + $0x58] sm:$0xff]
        %v1750 = vld [vmem:[#allocation2 + $0x60] sm:$0xff]
        %v1751 = vld [vmem:[#allocation2 + $0x68] sm:$0xff]
        %v1752 = vld [vmem:[#allocation2 + $0x70] sm:$0xff]
        %v1753 = vld [vmem:[#allocation2 + $0x78] sm:$0xff]
        %1770 = vrot.lane.b32.xlu0 %v1738, 100
        %v1771 = vpop.permute.xlu0 %1770
        %1772 = vrot.lane.b32.xlu0 %v1739, 100
        %v1773 = vpop.permute.xlu0 %1772
        %1774 = vrot.lane.b32.xlu0 %v1740, 100
        %v1775 = vpop.permute.xlu0 %1774
        %1776 = vrot.lane.b32.xlu0 %v1741, 100
        %v1777 = vpop.permute.xlu0 %1776
        %1778 = vrot.lane.b32.xlu0 %v1742, 100
        %v1779 = vpop.permute.xlu0 %1778
        %1780 = vrot.lane.b32.xlu0 %v1743, 100
        %v1781 = vpop.permute.xlu0 %1780
        %1782 = vrot.lane.b32.xlu0 %v1744, 100
        %v1783 = vpop.permute.xlu0 %1782
        %1784 = vrot.lane.b32.xlu0 %v1745, 100
        %v1785 = vpop.permute.xlu0 %1784
        %1786 = vrot.lane.b32.xlu0 %v1746, 100
        %v1787 = vpop.permute.xlu0 %1786
        %1788 = vrot.lane.b32.xlu0 %v1747, 100
        %v1789 = vpop.permute.xlu0 %1788
        %1790 = vrot.lane.b32.xlu0 %v1748, 100
        %v1791 = vpop.permute.xlu0 %1790
        %1792 = vrot.lane.b32.xlu0 %v1749, 100
        %v1793 = vpop.permute.xlu0 %1792
        %1794 = vrot.lane.b32.xlu0 %v1750, 100
        %v1795 = vpop.permute.xlu0 %1794
        %1796 = vrot.lane.b32.xlu0 %v1751, 100
        %v1797 = vpop.permute.xlu0 %1796
        %1798 = vrot.lane.b32.xlu0 %v1752, 100
        %v1799 = vpop.permute.xlu0 %1798
        %1800 = vrot.lane.b32.xlu0 %v1753, 100
        %v1801 = vpop.permute.xlu0 %1800
        %v1802 = vsel %vm491, %v1771, %v1773
        %v1803 = vsel %vm491, %v1775, %v1777
        %v1804 = vsel %vm491, %v1779, %v1781
        %v1805 = vsel %vm491, %v1783, %v1785
        %v1806 = vsel %vm491, %v1787, %v1789
        %v1807 = vsel %vm491, %v1791, %v1793
        %v1808 = vsel %vm491, %v1795, %v1797
        %v1809 = vsel %vm491, %v1799, %v1801
        %v1827 = vsel %vm527, %v1734, 0
        %v1830 = vsel %vm527, %v1735, 0
        %v1833 = vsel %vm527, %v1736, 0
        %v1836 = vsel %vm527, %v1737, 0
        %1838 = vmatprep.subr.mxu0 %v1773
        %1839 = vmatpush1.msra.mxu0 %v1802
        %1840 = vmatprep.subr.mxu0 %v1777
        %1841 = vmatpush1.msra.mxu0 %v1803
        %1842 = vmatprep.subr.mxu0 %v1781
        %1843 = vmatpush1.msra.mxu0 %v1804
        %1844 = vmatprep.subr.mxu0 %v1785
        %1845 = vmatpush1.msra.mxu0 %v1805
        %1846 = vmatprep.subr.mxu0 %v1789
        %1847 = vmatpush1.msra.mxu0 %v1806
        %1848 = vmatprep.subr.mxu0 %v1793
        %1849 = vmatpush1.msra.mxu0 %v1807
        %1850 = vmatprep.subr.mxu0 %v1797
        %1851 = vmatpush1.msra.mxu0 %v1808
        %1852 = vmatprep.subr.mxu0 %v1801
        %1853 = vmatpush1.msra.mxu0 %v1809
        %1854 = vmatprep.subr.mxu0 0.0
        %1855 = vmatpush1.msra.mxu0 0.0
        %1856 = vmatprep.subr.mxu0 0.0
        %1857 = vmatpush1.msra.mxu0 0.0
        %1858 = vmatprep.subr.mxu0 0.0
        %1859 = vmatpush1.msra.mxu0 0.0
        %1860 = vmatprep.subr.mxu0 0.0
        %1861 = vmatpush1.msra.mxu0 0.0
        %1862 = vmatprep.subr.mxu0 0.0
        %1863 = vmatpush1.msra.mxu0 0.0
        %1864 = vmatprep.subr.mxu0 0.0
        %1865 = vmatpush1.msra.mxu0 0.0
        %1866 = vmatprep.subr.mxu0 0.0
        %1867 = vmatpush1.msra.mxu0 0.0
        %1868 = vmatprep.subr.mxu0 0.0
        %1869 = vmatpush1.msra.mxu0 0.0
        %1870 = vmatprep.subr.mxu0 0.0
        %1871 = vmatpush1.msra.mxu0 0.0
        %1872 = vmatprep.subr.mxu0 0.0
        %1873 = vmatpush1.msra.mxu0 0.0
        %1874 = vmatprep.subr.mxu0 0.0
        %1875 = vmatpush1.msra.mxu0 0.0
        %1876 = vmatprep.subr.mxu0 0.0
        %1877 = vmatpush1.msra.mxu0 0.0
        %1878 = vmatprep.subr.mxu0 0.0
        %1879 = vmatpush1.msra.mxu0 0.0
        %1880 = vmatprep.subr.mxu0 0.0
        %1881 = vmatpush1.msra.mxu0 0.0
        %1882 = vmatprep.subr.mxu0 0.0
        %1883 = vmatpush1.msra.mxu0 0.0
        %1884 = vmatprep.subr.mxu0 0.0
        %1885 = vmatpush1.msra.mxu0 0.0
        %1886 = vmatprep.subr.mxu0 0.0
        %1887 = vmatpush1.msra.mxu0 0.0
        %1888 = vmatprep.subr.mxu0 0.0
        %1889 = vmatpush1.msra.mxu0 0.0
        %1890 = vmatprep.subr.mxu0 0.0
        %1891 = vmatpush1.msra.mxu0 0.0
        %1892 = vmatprep.subr.mxu0 0.0
        %1893 = vmatpush1.msra.mxu0 0.0
        %1894 = vmatprep.subr.mxu0 0.0
        %1895 = vmatpush1.msra.mxu0 0.0
        %1896 = vmatprep.subr.mxu0 0.0
        %1897 = vmatpush1.msra.mxu0 0.0
        %1898 = vmatprep.subr.mxu0 0.0
        %1899 = vmatpush1.msra.mxu0 0.0
        %1900 = vmatprep.subr.mxu0 0.0
        %1901 = vmatpush1.msra.mxu0 0.0
        %1902 = vmatprep.mubr.f32.mxu0 0.0
        %1903 = vmatmul.mubr.f32.gmra.mrb[0].mxu0 %v1827
        %v1904 = vpop.f32.mrb[0].mxu0
        %v1905 = vadd.f32 0.0, %v1904
        %v1906 = vpop.f32.mrb[0].mxu0
        %v1907 = vadd.f32 0.0, %v1906
        %1908 = vmatprep.mubr.f32.mxu0 0.0
        %1909 = vmatmul.mubr.f32.gmra.mrb[0].mxu0 %v1830
        %v1910 = vpop.f32.mrb[0].mxu0
        %v1911 = vadd.f32 0.0, %v1910
        %v1912 = vpop.f32.mrb[0].mxu0
        %v1913 = vadd.f32 0.0, %v1912
        %1914 = vmatprep.mubr.f32.mxu0 0.0
        %1915 = vmatmul.mubr.f32.gmra.mrb[0].mxu0 %v1833
        %v1916 = vpop.f32.mrb[0].mxu0
        %v1917 = vadd.f32 0.0, %v1916
        %v1918 = vpop.f32.mrb[0].mxu0
        %v1919 = vadd.f32 0.0, %v1918
        %1920 = vmatprep.mubr.f32.mxu0 0.0
        %1921 = vmatmul.mubr.f32.gmra.mrb[0].mxu0 %v1836
        %v1922 = vpop.f32.mrb[0].mxu0
        %v1923 = vadd.f32 0.0, %v1922
        %v1924 = vpop.f32.mrb[0].mxu0
        %v1925 = vadd.f32 0.0, %v1924
        %1926 = vdwg.mxu0
        %v1927 = vld [vmem:[#allocation3] sm:$0xff]
        %v1928 = vld [vmem:[#allocation3 + $0x8] sm:$0xff]
        %v1929 = vld [vmem:[#allocation3 + $0x10] sm:$0xff]
        %v1930 = vld [vmem:[#allocation3 + $0x18] sm:$0xff]
        %v1931 = vld [vmem:[#allocation3 + $0x20] sm:$0xff]
        %v1932 = vld [vmem:[#allocation3 + $0x28] sm:$0xff]
        %v1933 = vld [vmem:[#allocation3 + $0x30] sm:$0xff]
        %v1934 = vld [vmem:[#allocation3 + $0x38] sm:$0xff]
        %v1935 = vadd.f32 %v1927, %v1905
        %v1936 = vadd.f32 %v1928, %v1907
        %v1937 = vadd.f32 %v1929, %v1911
        %v1938 = vadd.f32 %v1930, %v1913
        %v1939 = vadd.f32 %v1931, %v1917
        %v1940 = vadd.f32 %v1932, %v1919
        %v1941 = vadd.f32 %v1933, %v1923
        %v1942 = vadd.f32 %v1934, %v1925
        %1943 = vst [vmem:[#allocation3] sm:$0xff] %v1935
        %1944 = vst.msk [vmem:[#allocation3 + $0x8] sm:$0xff] %vm630, %v1936
        %1945 = vst [vmem:[#allocation3 + $0x10] sm:$0xff] %v1937
        %1946 = vst.msk [vmem:[#allocation3 + $0x18] sm:$0xff] %vm630, %v1938
        %1947 = vst [vmem:[#allocation3 + $0x20] sm:$0xff] %v1939
        %1948 = vst.msk [vmem:[#allocation3 + $0x28] sm:$0xff] %vm630, %v1940
        %1949 = vst [vmem:[#allocation3 + $0x30] sm:$0xff] %v1941
        %1950 = vst.msk [vmem:[#allocation3 + $0x38] sm:$0xff] %vm630, %v1942
        %s1951 = scalar_lea.vmem %s2, 224
        %v1952 = vld [vmem:[%s1951] sm:$0xff]
        %v1953 = vld [vmem:[%s1951 + $0x8] sm:$0xff]
        %v1954 = vld [vmem:[%s1951 + $0x10] sm:$0xff]
        %v1955 = vld [vmem:[%s1951 + $0x18] sm:$0xff]
        %v1956 = vld [vmem:[#allocation2] sm:$0xff]
        %v1957 = vld [vmem:[#allocation2 + $0x8] sm:$0xff]
        %v1958 = vld [vmem:[#allocation2 + $0x10] sm:$0xff]
        %v1959 = vld [vmem:[#allocation2 + $0x18] sm:$0xff]
        %v1960 = vld [vmem:[#allocation2 + $0x20] sm:$0xff]
        %v1961 = vld [vmem:[#allocation2 + $0x28] sm:$0xff]
        %v1962 = vld [vmem:[#allocation2 + $0x30] sm:$0xff]
        %v1963 = vld [vmem:[#allocation2 + $0x38] sm:$0xff]
        %v1964 = vld [vmem:[#allocation2 + $0x40] sm:$0xff]
        %v1965 = vld [vmem:[#allocation2 + $0x48] sm:$0xff]
        %v1966 = vld [vmem:[#allocation2 + $0x50] sm:$0xff]
        %v1967 = vld [vmem:[#allocation2 + $0x58] sm:$0xff]
        %v1968 = vld [vmem:[#allocation2 + $0x60] sm:$0xff]
        %v1969 = vld [vmem:[#allocation2 + $0x68] sm:$0xff]
        %v1970 = vld [vmem:[#allocation2 + $0x70] sm:$0xff]
        %v1971 = vld [vmem:[#allocation2 + $0x78] sm:$0xff]
        %1988 = vrot.lane.b32.xlu0 %v1956, 99
        %v1989 = vpop.permute.xlu0 %1988
        %1990 = vrot.lane.b32.xlu0 %v1957, 99
        %v1991 = vpop.permute.xlu0 %1990
        %1992 = vrot.lane.b32.xlu0 %v1958, 99
        %v1993 = vpop.permute.xlu0 %1992
        %1994 = vrot.lane.b32.xlu0 %v1959, 99
        %v1995 = vpop.permute.xlu0 %1994
        %1996 = vrot.lane.b32.xlu0 %v1960, 99
        %v1997 = vpop.permute.xlu0 %1996
        %1998 = vrot.lane.b32.xlu0 %v1961, 99
        %v1999 = vpop.permute.xlu0 %1998
        %2000 = vrot.lane.b32.xlu0 %v1962, 99
        %v2001 = vpop.permute.xlu0 %2000
        %2002 = vrot.lane.b32.xlu0 %v1963, 99
        %v2003 = vpop.permute.xlu0 %2002
        %2004 = vrot.lane.b32.xlu0 %v1964, 99
        %v2005 = vpop.permute.xlu0 %2004
        %2006 = vrot.lane.b32.xlu0 %v1965, 99
        %v2007 = vpop.permute.xlu0 %2006
        %2008 = vrot.lane.b32.xlu0 %v1966, 99
        %v2009 = vpop.permute.xlu0 %2008
        %2010 = vrot.lane.b32.xlu0 %v1967, 99
        %v2011 = vpop.permute.xlu0 %2010
        %2012 = vrot.lane.b32.xlu0 %v1968, 99
        %v2013 = vpop.permute.xlu0 %2012
        %2014 = vrot.lane.b32.xlu0 %v1969, 99
        %v2015 = vpop.permute.xlu0 %2014
        %2016 = vrot.lane.b32.xlu0 %v1970, 99
        %v2017 = vpop.permute.xlu0 %2016
        %2018 = vrot.lane.b32.xlu0 %v1971, 99
        %v2019 = vpop.permute.xlu0 %2018
        %vm2020 = vcmask 809984
        %v2021 = vsel %vm2020, %v1989, %v1991
        %v2022 = vsel %vm2020, %v1993, %v1995
        %v2023 = vsel %vm2020, %v1997, %v1999
        %v2024 = vsel %vm2020, %v2001, %v2003
        %v2025 = vsel %vm2020, %v2005, %v2007
        %v2026 = vsel %vm2020, %v2009, %v2011
        %v2027 = vsel %vm2020, %v2013, %v2015
        %v2028 = vsel %vm2020, %v2017, %v2019
        %v2046 = vsel %vm527, %v1952, 0
        %v2049 = vsel %vm527, %v1953, 0
        %v2052 = vsel %vm527, %v1954, 0
        %v2055 = vsel %vm527, %v1955, 0
        %2057 = vmatprep.subr.mxu0 %v1991
        %2058 = vmatpush1.msra.mxu0 %v2021
        %2059 = vmatprep.subr.mxu0 %v1995
        %2060 = vmatpush1.msra.mxu0 %v2022
        %2061 = vmatprep.subr.mxu0 %v1999
        %2062 = vmatpush1.msra.mxu0 %v2023
        %2063 = vmatprep.subr.mxu0 %v2003
        %2064 = vmatpush1.msra.mxu0 %v2024
        %2065 = vmatprep.subr.mxu0 %v2007
        %2066 = vmatpush1.msra.mxu0 %v2025
        %2067 = vmatprep.subr.mxu0 %v2011
        %2068 = vmatpush1.msra.mxu0 %v2026
        %2069 = vmatprep.subr.mxu0 %v2015
        %2070 = vmatpush1.msra.mxu0 %v2027
        %2071 = vmatprep.subr.mxu0 %v2019
        %2072 = vmatpush1.msra.mxu0 %v2028
        %2073 = vmatprep.subr.mxu0 0.0
        %2074 = vmatpush1.msra.mxu0 0.0
        %2075 = vmatprep.subr.mxu0 0.0
        %2076 = vmatpush1.msra.mxu0 0.0
        %2077 = vmatprep.subr.mxu0 0.0
        %2078 = vmatpush1.msra.mxu0 0.0
        %2079 = vmatprep.subr.mxu0 0.0
        %2080 = vmatpush1.msra.mxu0 0.0
        %2081 = vmatprep.subr.mxu0 0.0
        %2082 = vmatpush1.msra.mxu0 0.0
        %2083 = vmatprep.subr.mxu0 0.0
        %2084 = vmatpush1.msra.mxu0 0.0
        %2085 = vmatprep.subr.mxu0 0.0
        %2086 = vmatpush1.msra.mxu0 0.0
        %2087 = vmatprep.subr.mxu0 0.0
        %2088 = vmatpush1.msra.mxu0 0.0
        %2089 = vmatprep.subr.mxu0 0.0
        %2090 = vmatpush1.msra.mxu0 0.0
        %2091 = vmatprep.subr.mxu0 0.0
        %2092 = vmatpush1.msra.mxu0 0.0
        %2093 = vmatprep.subr.mxu0 0.0
        %2094 = vmatpush1.msra.mxu0 0.0
        %2095 = vmatprep.subr.mxu0 0.0
        %2096 = vmatpush1.msra.mxu0 0.0
        %2097 = vmatprep.subr.mxu0 0.0
        %2098 = vmatpush1.msra.mxu0 0.0
        %2099 = vmatprep.subr.mxu0 0.0
        %2100 = vmatpush1.msra.mxu0 0.0
        %2101 = vmatprep.subr.mxu0 0.0
        %2102 = vmatpush1.msra.mxu0 0.0
        %2103 = vmatprep.subr.mxu0 0.0
        %2104 = vmatpush1.msra.mxu0 0.0
        %2105 = vmatprep.subr.mxu0 0.0
        %2106 = vmatpush1.msra.mxu0 0.0
        %2107 = vmatprep.subr.mxu0 0.0
        %2108 = vmatpush1.msra.mxu0 0.0
        %2109 = vmatprep.subr.mxu0 0.0
        %2110 = vmatpush1.msra.mxu0 0.0
        %2111 = vmatprep.subr.mxu0 0.0
        %2112 = vmatpush1.msra.mxu0 0.0
        %2113 = vmatprep.subr.mxu0 0.0
        %2114 = vmatpush1.msra.mxu0 0.0
        %2115 = vmatprep.subr.mxu0 0.0
        %2116 = vmatpush1.msra.mxu0 0.0
        %2117 = vmatprep.subr.mxu0 0.0
        %2118 = vmatpush1.msra.mxu0 0.0
        %2119 = vmatprep.subr.mxu0 0.0
        %2120 = vmatpush1.msra.mxu0 0.0
        %2121 = vmatprep.mubr.f32.mxu0 0.0
        %2122 = vmatmul.mubr.f32.gmra.mrb[0].mxu0 %v2046
        %v2123 = vpop.f32.mrb[0].mxu0
        %v2124 = vadd.f32 0.0, %v2123
        %v2125 = vpop.f32.mrb[0].mxu0
        %v2126 = vadd.f32 0.0, %v2125
        %2127 = vmatprep.mubr.f32.mxu0 0.0
        %2128 = vmatmul.mubr.f32.gmra.mrb[0].mxu0 %v2049
        %v2129 = vpop.f32.mrb[0].mxu0
        %v2130 = vadd.f32 0.0, %v2129
        %v2131 = vpop.f32.mrb[0].mxu0
        %v2132 = vadd.f32 0.0, %v2131
        %2133 = vmatprep.mubr.f32.mxu0 0.0
        %2134 = vmatmul.mubr.f32.gmra.mrb[0].mxu0 %v2052
        %v2135 = vpop.f32.mrb[0].mxu0
        %v2136 = vadd.f32 0.0, %v2135
        %v2137 = vpop.f32.mrb[0].mxu0
        %v2138 = vadd.f32 0.0, %v2137
        %2139 = vmatprep.mubr.f32.mxu0 0.0
        %2140 = vmatmul.mubr.f32.gmra.mrb[0].mxu0 %v2055
        %v2141 = vpop.f32.mrb[0].mxu0
        %v2142 = vadd.f32 0.0, %v2141
        %v2143 = vpop.f32.mrb[0].mxu0
        %v2144 = vadd.f32 0.0, %v2143
        %2145 = vdwg.mxu0
        %v2146 = vld [vmem:[#allocation3] sm:$0xff]
        %v2147 = vld [vmem:[#allocation3 + $0x8] sm:$0xff]
        %v2148 = vld [vmem:[#allocation3 + $0x10] sm:$0xff]
        %v2149 = vld [vmem:[#allocation3 + $0x18] sm:$0xff]
        %v2150 = vld [vmem:[#allocation3 + $0x20] sm:$0xff]
        %v2151 = vld [vmem:[#allocation3 + $0x28] sm:$0xff]
        %v2152 = vld [vmem:[#allocation3 + $0x30] sm:$0xff]
        %v2153 = vld [vmem:[#allocation3 + $0x38] sm:$0xff]
        %v2154 = vadd.f32 %v2146, %v2124
        %v2155 = vadd.f32 %v2147, %v2126
        %v2156 = vadd.f32 %v2148, %v2130
        %v2157 = vadd.f32 %v2149, %v2132
        %v2158 = vadd.f32 %v2150, %v2136
        %v2159 = vadd.f32 %v2151, %v2138
        %v2160 = vadd.f32 %v2152, %v2142
        %v2161 = vadd.f32 %v2153, %v2144
        %2162 = vst [vmem:[#allocation3] sm:$0xff] %v2154
        %2163 = vst.msk [vmem:[#allocation3 + $0x8] sm:$0xff] %vm630, %v2155
        %2164 = vst [vmem:[#allocation3 + $0x10] sm:$0xff] %v2156
        %2165 = vst.msk [vmem:[#allocation3 + $0x18] sm:$0xff] %vm630, %v2157
        %2166 = vst [vmem:[#allocation3 + $0x20] sm:$0xff] %v2158
        %2167 = vst.msk [vmem:[#allocation3 + $0x28] sm:$0xff] %vm630, %v2159
        %2168 = vst [vmem:[#allocation3 + $0x30] sm:$0xff] %v2160
        %2169 = vst.msk [vmem:[#allocation3 + $0x38] sm:$0xff] %vm630, %v2161
        %s2170 = scalar_lea.vmem %s2, 256
        %v2171 = vld [vmem:[%s2170] sm:$0xff]
        %v2172 = vld [vmem:[%s2170 + $0x8] sm:$0xff]
        %v2173 = vld [vmem:[%s2170 + $0x10] sm:$0xff]
        %v2174 = vld [vmem:[%s2170 + $0x18] sm:$0xff]
        %v2175 = vld [vmem:[#allocation2] sm:$0xff]
        %v2176 = vld [vmem:[#allocation2 + $0x8] sm:$0xff]
        %v2177 = vld [vmem:[#allocation2 + $0x10] sm:$0xff]
        %v2178 = vld [vmem:[#allocation2 + $0x18] sm:$0xff]
        %v2179 = vld [vmem:[#allocation2 + $0x20] sm:$0xff]
        %v2180 = vld [vmem:[#allocation2 + $0x28] sm:$0xff]
        %v2181 = vld [vmem:[#allocation2 + $0x30] sm:$0xff]
        %v2182 = vld [vmem:[#allocation2 + $0x38] sm:$0xff]
        %v2183 = vld [vmem:[#allocation2 + $0x40] sm:$0xff]
        %v2184 = vld [vmem:[#allocation2 + $0x48] sm:$0xff]
        %v2185 = vld [vmem:[#allocation2 + $0x50] sm:$0xff]
        %v2186 = vld [vmem:[#allocation2 + $0x58] sm:$0xff]
        %v2187 = vld [vmem:[#allocation2 + $0x60] sm:$0xff]
        %v2188 = vld [vmem:[#allocation2 + $0x68] sm:$0xff]
        %v2189 = vld [vmem:[#allocation2 + $0x70] sm:$0xff]
        %v2190 = vld [vmem:[#allocation2 + $0x78] sm:$0xff]
        %2207 = vrot.lane.b32.xlu0 %v2175, 98
        %v2208 = vpop.permute.xlu0 %2207
        %2209 = vrot.lane.b32.xlu0 %v2176, 98
        %v2210 = vpop.permute.xlu0 %2209
        %2211 = vrot.lane.b32.xlu0 %v2177, 98
        %v2212 = vpop.permute.xlu0 %2211
        %2213 = vrot.lane.b32.xlu0 %v2178, 98
        %v2214 = vpop.permute.xlu0 %2213
        %2215 = vrot.lane.b32.xlu0 %v2179, 98
        %v2216 = vpop.permute.xlu0 %2215
        %2217 = vrot.lane.b32.xlu0 %v2180, 98
        %v2218 = vpop.permute.xlu0 %2217
        %2219 = vrot.lane.b32.xlu0 %v2181, 98
        %v2220 = vpop.permute.xlu0 %2219
        %2221 = vrot.lane.b32.xlu0 %v2182, 98
        %v2222 = vpop.permute.xlu0 %2221
        %2223 = vrot.lane.b32.xlu0 %v2183, 98
        %v2224 = vpop.permute.xlu0 %2223
        %2225 = vrot.lane.b32.xlu0 %v2184, 98
        %v2226 = vpop.permute.xlu0 %2225
        %2227 = vrot.lane.b32.xlu0 %v2185, 98
        %v2228 = vpop.permute.xlu0 %2227
        %2229 = vrot.lane.b32.xlu0 %v2186, 98
        %v2230 = vpop.permute.xlu0 %2229
        %2231 = vrot.lane.b32.xlu0 %v2187, 98
        %v2232 = vpop.permute.xlu0 %2231
        %2233 = vrot.lane.b32.xlu0 %v2188, 98
        %v2234 = vpop.permute.xlu0 %2233
        %2235 = vrot.lane.b32.xlu0 %v2189, 98
        %v2236 = vpop.permute.xlu0 %2235
        %2237 = vrot.lane.b32.xlu0 %v2190, 98
        %v2238 = vpop.permute.xlu0 %2237
        %vm2239 = vcmask 801792
        %v2240 = vsel %vm2239, %v2208, %v2210
        %v2241 = vsel %vm2239, %v2212, %v2214
        %v2242 = vsel %vm2239, %v2216, %v2218
        %v2243 = vsel %vm2239, %v2220, %v2222
        %v2244 = vsel %vm2239, %v2224, %v2226
        %v2245 = vsel %vm2239, %v2228, %v2230
        %v2246 = vsel %vm2239, %v2232, %v2234
        %v2247 = vsel %vm2239, %v2236, %v2238
        %v2265 = vsel %vm527, %v2171, 0
        %v2268 = vsel %vm527, %v2172, 0
        %v2271 = vsel %vm527, %v2173, 0
        %v2274 = vsel %vm527, %v2174, 0
        %2276 = vmatprep.subr.mxu0 %v2210
        %2277 = vmatpush1.msra.mxu0 %v2240
        %2278 = vmatprep.subr.mxu0 %v2214
        %2279 = vmatpush1.msra.mxu0 %v2241
        %2280 = vmatprep.subr.mxu0 %v2218
        %2281 = vmatpush1.msra.mxu0 %v2242
        %2282 = vmatprep.subr.mxu0 %v2222
        %2283 = vmatpush1.msra.mxu0 %v2243
        %2284 = vmatprep.subr.mxu0 %v2226
        %2285 = vmatpush1.msra.mxu0 %v2244
        %2286 = vmatprep.subr.mxu0 %v2230
        %2287 = vmatpush1.msra.mxu0 %v2245
        %2288 = vmatprep.subr.mxu0 %v2234
        %2289 = vmatpush1.msra.mxu0 %v2246
        %2290 = vmatprep.subr.mxu0 %v2238
        %2291 = vmatpush1.msra.mxu0 %v2247
        %2292 = vmatprep.subr.mxu0 0.0
        %2293 = vmatpush1.msra.mxu0 0.0
        %2294 = vmatprep.subr.mxu0 0.0
        %2295 = vmatpush1.msra.mxu0 0.0
        %2296 = vmatprep.subr.mxu0 0.0
        %2297 = vmatpush1.msra.mxu0 0.0
        %2298 = vmatprep.subr.mxu0 0.0
        %2299 = vmatpush1.msra.mxu0 0.0
        %2300 = vmatprep.subr.mxu0 0.0
        %2301 = vmatpush1.msra.mxu0 0.0
        %2302 = vmatprep.subr.mxu0 0.0
        %2303 = vmatpush1.msra.mxu0 0.0
        %2304 = vmatprep.subr.mxu0 0.0
        %2305 = vmatpush1.msra.mxu0 0.0
        %2306 = vmatprep.subr.mxu0 0.0
        %2307 = vmatpush1.msra.mxu0 0.0
        %2308 = vmatprep.subr.mxu0 0.0
        %2309 = vmatpush1.msra.mxu0 0.0
        %2310 = vmatprep.subr.mxu0 0.0
        %2311 = vmatpush1.msra.mxu0 0.0
        %2312 = vmatprep.subr.mxu0 0.0
        %2313 = vmatpush1.msra.mxu0 0.0
        %2314 = vmatprep.subr.mxu0 0.0
        %2315 = vmatpush1.msra.mxu0 0.0
        %2316 = vmatprep.subr.mxu0 0.0
        %2317 = vmatpush1.msra.mxu0 0.0
        %2318 = vmatprep.subr.mxu0 0.0
        %2319 = vmatpush1.msra.mxu0 0.0
        %2320 = vmatprep.subr.mxu0 0.0
        %2321 = vmatpush1.msra.mxu0 0.0
        %2322 = vmatprep.subr.mxu0 0.0
        %2323 = vmatpush1.msra.mxu0 0.0
        %2324 = vmatprep.subr.mxu0 0.0
        %2325 = vmatpush1.msra.mxu0 0.0
        %2326 = vmatprep.subr.mxu0 0.0
        %2327 = vmatpush1.msra.mxu0 0.0
        %2328 = vmatprep.subr.mxu0 0.0
        %2329 = vmatpush1.msra.mxu0 0.0
        %2330 = vmatprep.subr.mxu0 0.0
        %2331 = vmatpush1.msra.mxu0 0.0
        %2332 = vmatprep.subr.mxu0 0.0
        %2333 = vmatpush1.msra.mxu0 0.0
        %2334 = vmatprep.subr.mxu0 0.0
        %2335 = vmatpush1.msra.mxu0 0.0
        %2336 = vmatprep.subr.mxu0 0.0
        %2337 = vmatpush1.msra.mxu0 0.0
        %2338 = vmatprep.subr.mxu0 0.0
        %2339 = vmatpush1.msra.mxu0 0.0
        %2340 = vmatprep.mubr.f32.mxu0 0.0
        %2341 = vmatmul.mubr.f32.gmra.mrb[0].mxu0 %v2265
        %v2342 = vpop.f32.mrb[0].mxu0
        %v2343 = vadd.f32 0.0, %v2342
        %v2344 = vpop.f32.mrb[0].mxu0
        %v2345 = vadd.f32 0.0, %v2344
        %2346 = vmatprep.mubr.f32.mxu0 0.0
        %2347 = vmatmul.mubr.f32.gmra.mrb[0].mxu0 %v2268
        %v2348 = vpop.f32.mrb[0].mxu0
        %v2349 = vadd.f32 0.0, %v2348
        %v2350 = vpop.f32.mrb[0].mxu0
        %v2351 = vadd.f32 0.0, %v2350
        %2352 = vmatprep.mubr.f32.mxu0 0.0
        %2353 = vmatmul.mubr.f32.gmra.mrb[0].mxu0 %v2271
        %v2354 = vpop.f32.mrb[0].mxu0
        %v2355 = vadd.f32 0.0, %v2354
        %v2356 = vpop.f32.mrb[0].mxu0
        %v2357 = vadd.f32 0.0, %v2356
        %2358 = vmatprep.mubr.f32.mxu0 0.0
        %2359 = vmatmul.mubr.f32.gmra.mrb[0].mxu0 %v2274
        %v2360 = vpop.f32.mrb[0].mxu0
        %v2361 = vadd.f32 0.0, %v2360
        %v2362 = vpop.f32.mrb[0].mxu0
        %v2363 = vadd.f32 0.0, %v2362
        %2364 = vdwg.mxu0
        %v2365 = vld [vmem:[#allocation3] sm:$0xff]
        %v2366 = vld [vmem:[#allocation3 + $0x8] sm:$0xff]
        %v2367 = vld [vmem:[#allocation3 + $0x10] sm:$0xff]
        %v2368 = vld [vmem:[#allocation3 + $0x18] sm:$0xff]
        %v2369 = vld [vmem:[#allocation3 + $0x20] sm:$0xff]
        %v2370 = vld [vmem:[#allocation3 + $0x28] sm:$0xff]
        %v2371 = vld [vmem:[#allocation3 + $0x30] sm:$0xff]
        %v2372 = vld [vmem:[#allocation3 + $0x38] sm:$0xff]
        %v2373 = vadd.f32 %v2365, %v2343
        %v2374 = vadd.f32 %v2366, %v2345
        %v2375 = vadd.f32 %v2367, %v2349
        %v2376 = vadd.f32 %v2368, %v2351
        %v2377 = vadd.f32 %v2369, %v2355
        %v2378 = vadd.f32 %v2370, %v2357
        %v2379 = vadd.f32 %v2371, %v2361
        %v2380 = vadd.f32 %v2372, %v2363
        %2381 = vst [vmem:[#allocation3] sm:$0xff] %v2373
        %2382 = vst.msk [vmem:[#allocation3 + $0x8] sm:$0xff] %vm630, %v2374
        %2383 = vst [vmem:[#allocation3 + $0x10] sm:$0xff] %v2375
        %2384 = vst.msk [vmem:[#allocation3 + $0x18] sm:$0xff] %vm630, %v2376
        %2385 = vst [vmem:[#allocation3 + $0x20] sm:$0xff] %v2377
        %2386 = vst.msk [vmem:[#allocation3 + $0x28] sm:$0xff] %vm630, %v2378
        %2387 = vst [vmem:[#allocation3 + $0x30] sm:$0xff] %v2379
        %2388 = vst.msk [vmem:[#allocation3 + $0x38] sm:$0xff] %vm630, %v2380
        %v2389 = vld [vmem:[#allocation3] sm:$0xff]
        %v2390 = vld [vmem:[#allocation3 + $0x8] sm:$0xff]
        %v2391 = vld [vmem:[#allocation3 + $0x10] sm:$0xff]
        %v2392 = vld [vmem:[#allocation3 + $0x18] sm:$0xff]
        %v2393 = vld [vmem:[#allocation3 + $0x20] sm:$0xff]
        %v2394 = vld [vmem:[#allocation3 + $0x28] sm:$0xff]
        %v2395 = vld [vmem:[#allocation3 + $0x30] sm:$0xff]
        %v2396 = vld [vmem:[#allocation3 + $0x38] sm:$0xff]
        %v2397 = vld [vmem:[#allocation8] sm:$0xff]
        %v2398 = vld [vmem:[#allocation8 + $0x8] sm:$0xff]
        %v2399 = vld [vmem:[#allocation8 + $0x10] sm:$0xff]
        %v2400 = vld [vmem:[#allocation8 + $0x18] sm:$0xff]
        %v2401 = vld [vmem:[#allocation8 + $0x20] sm:$0xff]
        %v2402 = vld [vmem:[#allocation8 + $0x28] sm:$0xff]
        %v2403 = vld [vmem:[#allocation8 + $0x30] sm:$0xff]
        %v2404 = vld [vmem:[#allocation8 + $0x38] sm:$0xff]
        %v2405 = vadd.f32 %v2389, %v2397
        %v2406 = vadd.f32 %v2390, %v2398
        %v2407 = vadd.f32 %v2391, %v2399
        %v2408 = vadd.f32 %v2392, %v2400
        %v2409 = vadd.f32 %v2393, %v2401
        %v2410 = vadd.f32 %v2394, %v2402
        %v2411 = vadd.f32 %v2395, %v2403
        %v2412 = vadd.f32 %v2396, %v2404
        %v2413 = vmax.f32 %v2405, 0.0
        %v2414 = vmax.f32 %v2406, 0.0
        %v2415 = vmax.f32 %v2407, 0.0
        %v2416 = vmax.f32 %v2408, 0.0
        %v2417 = vmax.f32 %v2409, 0.0
        %v2418 = vmax.f32 %v2410, 0.0
        %v2419 = vmax.f32 %v2411, 0.0
        %v2420 = vmax.f32 %v2412, 0.0
        %2421 = vst [vmem:[#allocation3] sm:$0xff] %v2413
        %2422 = vst.msk [vmem:[#allocation3 + $0x8] sm:$0xff] %vm630, %v2414
        %2423 = vst [vmem:[#allocation3 + $0x10] sm:$0xff] %v2415
        %2424 = vst.msk [vmem:[#allocation3 + $0x18] sm:$0xff] %vm630, %v2416
        %2425 = vst [vmem:[#allocation3 + $0x20] sm:$0xff] %v2417
        %2426 = vst.msk [vmem:[#allocation3 + $0x28] sm:$0xff] %vm630, %v2418
        %2427 = vst [vmem:[#allocation3 + $0x30] sm:$0xff] %v2419
        %2428 = vst.msk [vmem:[#allocation3 + $0x38] sm:$0xff] %vm630, %v2420
        %v2429 = vld [vmem:[%s4] sm:$0xff]
        %v2430 = vld [vmem:[#allocation3] sm:$0xff]
        %v2431 = vld [vmem:[#allocation3 + $0x8] sm:$0xff]
        %v2432 = vld [vmem:[#allocation3 + $0x10] sm:$0xff]
        %v2433 = vld [vmem:[#allocation3 + $0x18] sm:$0xff]
        %v2434 = vld [vmem:[#allocation3 + $0x20] sm:$0xff]
        %v2435 = vld [vmem:[#allocation3 + $0x28] sm:$0xff]
        %v2436 = vld [vmem:[#allocation3 + $0x30] sm:$0xff]
        %v2437 = vld [vmem:[#allocation3 + $0x38] sm:$0xff]
        %vm2438 = vcmask 261120
        %v2440 = vsel %vm2438, %v2429, 0
        %2442 = vmatprep.subr.mxu0 %v2431
        %2443 = vmatpush1.msra.mxu0 %v2430
        %2444 = vmatprep.subr.mxu0 %v2433
        %2445 = vmatpush1.msra.mxu0 %v2432
        %2446 = vmatprep.subr.mxu0 %v2435
        %2447 = vmatpush1.msra.mxu0 %v2434
        %2448 = vmatprep.subr.mxu0 %v2437
        %2449 = vmatpush1.msra.mxu0 %v2436
        %2450 = vmatprep.subr.mxu0 0.0
        %2451 = vmatpush1.msra.mxu0 0.0
        %2452 = vmatprep.subr.mxu0 0.0
        %2453 = vmatpush1.msra.mxu0 0.0
        %2454 = vmatprep.subr.mxu0 0.0
        %2455 = vmatpush1.msra.mxu0 0.0
        %2456 = vmatprep.subr.mxu0 0.0
        %2457 = vmatpush1.msra.mxu0 0.0
        %2458 = vmatprep.subr.mxu0 0.0
        %2459 = vmatpush1.msra.mxu0 0.0
        %2460 = vmatprep.subr.mxu0 0.0
        %2461 = vmatpush1.msra.mxu0 0.0
        %2462 = vmatprep.subr.mxu0 0.0
        %2463 = vmatpush1.msra.mxu0 0.0
        %2464 = vmatprep.subr.mxu0 0.0
        %2465 = vmatpush1.msra.mxu0 0.0
        %2466 = vmatprep.subr.mxu0 0.0
        %2467 = vmatpush1.msra.mxu0 0.0
        %2468 = vmatprep.subr.mxu0 0.0
        %2469 = vmatpush1.msra.mxu0 0.0
        %2470 = vmatprep.subr.mxu0 0.0
        %2471 = vmatpush1.msra.mxu0 0.0
        %2472 = vmatprep.subr.mxu0 0.0
        %2473 = vmatpush1.msra.mxu0 0.0
        %2474 = vmatprep.subr.mxu0 0.0
        %2475 = vmatpush1.msra.mxu0 0.0
        %2476 = vmatprep.subr.mxu0 0.0
        %2477 = vmatpush1.msra.mxu0 0.0
        %2478 = vmatprep.subr.mxu0 0.0
        %2479 = vmatpush1.msra.mxu0 0.0
        %2480 = vmatprep.subr.mxu0 0.0
        %2481 = vmatpush1.msra.mxu0 0.0
        %2482 = vmatprep.subr.mxu0 0.0
        %2483 = vmatpush1.msra.mxu0 0.0
        %2484 = vmatprep.subr.mxu0 0.0
        %2485 = vmatpush1.msra.mxu0 0.0
        %2486 = vmatprep.subr.mxu0 0.0
        %2487 = vmatpush1.msra.mxu0 0.0
        %2488 = vmatprep.subr.mxu0 0.0
        %2489 = vmatpush1.msra.mxu0 0.0
        %2490 = vmatprep.subr.mxu0 0.0
        %2491 = vmatpush1.msra.mxu0 0.0
        %2492 = vmatprep.subr.mxu0 0.0
        %2493 = vmatpush1.msra.mxu0 0.0
        %2494 = vmatprep.subr.mxu0 0.0
        %2495 = vmatpush1.msra.mxu0 0.0
        %2496 = vmatprep.subr.mxu0 0.0
        %2497 = vmatpush1.msra.mxu0 0.0
        %2498 = vmatprep.subr.mxu0 0.0
        %2499 = vmatpush1.msra.mxu0 0.0
        %2500 = vmatprep.subr.mxu0 0.0
        %2501 = vmatpush1.msra.mxu0 0.0
        %2502 = vmatprep.subr.mxu0 0.0
        %2503 = vmatpush1.msra.mxu0 0.0
        %2504 = vmatprep.subr.mxu0 0.0
        %2505 = vmatpush1.msra.mxu0 0.0
        %2506 = vmatprep.mubr.f32.mxu0 0.0
        %2507 = vmatmul.mubr.f32.gmra.mrb[0].mxu0 %v2440
        %v2508 = vpop.f32.mrb[0].mxu0
        %v2509 = vadd.f32 0.0, %v2508
        %v2510 = vpop.f32.mrb[0].mxu0
        %v2511 = vadd.f32 0.0, %v2510
        %2512 = vdwg.mxu0
        %2513 = vst [vmem:[%s278] sm:$0xff] %v2509
        %vm2514 = vcmask 326656
        %2515 = vst.msk [vmem:[%s278 + $0x8] sm:$0xff] %vm2514, %v2511
        %s2516 = scalar_lea.vmem %s4, 8
        %v2517 = vld [vmem:[%s2516] sm:$0xff]
        %v2518 = vld [vmem:[#allocation3] sm:$0xff]
        %v2519 = vld [vmem:[#allocation3 + $0x8] sm:$0xff]
        %v2520 = vld [vmem:[#allocation3 + $0x10] sm:$0xff]
        %v2521 = vld [vmem:[#allocation3 + $0x18] sm:$0xff]
        %v2522 = vld [vmem:[#allocation3 + $0x20] sm:$0xff]
        %v2523 = vld [vmem:[#allocation3 + $0x28] sm:$0xff]
        %v2524 = vld [vmem:[#allocation3 + $0x30] sm:$0xff]
        %v2525 = vld [vmem:[#allocation3 + $0x38] sm:$0xff]
        %2534 = vrot.lane.b32.xlu0 %v2518, 127
        %v2535 = vpop.permute.xlu0 %2534
        %2536 = vrot.lane.b32.xlu0 %v2519, 127
        %v2537 = vpop.permute.xlu0 %2536
        %2538 = vrot.lane.b32.xlu0 %v2520, 127
        %v2539 = vpop.permute.xlu0 %2538
        %2540 = vrot.lane.b32.xlu0 %v2521, 127
        %v2541 = vpop.permute.xlu0 %2540
        %2542 = vrot.lane.b32.xlu0 %v2522, 127
        %v2543 = vpop.permute.xlu0 %2542
        %2544 = vrot.lane.b32.xlu0 %v2523, 127
        %v2545 = vpop.permute.xlu0 %2544
        %2546 = vrot.lane.b32.xlu0 %v2524, 127
        %v2547 = vpop.permute.xlu0 %2546
        %2548 = vrot.lane.b32.xlu0 %v2525, 127
        %v2549 = vpop.permute.xlu0 %2548
        %v2550 = vsel %vm707, %v2535, %v2537
        %v2551 = vsel %vm707, %v2539, %v2541
        %v2552 = vsel %vm707, %v2543, %v2545
        %v2553 = vsel %vm707, %v2547, %v2549
        %v2563 = vsel %vm2438, %v2517, 0
        %2565 = vmatprep.subr.mxu0 %v2537
        %2566 = vmatpush1.msra.mxu0 %v2550
        %2567 = vmatprep.subr.mxu0 %v2541
        %2568 = vmatpush1.msra.mxu0 %v2551
        %2569 = vmatprep.subr.mxu0 %v2545
        %2570 = vmatpush1.msra.mxu0 %v2552
        %2571 = vmatprep.subr.mxu0 %v2549
        %2572 = vmatpush1.msra.mxu0 %v2553
        %2573 = vmatprep.subr.mxu0 0.0
        %2574 = vmatpush1.msra.mxu0 0.0
        %2575 = vmatprep.subr.mxu0 0.0
        %2576 = vmatpush1.msra.mxu0 0.0
        %2577 = vmatprep.subr.mxu0 0.0
        %2578 = vmatpush1.msra.mxu0 0.0
        %2579 = vmatprep.subr.mxu0 0.0
        %2580 = vmatpush1.msra.mxu0 0.0
        %2581 = vmatprep.subr.mxu0 0.0
        %2582 = vmatpush1.msra.mxu0 0.0
        %2583 = vmatprep.subr.mxu0 0.0
        %2584 = vmatpush1.msra.mxu0 0.0
        %2585 = vmatprep.subr.mxu0 0.0
        %2586 = vmatpush1.msra.mxu0 0.0
        %2587 = vmatprep.subr.mxu0 0.0
        %2588 = vmatpush1.msra.mxu0 0.0
        %2589 = vmatprep.subr.mxu0 0.0
        %2590 = vmatpush1.msra.mxu0 0.0
        %2591 = vmatprep.subr.mxu0 0.0
        %2592 = vmatpush1.msra.mxu0 0.0
        %2593 = vmatprep.subr.mxu0 0.0
        %2594 = vmatpush1.msra.mxu0 0.0
        %2595 = vmatprep.subr.mxu0 0.0
        %2596 = vmatpush1.msra.mxu0 0.0
        %2597 = vmatprep.subr.mxu0 0.0
        %2598 = vmatpush1.msra.mxu0 0.0
        %2599 = vmatprep.subr.mxu0 0.0
        %2600 = vmatpush1.msra.mxu0 0.0
        %2601 = vmatprep.subr.mxu0 0.0
        %2602 = vmatpush1.msra.mxu0 0.0
        %2603 = vmatprep.subr.mxu0 0.0
        %2604 = vmatpush1.msra.mxu0 0.0
        %2605 = vmatprep.subr.mxu0 0.0
        %2606 = vmatpush1.msra.mxu0 0.0
        %2607 = vmatprep.subr.mxu0 0.0
        %2608 = vmatpush1.msra.mxu0 0.0
        %2609 = vmatprep.subr.mxu0 0.0
        %2610 = vmatpush1.msra.mxu0 0.0
        %2611 = vmatprep.subr.mxu0 0.0
        %2612 = vmatpush1.msra.mxu0 0.0
        %2613 = vmatprep.subr.mxu0 0.0
        %2614 = vmatpush1.msra.mxu0 0.0
        %2615 = vmatprep.subr.mxu0 0.0
        %2616 = vmatpush1.msra.mxu0 0.0
        %2617 = vmatprep.subr.mxu0 0.0
        %2618 = vmatpush1.msra.mxu0 0.0
        %2619 = vmatprep.subr.mxu0 0.0
        %2620 = vmatpush1.msra.mxu0 0.0
        %2621 = vmatprep.subr.mxu0 0.0
        %2622 = vmatpush1.msra.mxu0 0.0
        %2623 = vmatprep.subr.mxu0 0.0
        %2624 = vmatpush1.msra.mxu0 0.0
        %2625 = vmatprep.subr.mxu0 0.0
        %2626 = vmatpush1.msra.mxu0 0.0
        %2627 = vmatprep.subr.mxu0 0.0
        %2628 = vmatpush1.msra.mxu0 0.0
        %2629 = vmatprep.mubr.f32.mxu0 0.0
        %2630 = vmatmul.mubr.f32.gmra.mrb[0].mxu0 %v2563
        %v2631 = vpop.f32.mrb[0].mxu0
        %v2632 = vadd.f32 0.0, %v2631
        %v2633 = vpop.f32.mrb[0].mxu0
        %v2634 = vadd.f32 0.0, %v2633
        %2635 = vdwg.mxu0
        %v2636 = vld [vmem:[%s278] sm:$0xff]
        %v2637 = vld [vmem:[%s278 + $0x8] sm:$0xff]
        %v2638 = vadd.f32 %v2636, %v2632
        %v2639 = vadd.f32 %v2637, %v2634
        %2640 = vst [vmem:[%s278] sm:$0xff] %v2638
        %2641 = vst.msk [vmem:[%s278 + $0x8] sm:$0xff] %vm2514, %v2639
        %s2642 = scalar_lea.vmem %s4, 16
        %v2643 = vld [vmem:[%s2642] sm:$0xff]
        %v2644 = vld [vmem:[#allocation3] sm:$0xff]
        %v2645 = vld [vmem:[#allocation3 + $0x8] sm:$0xff]
        %v2646 = vld [vmem:[#allocation3 + $0x10] sm:$0xff]
        %v2647 = vld [vmem:[#allocation3 + $0x18] sm:$0xff]
        %v2648 = vld [vmem:[#allocation3 + $0x20] sm:$0xff]
        %v2649 = vld [vmem:[#allocation3 + $0x28] sm:$0xff]
        %v2650 = vld [vmem:[#allocation3 + $0x30] sm:$0xff]
        %v2651 = vld [vmem:[#allocation3 + $0x38] sm:$0xff]
        %2660 = vrot.lane.b32.xlu0 %v2644, 126
        %v2661 = vpop.permute.xlu0 %2660
        %2662 = vrot.lane.b32.xlu0 %v2645, 126
        %v2663 = vpop.permute.xlu0 %2662
        %2664 = vrot.lane.b32.xlu0 %v2646, 126
        %v2665 = vpop.permute.xlu0 %2664
        %2666 = vrot.lane.b32.xlu0 %v2647, 126
        %v2667 = vpop.permute.xlu0 %2666
        %2668 = vrot.lane.b32.xlu0 %v2648, 126
        %v2669 = vpop.permute.xlu0 %2668
        %2670 = vrot.lane.b32.xlu0 %v2649, 126
        %v2671 = vpop.permute.xlu0 %2670
        %2672 = vrot.lane.b32.xlu0 %v2650, 126
        %v2673 = vpop.permute.xlu0 %2672
        %2674 = vrot.lane.b32.xlu0 %v2651, 126
        %v2675 = vpop.permute.xlu0 %2674
        %v2676 = vsel %vm926, %v2661, %v2663
        %v2677 = vsel %vm926, %v2665, %v2667
        %v2678 = vsel %vm926, %v2669, %v2671
        %v2679 = vsel %vm926, %v2673, %v2675
        %v2689 = vsel %vm2438, %v2643, 0
        %2691 = vmatprep.subr.mxu0 %v2663
        %2692 = vmatpush1.msra.mxu0 %v2676
        %2693 = vmatprep.subr.mxu0 %v2667
        %2694 = vmatpush1.msra.mxu0 %v2677
        %2695 = vmatprep.subr.mxu0 %v2671
        %2696 = vmatpush1.msra.mxu0 %v2678
        %2697 = vmatprep.subr.mxu0 %v2675
        %2698 = vmatpush1.msra.mxu0 %v2679
        %2699 = vmatprep.subr.mxu0 0.0
        %2700 = vmatpush1.msra.mxu0 0.0
        %2701 = vmatprep.subr.mxu0 0.0
        %2702 = vmatpush1.msra.mxu0 0.0
        %2703 = vmatprep.subr.mxu0 0.0
        %2704 = vmatpush1.msra.mxu0 0.0
        %2705 = vmatprep.subr.mxu0 0.0
        %2706 = vmatpush1.msra.mxu0 0.0
        %2707 = vmatprep.subr.mxu0 0.0
        %2708 = vmatpush1.msra.mxu0 0.0
        %2709 = vmatprep.subr.mxu0 0.0
        %2710 = vmatpush1.msra.mxu0 0.0
        %2711 = vmatprep.subr.mxu0 0.0
        %2712 = vmatpush1.msra.mxu0 0.0
        %2713 = vmatprep.subr.mxu0 0.0
        %2714 = vmatpush1.msra.mxu0 0.0
        %2715 = vmatprep.subr.mxu0 0.0
        %2716 = vmatpush1.msra.mxu0 0.0
        %2717 = vmatprep.subr.mxu0 0.0
        %2718 = vmatpush1.msra.mxu0 0.0
        %2719 = vmatprep.subr.mxu0 0.0
        %2720 = vmatpush1.msra.mxu0 0.0
        %2721 = vmatprep.subr.mxu0 0.0
        %2722 = vmatpush1.msra.mxu0 0.0
        %2723 = vmatprep.subr.mxu0 0.0
        %2724 = vmatpush1.msra.mxu0 0.0
        %2725 = vmatprep.subr.mxu0 0.0
        %2726 = vmatpush1.msra.mxu0 0.0
        %2727 = vmatprep.subr.mxu0 0.0
        %2728 = vmatpush1.msra.mxu0 0.0
        %2729 = vmatprep.subr.mxu0 0.0
        %2730 = vmatpush1.msra.mxu0 0.0
        %2731 = vmatprep.subr.mxu0 0.0
        %2732 = vmatpush1.msra.mxu0 0.0
        %2733 = vmatprep.subr.mxu0 0.0
        %2734 = vmatpush1.msra.mxu0 0.0
        %2735 = vmatprep.subr.mxu0 0.0
        %2736 = vmatpush1.msra.mxu0 0.0
        %2737 = vmatprep.subr.mxu0 0.0
        %2738 = vmatpush1.msra.mxu0 0.0
        %2739 = vmatprep.subr.mxu0 0.0
        %2740 = vmatpush1.msra.mxu0 0.0
        %2741 = vmatprep.subr.mxu0 0.0
        %2742 = vmatpush1.msra.mxu0 0.0
        %2743 = vmatprep.subr.mxu0 0.0
        %2744 = vmatpush1.msra.mxu0 0.0
        %2745 = vmatprep.subr.mxu0 0.0
        %2746 = vmatpush1.msra.mxu0 0.0
        %2747 = vmatprep.subr.mxu0 0.0
        %2748 = vmatpush1.msra.mxu0 0.0
        %2749 = vmatprep.subr.mxu0 0.0
        %2750 = vmatpush1.msra.mxu0 0.0
        %2751 = vmatprep.subr.mxu0 0.0
        %2752 = vmatpush1.msra.mxu0 0.0
        %2753 = vmatprep.subr.mxu0 0.0
        %2754 = vmatpush1.msra.mxu0 0.0
        %2755 = vmatprep.mubr.f32.mxu0 0.0
        %2756 = vmatmul.mubr.f32.gmra.mrb[0].mxu0 %v2689
        %v2757 = vpop.f32.mrb[0].mxu0
        %v2758 = vadd.f32 0.0, %v2757
        %v2759 = vpop.f32.mrb[0].mxu0
        %v2760 = vadd.f32 0.0, %v2759
        %2761 = vdwg.mxu0
        %v2762 = vld [vmem:[%s278] sm:$0xff]
        %v2763 = vld [vmem:[%s278 + $0x8] sm:$0xff]
        %v2764 = vadd.f32 %v2762, %v2758
        %v2765 = vadd.f32 %v2763, %v2760
        %2766 = vst [vmem:[%s278] sm:$0xff] %v2764
        %2767 = vst.msk [vmem:[%s278 + $0x8] sm:$0xff] %vm2514, %v2765
        %s2768 = scalar_lea.vmem %s4, 24
        %v2769 = vld [vmem:[%s2768] sm:$0xff]
        %v2770 = vld [vmem:[#allocation3] sm:$0xff]
        %v2771 = vld [vmem:[#allocation3 + $0x8] sm:$0xff]
        %v2772 = vld [vmem:[#allocation3 + $0x10] sm:$0xff]
        %v2773 = vld [vmem:[#allocation3 + $0x18] sm:$0xff]
        %v2774 = vld [vmem:[#allocation3 + $0x20] sm:$0xff]
        %v2775 = vld [vmem:[#allocation3 + $0x28] sm:$0xff]
        %v2776 = vld [vmem:[#allocation3 + $0x30] sm:$0xff]
        %v2777 = vld [vmem:[#allocation3 + $0x38] sm:$0xff]
        %2786 = vrot.lane.b32.xlu0 %v2770, 114
        %v2787 = vpop.permute.xlu0 %2786
        %2788 = vrot.lane.b32.xlu0 %v2771, 114
        %v2789 = vpop.permute.xlu0 %2788
        %2790 = vrot.lane.b32.xlu0 %v2772, 114
        %v2791 = vpop.permute.xlu0 %2790
        %2792 = vrot.lane.b32.xlu0 %v2773, 114
        %v2793 = vpop.permute.xlu0 %2792
        %2794 = vrot.lane.b32.xlu0 %v2774, 114
        %v2795 = vpop.permute.xlu0 %2794
        %2796 = vrot.lane.b32.xlu0 %v2775, 114
        %v2797 = vpop.permute.xlu0 %2796
        %2798 = vrot.lane.b32.xlu0 %v2776, 114
        %v2799 = vpop.permute.xlu0 %2798
        %2800 = vrot.lane.b32.xlu0 %v2777, 114
        %v2801 = vpop.permute.xlu0 %2800
        %v2802 = vsel %vm1145, %v2787, %v2789
        %v2803 = vsel %vm1145, %v2791, %v2793
        %v2804 = vsel %vm1145, %v2795, %v2797
        %v2805 = vsel %vm1145, %v2799, %v2801
        %v2815 = vsel %vm2438, %v2769, 0
        %2817 = vmatprep.subr.mxu0 %v2789
        %2818 = vmatpush1.msra.mxu0 %v2802
        %2819 = vmatprep.subr.mxu0 %v2793
        %2820 = vmatpush1.msra.mxu0 %v2803
        %2821 = vmatprep.subr.mxu0 %v2797
        %2822 = vmatpush1.msra.mxu0 %v2804
        %2823 = vmatprep.subr.mxu0 %v2801
        %2824 = vmatpush1.msra.mxu0 %v2805
        %2825 = vmatprep.subr.mxu0 0.0
        %2826 = vmatpush1.msra.mxu0 0.0
        %2827 = vmatprep.subr.mxu0 0.0
        %2828 = vmatpush1.msra.mxu0 0.0
        %2829 = vmatprep.subr.mxu0 0.0
        %2830 = vmatpush1.msra.mxu0 0.0
        %2831 = vmatprep.subr.mxu0 0.0
        %2832 = vmatpush1.msra.mxu0 0.0
        %2833 = vmatprep.subr.mxu0 0.0
        %2834 = vmatpush1.msra.mxu0 0.0
        %2835 = vmatprep.subr.mxu0 0.0
        %2836 = vmatpush1.msra.mxu0 0.0
        %2837 = vmatprep.subr.mxu0 0.0
        %2838 = vmatpush1.msra.mxu0 0.0
        %2839 = vmatprep.subr.mxu0 0.0
        %2840 = vmatpush1.msra.mxu0 0.0
        %2841 = vmatprep.subr.mxu0 0.0
        %2842 = vmatpush1.msra.mxu0 0.0
        %2843 = vmatprep.subr.mxu0 0.0
        %2844 = vmatpush1.msra.mxu0 0.0
        %2845 = vmatprep.subr.mxu0 0.0
        %2846 = vmatpush1.msra.mxu0 0.0
        %2847 = vmatprep.subr.mxu0 0.0
        %2848 = vmatpush1.msra.mxu0 0.0
        %2849 = vmatprep.subr.mxu0 0.0
        %2850 = vmatpush1.msra.mxu0 0.0
        %2851 = vmatprep.subr.mxu0 0.0
        %2852 = vmatpush1.msra.mxu0 0.0
        %2853 = vmatprep.subr.mxu0 0.0
        %2854 = vmatpush1.msra.mxu0 0.0
        %2855 = vmatprep.subr.mxu0 0.0
        %2856 = vmatpush1.msra.mxu0 0.0
        %2857 = vmatprep.subr.mxu0 0.0
        %2858 = vmatpush1.msra.mxu0 0.0
        %2859 = vmatprep.subr.mxu0 0.0
        %2860 = vmatpush1.msra.mxu0 0.0
        %2861 = vmatprep.subr.mxu0 0.0
        %2862 = vmatpush1.msra.mxu0 0.0
        %2863 = vmatprep.subr.mxu0 0.0
        %2864 = vmatpush1.msra.mxu0 0.0
        %2865 = vmatprep.subr.mxu0 0.0
        %2866 = vmatpush1.msra.mxu0 0.0
        %2867 = vmatprep.subr.mxu0 0.0
        %2868 = vmatpush1.msra.mxu0 0.0
        %2869 = vmatprep.subr.mxu0 0.0
        %2870 = vmatpush1.msra.mxu0 0.0
        %2871 = vmatprep.subr.mxu0 0.0
        %2872 = vmatpush1.msra.mxu0 0.0
        %2873 = vmatprep.subr.mxu0 0.0
        %2874 = vmatpush1.msra.mxu0 0.0
        %2875 = vmatprep.subr.mxu0 0.0
        %2876 = vmatpush1.msra.mxu0 0.0
        %2877 = vmatprep.subr.mxu0 0.0
        %2878 = vmatpush1.msra.mxu0 0.0
        %2879 = vmatprep.subr.mxu0 0.0
        %2880 = vmatpush1.msra.mxu0 0.0
        %2881 = vmatprep.mubr.f32.mxu0 0.0
        %2882 = vmatmul.mubr.f32.gmra.mrb[0].mxu0 %v2815
        %v2883 = vpop.f32.mrb[0].mxu0
        %v2884 = vadd.f32 0.0, %v2883
        %v2885 = vpop.f32.mrb[0].mxu0
        %v2886 = vadd.f32 0.0, %v2885
        %2887 = vdwg.mxu0
        %v2888 = vld [vmem:[%s278] sm:$0xff]
        %v2889 = vld [vmem:[%s278 + $0x8] sm:$0xff]
        %v2890 = vadd.f32 %v2888, %v2884
        %v2891 = vadd.f32 %v2889, %v2886
        %2892 = vst [vmem:[%s278] sm:$0xff] %v2890
        %2893 = vst.msk [vmem:[%s278 + $0x8] sm:$0xff] %vm2514, %v2891
        %s2894 = scalar_lea.vmem %s4, 32
        %v2895 = vld [vmem:[%s2894] sm:$0xff]
        %v2896 = vld [vmem:[#allocation3] sm:$0xff]
        %v2897 = vld [vmem:[#allocation3 + $0x8] sm:$0xff]
        %v2898 = vld [vmem:[#allocation3 + $0x10] sm:$0xff]
        %v2899 = vld [vmem:[#allocation3 + $0x18] sm:$0xff]
        %v2900 = vld [vmem:[#allocation3 + $0x20] sm:$0xff]
        %v2901 = vld [vmem:[#allocation3 + $0x28] sm:$0xff]
        %v2902 = vld [vmem:[#allocation3 + $0x30] sm:$0xff]
        %v2903 = vld [vmem:[#allocation3 + $0x38] sm:$0xff]
        %2912 = vrot.lane.b32.xlu0 %v2896, 113
        %v2913 = vpop.permute.xlu0 %2912
        %2914 = vrot.lane.b32.xlu0 %v2897, 113
        %v2915 = vpop.permute.xlu0 %2914
        %2916 = vrot.lane.b32.xlu0 %v2898, 113
        %v2917 = vpop.permute.xlu0 %2916
        %2918 = vrot.lane.b32.xlu0 %v2899, 113
        %v2919 = vpop.permute.xlu0 %2918
        %2920 = vrot.lane.b32.xlu0 %v2900, 113
        %v2921 = vpop.permute.xlu0 %2920
        %2922 = vrot.lane.b32.xlu0 %v2901, 113
        %v2923 = vpop.permute.xlu0 %2922
        %2924 = vrot.lane.b32.xlu0 %v2902, 113
        %v2925 = vpop.permute.xlu0 %2924
        %2926 = vrot.lane.b32.xlu0 %v2903, 113
        %v2927 = vpop.permute.xlu0 %2926
        %v2928 = vsel %vm1364, %v2913, %v2915
        %v2929 = vsel %vm1364, %v2917, %v2919
        %v2930 = vsel %vm1364, %v2921, %v2923
        %v2931 = vsel %vm1364, %v2925, %v2927
        %v2941 = vsel %vm2438, %v2895, 0
        %2943 = vmatprep.subr.mxu0 %v2915
        %2944 = vmatpush1.msra.mxu0 %v2928
        %2945 = vmatprep.subr.mxu0 %v2919
        %2946 = vmatpush1.msra.mxu0 %v2929
        %2947 = vmatprep.subr.mxu0 %v2923
        %2948 = vmatpush1.msra.mxu0 %v2930
        %2949 = vmatprep.subr.mxu0 %v2927
        %2950 = vmatpush1.msra.mxu0 %v2931
        %2951 = vmatprep.subr.mxu0 0.0
        %2952 = vmatpush1.msra.mxu0 0.0
        %2953 = vmatprep.subr.mxu0 0.0
        %2954 = vmatpush1.msra.mxu0 0.0
        %2955 = vmatprep.subr.mxu0 0.0
        %2956 = vmatpush1.msra.mxu0 0.0
        %2957 = vmatprep.subr.mxu0 0.0
        %2958 = vmatpush1.msra.mxu0 0.0
        %2959 = vmatprep.subr.mxu0 0.0
        %2960 = vmatpush1.msra.mxu0 0.0
        %2961 = vmatprep.subr.mxu0 0.0
        %2962 = vmatpush1.msra.mxu0 0.0
        %2963 = vmatprep.subr.mxu0 0.0
        %2964 = vmatpush1.msra.mxu0 0.0
        %2965 = vmatprep.subr.mxu0 0.0
        %2966 = vmatpush1.msra.mxu0 0.0
        %2967 = vmatprep.subr.mxu0 0.0
        %2968 = vmatpush1.msra.mxu0 0.0
        %2969 = vmatprep.subr.mxu0 0.0
        %2970 = vmatpush1.msra.mxu0 0.0
        %2971 = vmatprep.subr.mxu0 0.0
        %2972 = vmatpush1.msra.mxu0 0.0
        %2973 = vmatprep.subr.mxu0 0.0
        %2974 = vmatpush1.msra.mxu0 0.0
        %2975 = vmatprep.subr.mxu0 0.0
        %2976 = vmatpush1.msra.mxu0 0.0
        %2977 = vmatprep.subr.mxu0 0.0
        %2978 = vmatpush1.msra.mxu0 0.0
        %2979 = vmatprep.subr.mxu0 0.0
        %2980 = vmatpush1.msra.mxu0 0.0
        %2981 = vmatprep.subr.mxu0 0.0
        %2982 = vmatpush1.msra.mxu0 0.0
        %2983 = vmatprep.subr.mxu0 0.0
        %2984 = vmatpush1.msra.mxu0 0.0
        %2985 = vmatprep.subr.mxu0 0.0
        %2986 = vmatpush1.msra.mxu0 0.0
        %2987 = vmatprep.subr.mxu0 0.0
        %2988 = vmatpush1.msra.mxu0 0.0
        %2989 = vmatprep.subr.mxu0 0.0
        %2990 = vmatpush1.msra.mxu0 0.0
        %2991 = vmatprep.subr.mxu0 0.0
        %2992 = vmatpush1.msra.mxu0 0.0
        %2993 = vmatprep.subr.mxu0 0.0
        %2994 = vmatpush1.msra.mxu0 0.0
        %2995 = vmatprep.subr.mxu0 0.0
        %2996 = vmatpush1.msra.mxu0 0.0
        %2997 = vmatprep.subr.mxu0 0.0
        %2998 = vmatpush1.msra.mxu0 0.0
        %2999 = vmatprep.subr.mxu0 0.0
        %3000 = vmatpush1.msra.mxu0 0.0
        %3001 = vmatprep.subr.mxu0 0.0
        %3002 = vmatpush1.msra.mxu0 0.0
        %3003 = vmatprep.subr.mxu0 0.0
        %3004 = vmatpush1.msra.mxu0 0.0
        %3005 = vmatprep.subr.mxu0 0.0
        %3006 = vmatpush1.msra.mxu0 0.0
        %3007 = vmatprep.mubr.f32.mxu0 0.0
        %3008 = vmatmul.mubr.f32.gmra.mrb[0].mxu0 %v2941
        %v3009 = vpop.f32.mrb[0].mxu0
        %v3010 = vadd.f32 0.0, %v3009
        %v3011 = vpop.f32.mrb[0].mxu0
        %v3012 = vadd.f32 0.0, %v3011
        %3013 = vdwg.mxu0
        %v3014 = vld [vmem:[%s278] sm:$0xff]
        %v3015 = vld [vmem:[%s278 + $0x8] sm:$0xff]
        %v3016 = vadd.f32 %v3014, %v3010
        %v3017 = vadd.f32 %v3015, %v3012
        %3018 = vst [vmem:[%s278] sm:$0xff] %v3016
        %3019 = vst.msk [vmem:[%s278 + $0x8] sm:$0xff] %vm2514, %v3017
        %s3020 = scalar_lea.vmem %s4, 40
        %v3021 = vld [vmem:[%s3020] sm:$0xff]
        %v3022 = vld [vmem:[#allocation3] sm:$0xff]
        %v3023 = vld [vmem:[#allocation3 + $0x8] sm:$0xff]
        %v3024 = vld [vmem:[#allocation3 + $0x10] sm:$0xff]
        %v3025 = vld [vmem:[#allocation3 + $0x18] sm:$0xff]
        %v3026 = vld [vmem:[#allocation3 + $0x20] sm:$0xff]
        %v3027 = vld [vmem:[#allocation3 + $0x28] sm:$0xff]
        %v3028 = vld [vmem:[#allocation3 + $0x30] sm:$0xff]
        %v3029 = vld [vmem:[#allocation3 + $0x38] sm:$0xff]
        %3038 = vrot.lane.b32.xlu0 %v3022, 112
        %v3039 = vpop.permute.xlu0 %3038
        %3040 = vrot.lane.b32.xlu0 %v3023, 112
        %v3041 = vpop.permute.xlu0 %3040
        %3042 = vrot.lane.b32.xlu0 %v3024, 112
        %v3043 = vpop.permute.xlu0 %3042
        %3044 = vrot.lane.b32.xlu0 %v3025, 112
        %v3045 = vpop.permute.xlu0 %3044
        %3046 = vrot.lane.b32.xlu0 %v3026, 112
        %v3047 = vpop.permute.xlu0 %3046
        %3048 = vrot.lane.b32.xlu0 %v3027, 112
        %v3049 = vpop.permute.xlu0 %3048
        %3050 = vrot.lane.b32.xlu0 %v3028, 112
        %v3051 = vpop.permute.xlu0 %3050
        %3052 = vrot.lane.b32.xlu0 %v3029, 112
        %v3053 = vpop.permute.xlu0 %3052
        %v3054 = vsel %vm1583, %v3039, %v3041
        %v3055 = vsel %vm1583, %v3043, %v3045
        %v3056 = vsel %vm1583, %v3047, %v3049
        %v3057 = vsel %vm1583, %v3051, %v3053
        %v3067 = vsel %vm2438, %v3021, 0
        %3069 = vmatprep.subr.mxu0 %v3041
        %3070 = vmatpush1.msra.mxu0 %v3054
        %3071 = vmatprep.subr.mxu0 %v3045
        %3072 = vmatpush1.msra.mxu0 %v3055
        %3073 = vmatprep.subr.mxu0 %v3049
        %3074 = vmatpush1.msra.mxu0 %v3056
        %3075 = vmatprep.subr.mxu0 %v3053
        %3076 = vmatpush1.msra.mxu0 %v3057
        %3077 = vmatprep.subr.mxu0 0.0
        %3078 = vmatpush1.msra.mxu0 0.0
        %3079 = vmatprep.subr.mxu0 0.0
        %3080 = vmatpush1.msra.mxu0 0.0
        %3081 = vmatprep.subr.mxu0 0.0
        %3082 = vmatpush1.msra.mxu0 0.0
        %3083 = vmatprep.subr.mxu0 0.0
        %3084 = vmatpush1.msra.mxu0 0.0
        %3085 = vmatprep.subr.mxu0 0.0
        %3086 = vmatpush1.msra.mxu0 0.0
        %3087 = vmatprep.subr.mxu0 0.0
        %3088 = vmatpush1.msra.mxu0 0.0
        %3089 = vmatprep.subr.mxu0 0.0
        %3090 = vmatpush1.msra.mxu0 0.0
        %3091 = vmatprep.subr.mxu0 0.0
        %3092 = vmatpush1.msra.mxu0 0.0
        %3093 = vmatprep.subr.mxu0 0.0
        %3094 = vmatpush1.msra.mxu0 0.0
        %3095 = vmatprep.subr.mxu0 0.0
        %3096 = vmatpush1.msra.mxu0 0.0
        %3097 = vmatprep.subr.mxu0 0.0
        %3098 = vmatpush1.msra.mxu0 0.0
        %3099 = vmatprep.subr.mxu0 0.0
        %3100 = vmatpush1.msra.mxu0 0.0
        %3101 = vmatprep.subr.mxu0 0.0
        %3102 = vmatpush1.msra.mxu0 0.0
        %3103 = vmatprep.subr.mxu0 0.0
        %3104 = vmatpush1.msra.mxu0 0.0
        %3105 = vmatprep.subr.mxu0 0.0
        %3106 = vmatpush1.msra.mxu0 0.0
        %3107 = vmatprep.subr.mxu0 0.0
        %3108 = vmatpush1.msra.mxu0 0.0
        %3109 = vmatprep.subr.mxu0 0.0
        %3110 = vmatpush1.msra.mxu0 0.0
        %3111 = vmatprep.subr.mxu0 0.0
        %3112 = vmatpush1.msra.mxu0 0.0
        %3113 = vmatprep.subr.mxu0 0.0
        %3114 = vmatpush1.msra.mxu0 0.0
        %3115 = vmatprep.subr.mxu0 0.0
        %3116 = vmatpush1.msra.mxu0 0.0
        %3117 = vmatprep.subr.mxu0 0.0
        %3118 = vmatpush1.msra.mxu0 0.0
        %3119 = vmatprep.subr.mxu0 0.0
        %3120 = vmatpush1.msra.mxu0 0.0
        %3121 = vmatprep.subr.mxu0 0.0
        %3122 = vmatpush1.msra.mxu0 0.0
        %3123 = vmatprep.subr.mxu0 0.0
        %3124 = vmatpush1.msra.mxu0 0.0
        %3125 = vmatprep.subr.mxu0 0.0
        %3126 = vmatpush1.msra.mxu0 0.0
        %3127 = vmatprep.subr.mxu0 0.0
        %3128 = vmatpush1.msra.mxu0 0.0
        %3129 = vmatprep.subr.mxu0 0.0
        %3130 = vmatpush1.msra.mxu0 0.0
        %3131 = vmatprep.subr.mxu0 0.0
        %3132 = vmatpush1.msra.mxu0 0.0
        %3133 = vmatprep.mubr.f32.mxu0 0.0
        %3134 = vmatmul.mubr.f32.gmra.mrb[0].mxu0 %v3067
        %v3135 = vpop.f32.mrb[0].mxu0
        %v3136 = vadd.f32 0.0, %v3135
        %v3137 = vpop.f32.mrb[0].mxu0
        %v3138 = vadd.f32 0.0, %v3137
        %3139 = vdwg.mxu0
        %v3140 = vld [vmem:[%s278] sm:$0xff]
        %v3141 = vld [vmem:[%s278 + $0x8] sm:$0xff]
        %v3142 = vadd.f32 %v3140, %v3136
        %v3143 = vadd.f32 %v3141, %v3138
        %3144 = vst [vmem:[%s278] sm:$0xff] %v3142
        %3145 = vst.msk [vmem:[%s278 + $0x8] sm:$0xff] %vm2514, %v3143
        %s3146 = scalar_lea.vmem %s4, 48
        %v3147 = vld [vmem:[%s3146] sm:$0xff]
        %v3148 = vld [vmem:[#allocation3] sm:$0xff]
        %v3149 = vld [vmem:[#allocation3 + $0x8] sm:$0xff]
        %v3150 = vld [vmem:[#allocation3 + $0x10] sm:$0xff]
        %v3151 = vld [vmem:[#allocation3 + $0x18] sm:$0xff]
        %v3152 = vld [vmem:[#allocation3 + $0x20] sm:$0xff]
        %v3153 = vld [vmem:[#allocation3 + $0x28] sm:$0xff]
        %v3154 = vld [vmem:[#allocation3 + $0x30] sm:$0xff]
        %v3155 = vld [vmem:[#allocation3 + $0x38] sm:$0xff]
        %3164 = vrot.lane.b32.xlu0 %v3148, 100
        %v3165 = vpop.permute.xlu0 %3164
        %3166 = vrot.lane.b32.xlu0 %v3149, 100
        %v3167 = vpop.permute.xlu0 %3166
        %3168 = vrot.lane.b32.xlu0 %v3150, 100
        %v3169 = vpop.permute.xlu0 %3168
        %3170 = vrot.lane.b32.xlu0 %v3151, 100
        %v3171 = vpop.permute.xlu0 %3170
        %3172 = vrot.lane.b32.xlu0 %v3152, 100
        %v3173 = vpop.permute.xlu0 %3172
        %3174 = vrot.lane.b32.xlu0 %v3153, 100
        %v3175 = vpop.permute.xlu0 %3174
        %3176 = vrot.lane.b32.xlu0 %v3154, 100
        %v3177 = vpop.permute.xlu0 %3176
        %3178 = vrot.lane.b32.xlu0 %v3155, 100
        %v3179 = vpop.permute.xlu0 %3178
        %v3180 = vsel %vm491, %v3165, %v3167
        %v3181 = vsel %vm491, %v3169, %v3171
        %v3182 = vsel %vm491, %v3173, %v3175
        %v3183 = vsel %vm491, %v3177, %v3179
        %v3193 = vsel %vm2438, %v3147, 0
        %3195 = vmatprep.subr.mxu0 %v3167
        %3196 = vmatpush1.msra.mxu0 %v3180
        %3197 = vmatprep.subr.mxu0 %v3171
        %3198 = vmatpush1.msra.mxu0 %v3181
        %3199 = vmatprep.subr.mxu0 %v3175
        %3200 = vmatpush1.msra.mxu0 %v3182
        %3201 = vmatprep.subr.mxu0 %v3179
        %3202 = vmatpush1.msra.mxu0 %v3183
        %3203 = vmatprep.subr.mxu0 0.0
        %3204 = vmatpush1.msra.mxu0 0.0
        %3205 = vmatprep.subr.mxu0 0.0
        %3206 = vmatpush1.msra.mxu0 0.0
        %3207 = vmatprep.subr.mxu0 0.0
        %3208 = vmatpush1.msra.mxu0 0.0
        %3209 = vmatprep.subr.mxu0 0.0
        %3210 = vmatpush1.msra.mxu0 0.0
        %3211 = vmatprep.subr.mxu0 0.0
        %3212 = vmatpush1.msra.mxu0 0.0
        %3213 = vmatprep.subr.mxu0 0.0
        %3214 = vmatpush1.msra.mxu0 0.0
        %3215 = vmatprep.subr.mxu0 0.0
        %3216 = vmatpush1.msra.mxu0 0.0
        %3217 = vmatprep.subr.mxu0 0.0
        %3218 = vmatpush1.msra.mxu0 0.0
        %3219 = vmatprep.subr.mxu0 0.0
        %3220 = vmatpush1.msra.mxu0 0.0
        %3221 = vmatprep.subr.mxu0 0.0
        %3222 = vmatpush1.msra.mxu0 0.0
        %3223 = vmatprep.subr.mxu0 0.0
        %3224 = vmatpush1.msra.mxu0 0.0
        %3225 = vmatprep.subr.mxu0 0.0
        %3226 = vmatpush1.msra.mxu0 0.0
        %3227 = vmatprep.subr.mxu0 0.0
        %3228 = vmatpush1.msra.mxu0 0.0
        %3229 = vmatprep.subr.mxu0 0.0
        %3230 = vmatpush1.msra.mxu0 0.0
        %3231 = vmatprep.subr.mxu0 0.0
        %3232 = vmatpush1.msra.mxu0 0.0
        %3233 = vmatprep.subr.mxu0 0.0
        %3234 = vmatpush1.msra.mxu0 0.0
        %3235 = vmatprep.subr.mxu0 0.0
        %3236 = vmatpush1.msra.mxu0 0.0
        %3237 = vmatprep.subr.mxu0 0.0
        %3238 = vmatpush1.msra.mxu0 0.0
        %3239 = vmatprep.subr.mxu0 0.0
        %3240 = vmatpush1.msra.mxu0 0.0
        %3241 = vmatprep.subr.mxu0 0.0
        %3242 = vmatpush1.msra.mxu0 0.0
        %3243 = vmatprep.subr.mxu0 0.0
        %3244 = vmatpush1.msra.mxu0 0.0
        %3245 = vmatprep.subr.mxu0 0.0
        %3246 = vmatpush1.msra.mxu0 0.0
        %3247 = vmatprep.subr.mxu0 0.0
        %3248 = vmatpush1.msra.mxu0 0.0
        %3249 = vmatprep.subr.mxu0 0.0
        %3250 = vmatpush1.msra.mxu0 0.0
        %3251 = vmatprep.subr.mxu0 0.0
        %3252 = vmatpush1.msra.mxu0 0.0
        %3253 = vmatprep.subr.mxu0 0.0
        %3254 = vmatpush1.msra.mxu0 0.0
        %3255 = vmatprep.subr.mxu0 0.0
        %3256 = vmatpush1.msra.mxu0 0.0
        %3257 = vmatprep.subr.mxu0 0.0
        %3258 = vmatpush1.msra.mxu0 0.0
        %3259 = vmatprep.mubr.f32.mxu0 0.0
        %3260 = vmatmul.mubr.f32.gmra.mrb[0].mxu0 %v3193
        %v3261 = vpop.f32.mrb[0].mxu0
        %v3262 = vadd.f32 0.0, %v3261
        %v3263 = vpop.f32.mrb[0].mxu0
        %v3264 = vadd.f32 0.0, %v3263
        %3265 = vdwg.mxu0
        %v3266 = vld [vmem:[%s278] sm:$0xff]
        %v3267 = vld [vmem:[%s278 + $0x8] sm:$0xff]
        %v3268 = vadd.f32 %v3266, %v3262
        %v3269 = vadd.f32 %v3267, %v3264
        %3270 = vst [vmem:[%s278] sm:$0xff] %v3268
        %3271 = vst.msk [vmem:[%s278 + $0x8] sm:$0xff] %vm2514, %v3269
        %s3272 = scalar_lea.vmem %s4, 56
        %v3273 = vld [vmem:[%s3272] sm:$0xff]
        %v3274 = vld [vmem:[#allocation3] sm:$0xff]
        %v3275 = vld [vmem:[#allocation3 + $0x8] sm:$0xff]
        %v3276 = vld [vmem:[#allocation3 + $0x10] sm:$0xff]
        %v3277 = vld [vmem:[#allocation3 + $0x18] sm:$0xff]
        %v3278 = vld [vmem:[#allocation3 + $0x20] sm:$0xff]
        %v3279 = vld [vmem:[#allocation3 + $0x28] sm:$0xff]
        %v3280 = vld [vmem:[#allocation3 + $0x30] sm:$0xff]
        %v3281 = vld [vmem:[#allocation3 + $0x38] sm:$0xff]
        %3290 = vrot.lane.b32.xlu0 %v3274, 99
        %v3291 = vpop.permute.xlu0 %3290
        %3292 = vrot.lane.b32.xlu0 %v3275, 99
        %v3293 = vpop.permute.xlu0 %3292
        %3294 = vrot.lane.b32.xlu0 %v3276, 99
        %v3295 = vpop.permute.xlu0 %3294
        %3296 = vrot.lane.b32.xlu0 %v3277, 99
        %v3297 = vpop.permute.xlu0 %3296
        %3298 = vrot.lane.b32.xlu0 %v3278, 99
        %v3299 = vpop.permute.xlu0 %3298
        %3300 = vrot.lane.b32.xlu0 %v3279, 99
        %v3301 = vpop.permute.xlu0 %3300
        %3302 = vrot.lane.b32.xlu0 %v3280, 99
        %v3303 = vpop.permute.xlu0 %3302
        %3304 = vrot.lane.b32.xlu0 %v3281, 99
        %v3305 = vpop.permute.xlu0 %3304
        %v3306 = vsel %vm2020, %v3291, %v3293
        %v3307 = vsel %vm2020, %v3295, %v3297
        %v3308 = vsel %vm2020, %v3299, %v3301
        %v3309 = vsel %vm2020, %v3303, %v3305
        %v3319 = vsel %vm2438, %v3273, 0
        %3321 = vmatprep.subr.mxu0 %v3293
        %3322 = vmatpush1.msra.mxu0 %v3306
        %3323 = vmatprep.subr.mxu0 %v3297
        %3324 = vmatpush1.msra.mxu0 %v3307
        %3325 = vmatprep.subr.mxu0 %v3301
        %3326 = vmatpush1.msra.mxu0 %v3308
        %3327 = vmatprep.subr.mxu0 %v3305
        %3328 = vmatpush1.msra.mxu0 %v3309
        %3329 = vmatprep.subr.mxu0 0.0
        %3330 = vmatpush1.msra.mxu0 0.0
        %3331 = vmatprep.subr.mxu0 0.0
        %3332 = vmatpush1.msra.mxu0 0.0
        %3333 = vmatprep.subr.mxu0 0.0
        %3334 = vmatpush1.msra.mxu0 0.0
        %3335 = vmatprep.subr.mxu0 0.0
        %3336 = vmatpush1.msra.mxu0 0.0
        %3337 = vmatprep.subr.mxu0 0.0
        %3338 = vmatpush1.msra.mxu0 0.0
        %3339 = vmatprep.subr.mxu0 0.0
        %3340 = vmatpush1.msra.mxu0 0.0
        %3341 = vmatprep.subr.mxu0 0.0
        %3342 = vmatpush1.msra.mxu0 0.0
        %3343 = vmatprep.subr.mxu0 0.0
        %3344 = vmatpush1.msra.mxu0 0.0
        %3345 = vmatprep.subr.mxu0 0.0
        %3346 = vmatpush1.msra.mxu0 0.0
        %3347 = vmatprep.subr.mxu0 0.0
        %3348 = vmatpush1.msra.mxu0 0.0
        %3349 = vmatprep.subr.mxu0 0.0
        %3350 = vmatpush1.msra.mxu0 0.0
        %3351 = vmatprep.subr.mxu0 0.0
        %3352 = vmatpush1.msra.mxu0 0.0
        %3353 = vmatprep.subr.mxu0 0.0
        %3354 = vmatpush1.msra.mxu0 0.0
        %3355 = vmatprep.subr.mxu0 0.0
        %3356 = vmatpush1.msra.mxu0 0.0
        %3357 = vmatprep.subr.mxu0 0.0
        %3358 = vmatpush1.msra.mxu0 0.0
        %3359 = vmatprep.subr.mxu0 0.0
        %3360 = vmatpush1.msra.mxu0 0.0
        %3361 = vmatprep.subr.mxu0 0.0
        %3362 = vmatpush1.msra.mxu0 0.0
        %3363 = vmatprep.subr.mxu0 0.0
        %3364 = vmatpush1.msra.mxu0 0.0
        %3365 = vmatprep.subr.mxu0 0.0
        %3366 = vmatpush1.msra.mxu0 0.0
        %3367 = vmatprep.subr.mxu0 0.0
        %3368 = vmatpush1.msra.mxu0 0.0
        %3369 = vmatprep.subr.mxu0 0.0
        %3370 = vmatpush1.msra.mxu0 0.0
        %3371 = vmatprep.subr.mxu0 0.0
        %3372 = vmatpush1.msra.mxu0 0.0
        %3373 = vmatprep.subr.mxu0 0.0
        %3374 = vmatpush1.msra.mxu0 0.0
        %3375 = vmatprep.subr.mxu0 0.0
        %3376 = vmatpush1.msra.mxu0 0.0
        %3377 = vmatprep.subr.mxu0 0.0
        %3378 = vmatpush1.msra.mxu0 0.0
        %3379 = vmatprep.subr.mxu0 0.0
        %3380 = vmatpush1.msra.mxu0 0.0
        %3381 = vmatprep.subr.mxu0 0.0
        %3382 = vmatpush1.msra.mxu0 0.0
        %3383 = vmatprep.subr.mxu0 0.0
        %3384 = vmatpush1.msra.mxu0 0.0
        %3385 = vmatprep.mubr.f32.mxu0 0.0
        %3386 = vmatmul.mubr.f32.gmra.mrb[0].mxu0 %v3319
        %v3387 = vpop.f32.mrb[0].mxu0
        %v3388 = vadd.f32 0.0, %v3387
        %v3389 = vpop.f32.mrb[0].mxu0
        %v3390 = vadd.f32 0.0, %v3389
        %3391 = vdwg.mxu0
        %v3392 = vld [vmem:[%s278] sm:$0xff]
        %v3393 = vld [vmem:[%s278 + $0x8] sm:$0xff]
        %v3394 = vadd.f32 %v3392, %v3388
        %v3395 = vadd.f32 %v3393, %v3390
        %3396 = vst [vmem:[%s278] sm:$0xff] %v3394
        %3397 = vst.msk [vmem:[%s278 + $0x8] sm:$0xff] %vm2514, %v3395
        %s3398 = scalar_lea.vmem %s4, 64
        %v3399 = vld [vmem:[%s3398] sm:$0xff]
        %v3400 = vld [vmem:[#allocation3] sm:$0xff]
        %v3401 = vld [vmem:[#allocation3 + $0x8] sm:$0xff]
        %v3402 = vld [vmem:[#allocation3 + $0x10] sm:$0xff]
        %v3403 = vld [vmem:[#allocation3 + $0x18] sm:$0xff]
        %v3404 = vld [vmem:[#allocation3 + $0x20] sm:$0xff]
        %v3405 = vld [vmem:[#allocation3 + $0x28] sm:$0xff]
        %v3406 = vld [vmem:[#allocation3 + $0x30] sm:$0xff]
        %v3407 = vld [vmem:[#allocation3 + $0x38] sm:$0xff]
        %3416 = vrot.lane.b32.xlu0 %v3400, 98
        %v3417 = vpop.permute.xlu0 %3416
        %3418 = vrot.lane.b32.xlu0 %v3401, 98
        %v3419 = vpop.permute.xlu0 %3418
        %3420 = vrot.lane.b32.xlu0 %v3402, 98
        %v3421 = vpop.permute.xlu0 %3420
        %3422 = vrot.lane.b32.xlu0 %v3403, 98
        %v3423 = vpop.permute.xlu0 %3422
        %3424 = vrot.lane.b32.xlu0 %v3404, 98
        %v3425 = vpop.permute.xlu0 %3424
        %3426 = vrot.lane.b32.xlu0 %v3405, 98
        %v3427 = vpop.permute.xlu0 %3426
        %3428 = vrot.lane.b32.xlu0 %v3406, 98
        %v3429 = vpop.permute.xlu0 %3428
        %3430 = vrot.lane.b32.xlu0 %v3407, 98
        %v3431 = vpop.permute.xlu0 %3430
        %v3432 = vsel %vm2239, %v3417, %v3419
        %v3433 = vsel %vm2239, %v3421, %v3423
        %v3434 = vsel %vm2239, %v3425, %v3427
        %v3435 = vsel %vm2239, %v3429, %v3431
        %v3445 = vsel %vm2438, %v3399, 0
        %3447 = vmatprep.subr.mxu0 %v3419
        %3448 = vmatpush1.msra.mxu0 %v3432
        %3449 = vmatprep.subr.mxu0 %v3423
        %3450 = vmatpush1.msra.mxu0 %v3433
        %3451 = vmatprep.subr.mxu0 %v3427
        %3452 = vmatpush1.msra.mxu0 %v3434
        %3453 = vmatprep.subr.mxu0 %v3431
        %3454 = vmatpush1.msra.mxu0 %v3435
        %3455 = vmatprep.subr.mxu0 0.0
        %3456 = vmatpush1.msra.mxu0 0.0
        %3457 = vmatprep.subr.mxu0 0.0
        %3458 = vmatpush1.msra.mxu0 0.0
        %3459 = vmatprep.subr.mxu0 0.0
        %3460 = vmatpush1.msra.mxu0 0.0
        %3461 = vmatprep.subr.mxu0 0.0
        %3462 = vmatpush1.msra.mxu0 0.0
        %3463 = vmatprep.subr.mxu0 0.0
        %3464 = vmatpush1.msra.mxu0 0.0
        %3465 = vmatprep.subr.mxu0 0.0
        %3466 = vmatpush1.msra.mxu0 0.0
        %3467 = vmatprep.subr.mxu0 0.0
        %3468 = vmatpush1.msra.mxu0 0.0
        %3469 = vmatprep.subr.mxu0 0.0
        %3470 = vmatpush1.msra.mxu0 0.0
        %3471 = vmatprep.subr.mxu0 0.0
        %3472 = vmatpush1.msra.mxu0 0.0
        %3473 = vmatprep.subr.mxu0 0.0
        %3474 = vmatpush1.msra.mxu0 0.0
        %3475 = vmatprep.subr.mxu0 0.0
        %3476 = vmatpush1.msra.mxu0 0.0
        %3477 = vmatprep.subr.mxu0 0.0
        %3478 = vmatpush1.msra.mxu0 0.0
        %3479 = vmatprep.subr.mxu0 0.0
        %3480 = vmatpush1.msra.mxu0 0.0
        %3481 = vmatprep.subr.mxu0 0.0
        %3482 = vmatpush1.msra.mxu0 0.0
        %3483 = vmatprep.subr.mxu0 0.0
        %3484 = vmatpush1.msra.mxu0 0.0
        %3485 = vmatprep.subr.mxu0 0.0
        %3486 = vmatpush1.msra.mxu0 0.0
        %3487 = vmatprep.subr.mxu0 0.0
        %3488 = vmatpush1.msra.mxu0 0.0
        %3489 = vmatprep.subr.mxu0 0.0
        %3490 = vmatpush1.msra.mxu0 0.0
        %3491 = vmatprep.subr.mxu0 0.0
        %3492 = vmatpush1.msra.mxu0 0.0
        %3493 = vmatprep.subr.mxu0 0.0
        %3494 = vmatpush1.msra.mxu0 0.0
        %3495 = vmatprep.subr.mxu0 0.0
        %3496 = vmatpush1.msra.mxu0 0.0
        %3497 = vmatprep.subr.mxu0 0.0
        %3498 = vmatpush1.msra.mxu0 0.0
        %3499 = vmatprep.subr.mxu0 0.0
        %3500 = vmatpush1.msra.mxu0 0.0
        %3501 = vmatprep.subr.mxu0 0.0
        %3502 = vmatpush1.msra.mxu0 0.0
        %3503 = vmatprep.subr.mxu0 0.0
        %3504 = vmatpush1.msra.mxu0 0.0
        %3505 = vmatprep.subr.mxu0 0.0
        %3506 = vmatpush1.msra.mxu0 0.0
        %3507 = vmatprep.subr.mxu0 0.0
        %3508 = vmatpush1.msra.mxu0 0.0
        %3509 = vmatprep.subr.mxu0 0.0
        %3510 = vmatpush1.msra.mxu0 0.0
        %3511 = vmatprep.mubr.f32.mxu0 0.0
        %3512 = vmatmul.mubr.f32.gmra.mrb[0].mxu0 %v3445
        %v3513 = vpop.f32.mrb[0].mxu0
        %v3514 = vadd.f32 0.0, %v3513
        %v3515 = vpop.f32.mrb[0].mxu0
        %v3516 = vadd.f32 0.0, %v3515
        %3517 = vdwg.mxu0
        %v3518 = vld [vmem:[%s278] sm:$0xff]
        %v3519 = vld [vmem:[%s278 + $0x8] sm:$0xff]
        %v3520 = vadd.f32 %v3518, %v3514
        %v3521 = vadd.f32 %v3519, %v3516
        %3522 = vst [vmem:[%s278] sm:$0xff] %v3520
        %3523 = vst.msk [vmem:[%s278 + $0x8] sm:$0xff] %vm2514, %v3521
        %v3524 = vld [vmem:[%s278] sm:$0xff]
        %v3525 = vld [vmem:[%s278 + $0x8] sm:$0xff]
        %s3526 = sld [smem:[#allocation4]]
        %v3527 = vstv %s3526
        %v3528 = vadd.f32 %v3524, %v3527
        %v3529 = vadd.f32 %v3525, %v3527
        %v3530 = vmul.f32 %v3528, 0.5
        %v3531 = vmul.f32 %v3529, 0.5
        %v3532 = vtanh.pop %v3530
        %v3533 = vtanh.pop %v3531
        %v3534 = vmul.f32 %v3532, 0.5
        %v3535 = vmul.f32 %v3533, 0.5
        %v3536 = vadd.f32 %v3534, 0.5
        %v3537 = vadd.f32 %v3535, 0.5
        %3538 = vst [vmem:[%s278] sm:$0xff] %v3536
        %3539 = vst.msk [vmem:[%s278 + $0x8] sm:$0xff] %vm2514, %v3537
        %s3540 = sand.u32 %s162, 1
        %s3541 = scalar_lea.sflag [#allocation7], %s3540
        %s3542 = sand.u32 %s162, 1
        %s3543 = smul.addr %s3542, 16
        %s3544 = scalar_lea.vmem [#allocation10], %s3543
        // Predicated region
        $region53: #{tpu_custom_call.1} parent=43 // pred_check
          %p3545 = pneg %p172
        $region54: #{tpu_custom_call.1} parent=43 // pred_check_branch
          %3547 = sbr.rel (%p3545) target = $region56
        $region55: #{tpu_custom_call.1} parent=43 // pred_region
          %s3549 = ssub.s32 256, 256
          %3550 = vsyncadd %s3541, %s3549
          %s3551 = smul.addr %s23, 2
          %s3552 = smul.addr %s3551, 128
          %s3553 = scalar_lea.hbm %s6, %s3552
          %s3555 = sshll.u32 %s3544, 4
          %s3556 = int_to_ptr.vmem [resolvable:$true] %s3555
          %3558 = dma.vmem_to_hbm [thread:$0]  %s3556, 256, %s3553, %s3541
        $region56: #{tpu_custom_call.1} parent=43 // pred_fallthru
          _
      $region44: #{tpu_custom_call.1} parent=5 // pred_fallthru
        _
      %p3559 = scmp.le.s32.totalorder 2, %s18
      // Predicated region
      $region57: #{tpu_custom_call.1} parent=5 // pred_check
        %p3560 = pneg %p3559
      $region58: #{tpu_custom_call.1} parent=5 // pred_check_branch
        %3562 = sbr.rel (%p3560) target = $region60
      $region59: #{tpu_custom_call.1} parent=5 // pred_region
        %s3563 = ssub.s32 %s18, 2
        // Predicated region
        $region61: #{tpu_custom_call.1} parent=59 // pred_check
          %p3564 = pneg %p178
        $region62: #{tpu_custom_call.1} parent=59 // pred_check_branch
          %3566 = sbr.rel (%p3564) target = $region64
        $region63: #{tpu_custom_call.1} parent=59 // pred_region
          %s3567 = sand.u32 %s163, 1
          %s3568 = scalar_lea.sflag [#allocation7], %s3567
          %s3569 = sand.u32 %s163, 1
          %s3570 = smul.addr %s3569, 16
          %s3571 = scalar_lea.vmem [#allocation10], %s3570
          %3572 = dma.done %s3568, 256
        $region64: #{tpu_custom_call.1} parent=59 // pred_fallthru
          _
      $region60: #{tpu_custom_call.1} parent=5 // pred_fallthru
        _
    $region6: #{tpu_custom_call.1} parent=1 // loop_footer
      %s22 = sadd.s32 1, %s18
    $region7: #{tpu_custom_call.1} parent=1 // loop_footer_branch
      %17 = sbr.rel target = $region3
    $region8: #{tpu_custom_call.1} parent=1 // loop_exit
      _
    %3573 = vsyncpa [#allocation6], 1
    %s3574 = scalar_lea.sflag [#allocation6], 1
    %3575 = vsyncpa %s3574, 1
    %3576 = vsyncpa [#allocation9], 1
    %3577 = vsyncpa [#allocation7], 1
    %s3578 = scalar_lea.sflag [#allocation7], 1
    %3579 = vsyncpa %s3578, 1

</llo_original>
